<compile_context>
chip_gen: v6e
topology: v6e:2x2x1
jax: 0.10.0
libtpu: 0.0.40
codegen_flags: <defaults>
</compile_context>

<pallas_src>
import functools
import math

import jax
import jax.numpy as jnp
from jax.experimental import pallas as pl
from jax.experimental.pallas import tpu as pltpu

# ----- module hyperparameters (from the PyTorch source) -----
N_EMBD = 384
N_HEAD = 6
HEAD_SIZE = N_EMBD // N_HEAD  # 64


# ------------------------------------------------------------------
# Fused kernel: QKV projection + causal attention + output projection
# ------------------------------------------------------------------
def _mha_kernel(x_ref, wqkv_ref, bqkv_ref, wp_ref, bp_ref, o_ref,
                qkv_ref, cat_ref, *, n_head, seq_len, bt):
    # x_ref:    (bt*T, C)      f32 activations (bt batch rows, flattened)
    # wqkv_ref: (C, 3*H*hs)    bf16, columns = [Wq_h0..Wq_h5 | Wk_* | Wv_*],
    #                          softmax scale already folded into the Wq block
    # bqkv_ref: (1, 3*H*hs)    f32 (bq already scaled)
    # wp_ref:   (C, C)         bf16
    # bp_ref:   (1, C)         f32
    # o_ref:    (bt*T, C)      f32
    # qkv_ref:  (bt*T, 3*H*hs) bf16 VMEM scratch
    # cat_ref:  (bt*T, C)      bf16 VMEM scratch (concatenated head outputs)
    T = seq_len
    _, C = x_ref.shape
    hs = C // n_head

    # Causal mask, built once per grid step (f32 elementwise path throughout).
    r = jax.lax.broadcasted_iota(jnp.int32, (T, T), 0)
    c = jax.lax.broadcasted_iota(jnp.int32, (T, T), 1)
    causal = c <= r
    neg = jnp.float32(-1e30)  # exp underflows to exactly 0 after row-max shift

    # ---- ONE batched QKV projection over all bt*T rows (bf16 MXU, f32 acc).
    # x arrives f32; cast to bf16 here (no wrapper-side cast / HBM round-trip).
    x = x_ref[...].astype(wqkv_ref.dtype)
    qkv = jnp.dot(x, wqkv_ref[...],
                  preferred_element_type=jnp.float32) + bqkv_ref[...]
    qkv_ref[...] = qkv.astype(qkv_ref.dtype)

    # ---- Attention core per (batch row b, head h). Bounded loop over b keeps
    # only one attention body's registers live at a time.
    def attend(b, carry):
        base = b * T
        if T % 8 == 0 and not isinstance(base, int):
            base = pl.multiple_of(base, T)
        rws = pl.ds(base, T)
        for h in range(n_head):  # static: n_head = 6, small per-b unroll
            q = qkv_ref[rws, pl.ds(h * hs, hs)]
            k = qkv_ref[rws, pl.ds((n_head + h) * hs, hs)]
            v = qkv_ref[rws, pl.ds((2 * n_head + h) * hs, hs)]

            # q @ k^T contracting last axes (no explicit transpose).  The
            # C**-0.5 scale is already folded into Wq/bq at pack time.
            wei = jax.lax.dot_general(
                q, k, dimension_numbers=(((1,), (1,)), ((), ())),
                preferred_element_type=jnp.float32)              # (T, T) f32

            wei = jnp.where(causal, wei, neg)
            wei = jnp.exp(wei - jnp.max(wei, axis=-1, keepdims=True))
            inv = pl.reciprocal(jnp.sum(wei, axis=-1, keepdims=True),
                                approx=True)                     # EUP slot
            wei = wei * inv

            head_out = jnp.dot(wei.astype(v.dtype), v,
                               preferred_element_type=jnp.float32)  # (T, hs)
            cat_ref[rws, pl.ds(h * hs, hs)] = head_out.astype(cat_ref.dtype)
        return carry

    jax.lax.fori_loop(0, bt, attend, None, unroll=bt <= 4)

    # ---- ONE batched output projection over all bt*T rows (lane-dense store).
    out = jnp.dot(cat_ref[...], wp_ref[...],
                  preferred_element_type=jnp.float32) + bp_ref[...]
    o_ref[...] = out.astype(o_ref.dtype)


def _pick_bt(B, T, rows_target=512):
    """Pack batch rows per grid step so the projections present ~rows_target
    rows to the MXU, while keeping grid extent >= 2 when possible so v7x
    megacore 'parallel' sharding stays useful."""
    target = max(1, rows_target // max(T, 1))
    divisors = [d for d in range(1, B + 1) if B % d == 0]
    cands = [d for d in divisors if d <= target] or [1]
    pref = [d for d in cands if B // d >= 2]
    return max(pref) if pref else max(cands)


# ------------------------------------------------------------------
# One-time weight packing (call ONCE at init, off the forward critical path)
# ------------------------------------------------------------------
def pack_params(params):
    """Pack per-head nn.Linear params into the kernel layout:
    wqkv (C, 3*H*hs) bf16 with the softmax scale folded into Wq (in f32,
    before the bf16 cast), bqkv (1, 3*H*hs) f32 (bq scaled), wp bf16, bp f32."""
    H, C, hs = params["wq"].shape
    scale = jnp.float32(C) ** -0.5  # matches `* C ** (-0.5)` (C = n_embd)

    def _pack_w(w):  # (H, C, hs) -> (C, H*hs), heads contiguous
        return jnp.transpose(w, (1, 0, 2)).reshape(C, H * hs)

    wq = params["wq"] * scale          # fold scale in f32 (q = x Wq s + bq s)
    bq = params["bq"] * scale
    wqkv = jnp.concatenate(
        [_pack_w(wq), _pack_w(params["wk"]), _pack_w(params["wv"])],
        axis=-1).astype(jnp.bfloat16)                       # (C, 3*H*hs)
    bqkv = jnp.concatenate(
        [bq.reshape(1, H * hs),
         params["bk"].reshape(1, H * hs),
         params["bv"].reshape(1, H * hs)],
        axis=-1).astype(jnp.float32)                        # (1, 3*H*hs)
    return {
        "wqkv": wqkv,
        "bqkv": bqkv,
        "wp": params["wp"].astype(jnp.bfloat16),            # (C, C)
        "bp": params["bp"].astype(jnp.float32),              # (1, C)
        "n_head": H,
        "head_size": hs,
    }


def multi_head_attention(x, packed, *, bt=None):
    """x: (B, T, C) f32.  packed: output of pack_params.  Returns (B, T, C) f32."""
    B, T, C = x.shape
    H = packed["n_head"]
    hs = packed["head_size"]

    if bt is None:
        bt = _pick_bt(B, T)
    if (bt * T) % 8 != 0:
        bt = B  # fall back to a single full-array block (always legal)
    assert B % bt == 0
    grid = (B // bt,)
    rows = bt * T

    x2 = x.reshape(B * T, C)  # free metadata reshape of a contiguous array

    kernel = functools.partial(_mha_kernel, n_head=H, seq_len=T, bt=bt)
    out = pl.pallas_call(
        kernel,
        out_shape=jax.ShapeDtypeStruct((B * T, C), jnp.float32),
        grid_spec=pltpu.PrefetchScalarGridSpec(
            num_scalar_prefetch=0,
            grid=grid,
            in_specs=[
                pl.BlockSpec((rows, C), lambda i: (i, 0)),
                pl.BlockSpec((C, 3 * H * hs), lambda i: (0, 0)),
                pl.BlockSpec((1, 3 * H * hs), lambda i: (0, 0)),
                pl.BlockSpec((C, C), lambda i: (0, 0)),
                pl.BlockSpec((1, C), lambda i: (0, 0)),
            ],
            out_specs=pl.BlockSpec((rows, C), lambda i: (i, 0)),
            scratch_shapes=[
                pltpu.VMEM((rows, 3 * H * hs), jnp.bfloat16),  # fused qkv
                pltpu.VMEM((rows, C), jnp.bfloat16),           # head concat
            ],
        ),
        compiler_params=pltpu.CompilerParams(
            dimension_semantics=("parallel",)),
    )(x2, packed["wqkv"], packed["bqkv"], packed["wp"], packed["bp"])
    return out.reshape(B, T, C)


# ------------------------------------------------------------------
# Parameters
# ------------------------------------------------------------------
def init_params(key):
    """Deterministic parameter init (nn.Linear shapes, stored as (in, out)
    so the kernel computes x @ W + b)."""
    ks = jax.random.split(key, 8)
    bound = 1.0 / math.sqrt(N_EMBD)
    u = lambda k, shape: jax.random.uniform(k, shape, jnp.float32, -bound, bound)
    return {
        "wq": u(ks[0], (N_HEAD, N_EMBD, HEAD_SIZE)),
        "bq": u(ks[1], (N_HEAD, 1, HEAD_SIZE)),
        "wk": u(ks[2], (N_HEAD, N_EMBD, HEAD_SIZE)),
        "bk": u(ks[3], (N_HEAD, 1, HEAD_SIZE)),
        "wv": u(ks[4], (N_HEAD, N_EMBD, HEAD_SIZE)),
        "bv": u(ks[5], (N_HEAD, 1, HEAD_SIZE)),
        "wp": u(ks[6], (N_EMBD, N_EMBD)),
        "bp": u(ks[7], (1, N_EMBD)),
    }


# Pure-JAX reference with the SAME precision policy (bf16 MXU inputs,
# f32 accumulation) so the comparison is apples-to-apples.
def _reference(x, p):
    B, T, C = x.shape
    bf = jnp.bfloat16
    xl = x.astype(bf)
    mask = jnp.tril(jnp.ones((T, T), dtype=bool))
    outs = []
    for h in range(N_HEAD):
        q = (jnp.dot(xl, p["wq"][h].astype(bf),
                     preferred_element_type=jnp.float32) + p["bq"][h]).astype(bf)
        k = (jnp.dot(xl, p["wk"][h].astype(bf),
                     preferred_element_type=jnp.float32) + p["bk"][h]).astype(bf)
        v = (jnp.dot(xl, p["wv"][h].astype(bf),
                     preferred_element_type=jnp.float32) + p["bv"][h]).astype(bf)
        wei = jnp.einsum("btd,bsd->bts", q, k,
                         preferred_element_type=jnp.float32) * (C ** -0.5)
        wei = jnp.where(mask, wei, -jnp.inf)
        wei = jax.nn.softmax(wei, axis=-1)
        outs.append(jnp.einsum("bts,bsd->btd", wei.astype(bf), v,
                               preferred_element_type=jnp.float32))
    cat = jnp.concatenate(outs, axis=-1).astype(bf)
    return jnp.dot(cat, p["wp"].astype(bf),
                   preferred_element_type=jnp.float32) + p["bp"]


if __name__ == "__main__":
    key = jax.random.PRNGKey(0)
    kx, kp = jax.random.split(key)

    B, T = 2, 8                      # small seq (T <= block_size = 256)
    x = jax.random.normal(kx, (B, T, N_EMBD), dtype=jnp.float32)
    params = init_params(kp)
    packed = pack_params(params)     # one-time packing, off the per-call path

    out = multi_head_attention(x, packed)
    out = jax.block_until_ready(out)

    ref = _reference(x, params)
    assert out.shape == (B, T, N_EMBD)
    # Tolerance accounts for bf16 MXU inputs + approx EUP reciprocal; a
    # structurally wrong kernel would differ by O(0.1+), far above this.
    assert jnp.allclose(out, ref, atol=1e-2, rtol=1e-2), (
        float(jnp.max(jnp.abs(out - ref))))

    print("KERNEL_OK")
</pallas_src>

<mosaic_0001>
module attributes {stable_mosaic.version = 11 : i64} {
  func.func @_mha_kernel(%arg0: i32, %arg1: memref<8x384xf32, #tpu.memory_space<vmem>>, %arg2: memref<384x1152xbf16, #tpu.memory_space<vmem>>, %arg3: memref<1x1152xf32, #tpu.memory_space<vmem>>, %arg4: memref<384x384xbf16, #tpu.memory_space<vmem>>, %arg5: memref<1x384xf32, #tpu.memory_space<vmem>>, %arg6: memref<8x384xf32, #tpu.memory_space<vmem>>, %arg7: memref<8x1152xbf16, #tpu.memory_space<vmem>>, %arg8: memref<8x384xbf16, #tpu.memory_space<vmem>>) attributes {dimension_semantics = [#tpu.dimension_semantics<parallel>], iteration_bounds = array<i64: 2>, scalar_prefetch = 0 : i64, scratch_operands = 2 : i64, tpu.core_type = #tpu.core_type<tc>, window_params = [{transform_indices = @transform_0, window_bounds = array<i64: 8, 384>}, {pipeline_mode = #tpu.pipeline_mode<synchronous>, transform_indices = @transform_1, window_bounds = array<i64: 384, 1152>}, {pipeline_mode = #tpu.pipeline_mode<synchronous>, transform_indices = @transform_2, window_bounds = array<i64: 1, 1152>}, {pipeline_mode = #tpu.pipeline_mode<synchronous>, transform_indices = @transform_3, window_bounds = array<i64: 384, 384>}, {pipeline_mode = #tpu.pipeline_mode<synchronous>, transform_indices = @transform_4, window_bounds = array<i64: 1, 384>}, {transform_indices = @transform_5, window_bounds = array<i64: 8, 384>}]} {
    %0 = tpu.iota {dimensions = array<i32: 0>} : vector<8x8xi32>
    %1 = tpu.iota {dimensions = array<i32: 1>} : vector<8x8xi32>
    %2 = arith.cmpi sle, %1, %0 : vector<8x8xi32>
    %c0 = arith.constant 0 : index
    %c0_0 = arith.constant 0 : index
    %3 = vector.load %arg1[%c0, %c0_0] : memref<8x384xf32, #tpu.memory_space<vmem>>, vector<8x384xf32>
    %4 = arith.truncf %3 : vector<8x384xf32> to vector<8x384xbf16>
    %c0_1 = arith.constant 0 : index
    %c0_2 = arith.constant 0 : index
    %5 = vector.load %arg2[%c0_1, %c0_2] : memref<384x1152xbf16, #tpu.memory_space<vmem>>, vector<384x1152xbf16>
    %cst = arith.constant dense<0.000000e+00> : vector<8x1152xf32>
    %6 = tpu.matmul %4, %5, %cst {dimension_numbers = #tpu.dot_dimension_numbers<[1], [0], [0], [1], [0, 0, 1, 1], [], []>} : vector<8x384xbf16>, vector<384x1152xbf16>, vector<8x1152xf32> -> vector<8x1152xf32>
    %c0_3 = arith.constant 0 : index
    %c0_4 = arith.constant 0 : index
    %7 = vector.load %arg3[%c0_3, %c0_4] : memref<1x1152xf32, #tpu.memory_space<vmem>>, vector<1x1152xf32>
    %8 = vector.broadcast %7 : vector<1x1152xf32> to vector<8x1152xf32>
    %9 = arith.addf %6, %8 : vector<8x1152xf32>
    %10 = arith.truncf %9 : vector<8x1152xf32> to vector<8x1152xbf16>
    %c0_5 = arith.constant 0 : index
    %c0_6 = arith.constant 0 : index
    %11 = vector.load %arg7[%c0_5, %c0_6] : memref<8x1152xbf16, #tpu.memory_space<vmem>>, vector<8x1152xbf16>
    tpu.vector_store %arg7[%c0_5, %c0_6], %10 {strides = array<i32>} : memref<8x1152xbf16, #tpu.memory_space<vmem>>, vector<8x1152xbf16>,
    %cst_7 = arith.constant -1.000000e+30 : f32
    %c0_i32 = arith.constant 0 : i32
    %c8_i32 = arith.constant 8 : i32
    %12 = arith.muli %c0_i32, %c8_i32 : i32
    %13 = tpu.assume_multiple %12, 8 : i32
    %14 = arith.index_cast %13 : i32 to index
    %c0_8 = arith.constant 0 : index
    %15 = vector.load %arg7[%14, %c0_8] : memref<8x1152xbf16, #tpu.memory_space<vmem>>, vector<8x64xbf16>
    %16 = arith.index_cast %13 : i32 to index
    %c384 = arith.constant 384 : index
    %17 = vector.load %arg7[%16, %c384] : memref<8x1152xbf16, #tpu.memory_space<vmem>>, vector<8x64xbf16>
    %18 = arith.index_cast %13 : i32 to index
    %c768 = arith.constant 768 : index
    %19 = vector.load %arg7[%18, %c768] : memref<8x1152xbf16, #tpu.memory_space<vmem>>, vector<8x64xbf16>
    %cst_9 = arith.constant dense<0.000000e+00> : vector<8x8xf32>
    %20 = tpu.matmul %15, %17, %cst_9 {dimension_numbers = #tpu.dot_dimension_numbers<[1], [1], [0], [0], [0, 0, 1, 0], [], []>} : vector<8x64xbf16>, vector<8x64xbf16>, vector<8x8xf32> -> vector<8x8xf32>
    %21 = vector.broadcast %cst_7 : f32 to vector<8x8xf32>
    %22 = arith.select %2, %20, %21 : vector<8x8xi1>, vector<8x8xf32>
    %cst_10 = arith.constant dense<0xFF800000> : vector<8xf32>
    %23 = vector.multi_reduction <maximumf>, %22, %cst_10 [1] : vector<8x8xf32> to vector<8xf32>
    %24 = vector.shape_cast %23 : vector<8xf32> to vector<8x1xf32>
    %25 = vector.broadcast %24 : vector<8x1xf32> to vector<8x8xf32>
    %26 = arith.subf %22, %25 : vector<8x8xf32>
    %27 = math.exp %26 : vector<8x8xf32>
    %cst_11 = arith.constant dense<0.000000e+00> : vector<8xf32>
    %28 = vector.multi_reduction <add>, %27, %cst_11 [1] : vector<8x8xf32> to vector<8xf32>
    %29 = vector.shape_cast %28 : vector<8xf32> to vector<8x1xf32>
    %30 = tpu.reciprocal %29 {approx = true} : vector<8x1xf32> -> vector<8x1xf32>
    %31 = vector.broadcast %30 : vector<8x1xf32> to vector<8x8xf32>
    %32 = arith.mulf %27, %31 : vector<8x8xf32>
    %33 = arith.truncf %32 : vector<8x8xf32> to vector<8x8xbf16>
    %cst_12 = arith.constant dense<0.000000e+00> : vector<8x64xf32>
    %34 = tpu.matmul %33, %19, %cst_12 {dimension_numbers = #tpu.dot_dimension_numbers<[1], [0], [0], [1], [0, 0, 1, 1], [], []>} : vector<8x8xbf16>, vector<8x64xbf16>, vector<8x64xf32> -> vector<8x64xf32>
    %35 = arith.truncf %34 : vector<8x64xf32> to vector<8x64xbf16>
    %36 = arith.index_cast %13 : i32 to index
    %c0_13 = arith.constant 0 : index
    %37 = vector.load %arg8[%36, %c0_13] : memref<8x384xbf16, #tpu.memory_space<vmem>>, vector<8x64xbf16>
    tpu.vector_store %arg8[%36, %c0_13], %35 {strides = array<i32>} : memref<8x384xbf16, #tpu.memory_space<vmem>>, vector<8x64xbf16>,
    %38 = arith.index_cast %13 : i32 to index
    %c64 = arith.constant 64 : index
    %39 = vector.load %arg7[%38, %c64] : memref<8x1152xbf16, #tpu.memory_space<vmem>>, vector<8x64xbf16>
    %40 = arith.index_cast %13 : i32 to index
    %c448 = arith.constant 448 : index
    %41 = vector.load %arg7[%40, %c448] : memref<8x1152xbf16, #tpu.memory_space<vmem>>, vector<8x64xbf16>
    %42 = arith.index_cast %13 : i32 to index
    %c832 = arith.constant 832 : index
    %43 = vector.load %arg7[%42, %c832] : memref<8x1152xbf16, #tpu.memory_space<vmem>>, vector<8x64xbf16>
    %cst_14 = arith.constant dense<0.000000e+00> : vector<8x8xf32>
    %44 = tpu.matmul %39, %41, %cst_14 {dimension_numbers = #tpu.dot_dimension_numbers<[1], [1], [0], [0], [0, 0, 1, 0], [], []>} : vector<8x64xbf16>, vector<8x64xbf16>, vector<8x8xf32> -> vector<8x8xf32>
    %45 = vector.broadcast %cst_7 : f32 to vector<8x8xf32>
    %46 = arith.select %2, %44, %45 : vector<8x8xi1>, vector<8x8xf32>
    %cst_15 = arith.constant dense<0xFF800000> : vector<8xf32>
    %47 = vector.multi_reduction <maximumf>, %46, %cst_15 [1] : vector<8x8xf32> to vector<8xf32>
    %48 = vector.shape_cast %47 : vector<8xf32> to vector<8x1xf32>
    %49 = vector.broadcast %48 : vector<8x1xf32> to vector<8x8xf32>
    %50 = arith.subf %46, %49 : vector<8x8xf32>
    %51 = math.exp %50 : vector<8x8xf32>
    %cst_16 = arith.constant dense<0.000000e+00> : vector<8xf32>
    %52 = vector.multi_reduction <add>, %51, %cst_16 [1] : vector<8x8xf32> to vector<8xf32>
    %53 = vector.shape_cast %52 : vector<8xf32> to vector<8x1xf32>
    %54 = tpu.reciprocal %53 {approx = true} : vector<8x1xf32> -> vector<8x1xf32>
    %55 = vector.broadcast %54 : vector<8x1xf32> to vector<8x8xf32>
    %56 = arith.mulf %51, %55 : vector<8x8xf32>
    %57 = arith.truncf %56 : vector<8x8xf32> to vector<8x8xbf16>
    %cst_17 = arith.constant dense<0.000000e+00> : vector<8x64xf32>
    %58 = tpu.matmul %57, %43, %cst_17 {dimension_numbers = #tpu.dot_dimension_numbers<[1], [0], [0], [1], [0, 0, 1, 1], [], []>} : vector<8x8xbf16>, vector<8x64xbf16>, vector<8x64xf32> -> vector<8x64xf32>
    %59 = arith.truncf %58 : vector<8x64xf32> to vector<8x64xbf16>
    %60 = arith.index_cast %13 : i32 to index
    %c64_18 = arith.constant 64 : index
    %61 = vector.load %arg8[%60, %c64_18] : memref<8x384xbf16, #tpu.memory_space<vmem>>, vector<8x64xbf16>
    tpu.vector_store %arg8[%60, %c64_18], %59 {strides = array<i32>} : memref<8x384xbf16, #tpu.memory_space<vmem>>, vector<8x64xbf16>,
    %62 = arith.index_cast %13 : i32 to index
    %c128 = arith.constant 128 : index
    %63 = vector.load %arg7[%62, %c128] : memref<8x1152xbf16, #tpu.memory_space<vmem>>, vector<8x64xbf16>
    %64 = arith.index_cast %13 : i32 to index
    %c512 = arith.constant 512 : index
    %65 = vector.load %arg7[%64, %c512] : memref<8x1152xbf16, #tpu.memory_space<vmem>>, vector<8x64xbf16>
    %66 = arith.index_cast %13 : i32 to index
    %c896 = arith.constant 896 : index
    %67 = vector.load %arg7[%66, %c896] : memref<8x1152xbf16, #tpu.memory_space<vmem>>, vector<8x64xbf16>
    %cst_19 = arith.constant dense<0.000000e+00> : vector<8x8xf32>
    %68 = tpu.matmul %63, %65, %cst_19 {dimension_numbers = #tpu.dot_dimension_numbers<[1], [1], [0], [0], [0, 0, 1, 0], [], []>} : vector<8x64xbf16>, vector<8x64xbf16>, vector<8x8xf32> -> vector<8x8xf32>
    %69 = vector.broadcast %cst_7 : f32 to vector<8x8xf32>
    %70 = arith.select %2, %68, %69 : vector<8x8xi1>, vector<8x8xf32>
    %cst_20 = arith.constant dense<0xFF800000> : vector<8xf32>
    %71 = vector.multi_reduction <maximumf>, %70, %cst_20 [1] : vector<8x8xf32> to vector<8xf32>
    %72 = vector.shape_cast %71 : vector<8xf32> to vector<8x1xf32>
    %73 = vector.broadcast %72 : vector<8x1xf32> to vector<8x8xf32>
    %74 = arith.subf %70, %73 : vector<8x8xf32>
    %75 = math.exp %74 : vector<8x8xf32>
    %cst_21 = arith.constant dense<0.000000e+00> : vector<8xf32>
    %76 = vector.multi_reduction <add>, %75, %cst_21 [1] : vector<8x8xf32> to vector<8xf32>
    %77 = vector.shape_cast %76 : vector<8xf32> to vector<8x1xf32>
    %78 = tpu.reciprocal %77 {approx = true} : vector<8x1xf32> -> vector<8x1xf32>
    %79 = vector.broadcast %78 : vector<8x1xf32> to vector<8x8xf32>
    %80 = arith.mulf %75, %79 : vector<8x8xf32>
    %81 = arith.truncf %80 : vector<8x8xf32> to vector<8x8xbf16>
    %cst_22 = arith.constant dense<0.000000e+00> : vector<8x64xf32>
    %82 = tpu.matmul %81, %67, %cst_22 {dimension_numbers = #tpu.dot_dimension_numbers<[1], [0], [0], [1], [0, 0, 1, 1], [], []>} : vector<8x8xbf16>, vector<8x64xbf16>, vector<8x64xf32> -> vector<8x64xf32>
    %83 = arith.truncf %82 : vector<8x64xf32> to vector<8x64xbf16>
    %84 = arith.index_cast %13 : i32 to index
    %c128_23 = arith.constant 128 : index
    %85 = vector.load %arg8[%84, %c128_23] : memref<8x384xbf16, #tpu.memory_space<vmem>>, vector<8x64xbf16>
    tpu.vector_store %arg8[%84, %c128_23], %83 {strides = array<i32>} : memref<8x384xbf16, #tpu.memory_space<vmem>>, vector<8x64xbf16>,
    %86 = arith.index_cast %13 : i32 to index
    %c192 = arith.constant 192 : index
    %87 = vector.load %arg7[%86, %c192] : memref<8x1152xbf16, #tpu.memory_space<vmem>>, vector<8x64xbf16>
    %88 = arith.index_cast %13 : i32 to index
    %c576 = arith.constant 576 : index
    %89 = vector.load %arg7[%88, %c576] : memref<8x1152xbf16, #tpu.memory_space<vmem>>, vector<8x64xbf16>
    %90 = arith.index_cast %13 : i32 to index
    %c960 = arith.constant 960 : index
    %91 = vector.load %arg7[%90, %c960] : memref<8x1152xbf16, #tpu.memory_space<vmem>>, vector<8x64xbf16>
    %cst_24 = arith.constant dense<0.000000e+00> : vector<8x8xf32>
    %92 = tpu.matmul %87, %89, %cst_24 {dimension_numbers = #tpu.dot_dimension_numbers<[1], [1], [0], [0], [0, 0, 1, 0], [], []>} : vector<8x64xbf16>, vector<8x64xbf16>, vector<8x8xf32> -> vector<8x8xf32>
    %93 = vector.broadcast %cst_7 : f32 to vector<8x8xf32>
    %94 = arith.select %2, %92, %93 : vector<8x8xi1>, vector<8x8xf32>
    %cst_25 = arith.constant dense<0xFF800000> : vector<8xf32>
    %95 = vector.multi_reduction <maximumf>, %94, %cst_25 [1] : vector<8x8xf32> to vector<8xf32>
    %96 = vector.shape_cast %95 : vector<8xf32> to vector<8x1xf32>
    %97 = vector.broadcast %96 : vector<8x1xf32> to vector<8x8xf32>
    %98 = arith.subf %94, %97 : vector<8x8xf32>
    %99 = math.exp %98 : vector<8x8xf32>
    %cst_26 = arith.constant dense<0.000000e+00> : vector<8xf32>
    %100 = vector.multi_reduction <add>, %99, %cst_26 [1] : vector<8x8xf32> to vector<8xf32>
    %101 = vector.shape_cast %100 : vector<8xf32> to vector<8x1xf32>
    %102 = tpu.reciprocal %101 {approx = true} : vector<8x1xf32> -> vector<8x1xf32>
    %103 = vector.broadcast %102 : vector<8x1xf32> to vector<8x8xf32>
    %104 = arith.mulf %99, %103 : vector<8x8xf32>
    %105 = arith.truncf %104 : vector<8x8xf32> to vector<8x8xbf16>
    %cst_27 = arith.constant dense<0.000000e+00> : vector<8x64xf32>
    %106 = tpu.matmul %105, %91, %cst_27 {dimension_numbers = #tpu.dot_dimension_numbers<[1], [0], [0], [1], [0, 0, 1, 1], [], []>} : vector<8x8xbf16>, vector<8x64xbf16>, vector<8x64xf32> -> vector<8x64xf32>
    %107 = arith.truncf %106 : vector<8x64xf32> to vector<8x64xbf16>
    %108 = arith.index_cast %13 : i32 to index
    %c192_28 = arith.constant 192 : index
    %109 = vector.load %arg8[%108, %c192_28] : memref<8x384xbf16, #tpu.memory_space<vmem>>, vector<8x64xbf16>
    tpu.vector_store %arg8[%108, %c192_28], %107 {strides = array<i32>} : memref<8x384xbf16, #tpu.memory_space<vmem>>, vector<8x64xbf16>,
    %110 = arith.index_cast %13 : i32 to index
    %c256 = arith.constant 256 : index
    %111 = vector.load %arg7[%110, %c256] : memref<8x1152xbf16, #tpu.memory_space<vmem>>, vector<8x64xbf16>
    %112 = arith.index_cast %13 : i32 to index
    %c640 = arith.constant 640 : index
    %113 = vector.load %arg7[%112, %c640] : memref<8x1152xbf16, #tpu.memory_space<vmem>>, vector<8x64xbf16>
    %114 = arith.index_cast %13 : i32 to index
    %c1024 = arith.constant 1024 : index
    %115 = vector.load %arg7[%114, %c1024] : memref<8x1152xbf16, #tpu.memory_space<vmem>>, vector<8x64xbf16>
    %cst_29 = arith.constant dense<0.000000e+00> : vector<8x8xf32>
    %116 = tpu.matmul %111, %113, %cst_29 {dimension_numbers = #tpu.dot_dimension_numbers<[1], [1], [0], [0], [0, 0, 1, 0], [], []>} : vector<8x64xbf16>, vector<8x64xbf16>, vector<8x8xf32> -> vector<8x8xf32>
    %117 = vector.broadcast %cst_7 : f32 to vector<8x8xf32>
    %118 = arith.select %2, %116, %117 : vector<8x8xi1>, vector<8x8xf32>
    %cst_30 = arith.constant dense<0xFF800000> : vector<8xf32>
    %119 = vector.multi_reduction <maximumf>, %118, %cst_30 [1] : vector<8x8xf32> to vector<8xf32>
    %120 = vector.shape_cast %119 : vector<8xf32> to vector<8x1xf32>
    %121 = vector.broadcast %120 : vector<8x1xf32> to vector<8x8xf32>
    %122 = arith.subf %118, %121 : vector<8x8xf32>
    %123 = math.exp %122 : vector<8x8xf32>
    %cst_31 = arith.constant dense<0.000000e+00> : vector<8xf32>
    %124 = vector.multi_reduction <add>, %123, %cst_31 [1] : vector<8x8xf32> to vector<8xf32>
    %125 = vector.shape_cast %124 : vector<8xf32> to vector<8x1xf32>
    %126 = tpu.reciprocal %125 {approx = true} : vector<8x1xf32> -> vector<8x1xf32>
    %127 = vector.broadcast %126 : vector<8x1xf32> to vector<8x8xf32>
    %128 = arith.mulf %123, %127 : vector<8x8xf32>
    %129 = arith.truncf %128 : vector<8x8xf32> to vector<8x8xbf16>
    %cst_32 = arith.constant dense<0.000000e+00> : vector<8x64xf32>
    %130 = tpu.matmul %129, %115, %cst_32 {dimension_numbers = #tpu.dot_dimension_numbers<[1], [0], [0], [1], [0, 0, 1, 1], [], []>} : vector<8x8xbf16>, vector<8x64xbf16>, vector<8x64xf32> -> vector<8x64xf32>
    %131 = arith.truncf %130 : vector<8x64xf32> to vector<8x64xbf16>
    %132 = arith.index_cast %13 : i32 to index
    %c256_33 = arith.constant 256 : index
    %133 = vector.load %arg8[%132, %c256_33] : memref<8x384xbf16, #tpu.memory_space<vmem>>, vector<8x64xbf16>
    tpu.vector_store %arg8[%132, %c256_33], %131 {strides = array<i32>} : memref<8x384xbf16, #tpu.memory_space<vmem>>, vector<8x64xbf16>,
    %134 = arith.index_cast %13 : i32 to index
    %c320 = arith.constant 320 : index
    %135 = vector.load %arg7[%134, %c320] : memref<8x1152xbf16, #tpu.memory_space<vmem>>, vector<8x64xbf16>
    %136 = arith.index_cast %13 : i32 to index
    %c704 = arith.constant 704 : index
    %137 = vector.load %arg7[%136, %c704] : memref<8x1152xbf16, #tpu.memory_space<vmem>>, vector<8x64xbf16>
    %138 = arith.index_cast %13 : i32 to index
    %c1088 = arith.constant 1088 : index
    %139 = vector.load %arg7[%138, %c1088] : memref<8x1152xbf16, #tpu.memory_space<vmem>>, vector<8x64xbf16>
    %cst_34 = arith.constant dense<0.000000e+00> : vector<8x8xf32>
    %140 = tpu.matmul %135, %137, %cst_34 {dimension_numbers = #tpu.dot_dimension_numbers<[1], [1], [0], [0], [0, 0, 1, 0], [], []>} : vector<8x64xbf16>, vector<8x64xbf16>, vector<8x8xf32> -> vector<8x8xf32>
    %141 = vector.broadcast %cst_7 : f32 to vector<8x8xf32>
    %142 = arith.select %2, %140, %141 : vector<8x8xi1>, vector<8x8xf32>
    %cst_35 = arith.constant dense<0xFF800000> : vector<8xf32>
    %143 = vector.multi_reduction <maximumf>, %142, %cst_35 [1] : vector<8x8xf32> to vector<8xf32>
    %144 = vector.shape_cast %143 : vector<8xf32> to vector<8x1xf32>
    %145 = vector.broadcast %144 : vector<8x1xf32> to vector<8x8xf32>
    %146 = arith.subf %142, %145 : vector<8x8xf32>
    %147 = math.exp %146 : vector<8x8xf32>
    %cst_36 = arith.constant dense<0.000000e+00> : vector<8xf32>
    %148 = vector.multi_reduction <add>, %147, %cst_36 [1] : vector<8x8xf32> to vector<8xf32>
    %149 = vector.shape_cast %148 : vector<8xf32> to vector<8x1xf32>
    %150 = tpu.reciprocal %149 {approx = true} : vector<8x1xf32> -> vector<8x1xf32>
    %151 = vector.broadcast %150 : vector<8x1xf32> to vector<8x8xf32>
    %152 = arith.mulf %147, %151 : vector<8x8xf32>
    %153 = arith.truncf %152 : vector<8x8xf32> to vector<8x8xbf16>
    %cst_37 = arith.constant dense<0.000000e+00> : vector<8x64xf32>
    %154 = tpu.matmul %153, %139, %cst_37 {dimension_numbers = #tpu.dot_dimension_numbers<[1], [0], [0], [1], [0, 0, 1, 1], [], []>} : vector<8x8xbf16>, vector<8x64xbf16>, vector<8x64xf32> -> vector<8x64xf32>
    %155 = arith.truncf %154 : vector<8x64xf32> to vector<8x64xbf16>
    %156 = arith.index_cast %13 : i32 to index
    %c320_38 = arith.constant 320 : index
    %157 = vector.load %arg8[%156, %c320_38] : memref<8x384xbf16, #tpu.memory_space<vmem>>, vector<8x64xbf16>
    tpu.vector_store %arg8[%156, %c320_38], %155 {strides = array<i32>} : memref<8x384xbf16, #tpu.memory_space<vmem>>, vector<8x64xbf16>,
    %c1_i32 = arith.constant 1 : i32
    %c0_39 = arith.constant 0 : index
    %c0_40 = arith.constant 0 : index
    %158 = vector.load %arg8[%c0_39, %c0_40] : memref<8x384xbf16, #tpu.memory_space<vmem>>, vector<8x384xbf16>
    %c0_41 = arith.constant 0 : index
    %c0_42 = arith.constant 0 : index
    %159 = vector.load %arg4[%c0_41, %c0_42] : memref<384x384xbf16, #tpu.memory_space<vmem>>, vector<384x384xbf16>
    %cst_43 = arith.constant dense<0.000000e+00> : vector<8x384xf32>
    %160 = tpu.matmul %158, %159, %cst_43 {dimension_numbers = #tpu.dot_dimension_numbers<[1], [0], [0], [1], [0, 0, 1, 1], [], []>} : vector<8x384xbf16>, vector<384x384xbf16>, vector<8x384xf32> -> vector<8x384xf32>
    %c0_44 = arith.constant 0 : index
    %c0_45 = arith.constant 0 : index
    %161 = vector.load %arg5[%c0_44, %c0_45] : memref<1x384xf32, #tpu.memory_space<vmem>>, vector<1x384xf32>
    %162 = vector.broadcast %161 : vector<1x384xf32> to vector<8x384xf32>
    %163 = arith.addf %160, %162 : vector<8x384xf32>
    %c0_46 = arith.constant 0 : index
    %c0_47 = arith.constant 0 : index
    %164 = vector.load %arg6[%c0_46, %c0_47] : memref<8x384xf32, #tpu.memory_space<vmem>>, vector<8x384xf32>
    tpu.vector_store %arg6[%c0_46, %c0_47], %163 {strides = array<i32>} : memref<8x384xf32, #tpu.memory_space<vmem>>, vector<8x384xf32>,
    return
  }
  func.func @transform_0(%arg0: i32) -> (i32, i32) {
    %c0_i32 = arith.constant 0 : i32
    %c0_i32_0 = arith.constant 0 : i32
    return %arg0, %c0_i32 : i32, i32
  }
  func.func @transform_1(%arg0: i32) -> (i32, i32) {
    %c0_i32 = arith.constant 0 : i32
    %c0_i32_0 = arith.constant 0 : i32
    %c0_i32_1 = arith.constant 0 : i32
    return %c0_i32, %c0_i32_0 : i32, i32
  }
  func.func @transform_2(%arg0: i32) -> (i32, i32) {
    %c0_i32 = arith.constant 0 : i32
    %c0_i32_0 = arith.constant 0 : i32
    %c0_i32_1 = arith.constant 0 : i32
    return %c0_i32, %c0_i32_0 : i32, i32
  }
  func.func @transform_3(%arg0: i32) -> (i32, i32) {
    %c0_i32 = arith.constant 0 : i32
    %c0_i32_0 = arith.constant 0 : i32
    %c0_i32_1 = arith.constant 0 : i32
    return %c0_i32, %c0_i32_0 : i32, i32
  }
  func.func @transform_4(%arg0: i32) -> (i32, i32) {
    %c0_i32 = arith.constant 0 : i32
    %c0_i32_0 = arith.constant 0 : i32
    %c0_i32_1 = arith.constant 0 : i32
    return %c0_i32, %c0_i32_0 : i32, i32
  }
  func.func @transform_5(%arg0: i32) -> (i32, i32) {
    %c0_i32 = arith.constant 0 : i32
    %c0_i32_0 = arith.constant 0 : i32
    return %arg0, %c0_i32 : i32, i32
  }
}

</mosaic_0001>

<llo_original>
// kernel: tpu_custom_call.1
$region0: #{tpu_custom_call.1}
  #allocation0 [shape = 'u32[]', space=smem, size = 0x4, offset = 0x4, fixed_abs, tag = 'smem constant byte address 0x4 - core index']
  #allocation1 [shape = 'u32[144,128]{1,0:T(1,128)}', space=vmem, size = 0x12000, scoped, tag = 'internal scratch']
  #allocation2 [shape = 'bf16[8,1152]{1,0:T(8,128)(2,1)}', space=vmem, size = 0x4800, scoped, tag = 'scratch operand']
  #allocation3 [shape = 'bf16[8,384]{1,0:T(8,128)(2,1)}', space=vmem, size = 0x1800, scoped, tag = 'scratch operand']
  %s0 = inlined_call_operand.hbm [shape: f32[16,384], index: 0, kind: input, shape index: {}]
  %s1 = inlined_call_operand.hbm [shape: bf16[384,1152], index: 1, kind: input, shape index: {}]
  %s2 = inlined_call_operand.hbm [shape: f32[1,1152], index: 2, kind: input, shape index: {}]
  %s3 = inlined_call_operand.hbm [shape: bf16[384,384], index: 3, kind: input, shape index: {}]
  %s4 = inlined_call_operand.vmem [shape: f32[1,384], index: 4, kind: input, shape index: {}]
  %s5 = inlined_call_operand.hbm [shape: f32[16,384], index: 5, kind: output, shape index: {}]
  %s6 = sld [smem:[#allocation0]]
  $region69: #{tpu_custom_call.1} parent=0
    _
  %s8 = ssub.s32 1, %s6
  %s9 = scalar_select 0, %s8, %s6
  $region1: #{tpu_custom_call.1} parent=0
    #allocation4 [shape = 'u8[24576]{0}', space=vmem, size = 0x6000, scoped, tag = 'input window, operand 0']
    #allocation5 [shape = 's32[2]{0}', space=sflag, size = 0x8, scoped, tag = 'scoped memory for tpu_custom_call.1']
    #allocation6 [shape = 's32[2]{0}', space=sflag, size = 0x8, scoped, tag = 'scoped memory for tpu_custom_call.1']
    #allocation7 [shape = 'u8[884736]{0}', space=vmem, size = 0xd8000, scoped, tag = 'input window, operand 1, single buffered']
    #allocation8 [shape = 's32[1]{0}', space=sflag, size = 0x4, scoped, tag = 'scoped memory for tpu_custom_call.1']
    #allocation9 [shape = 'u8[4608]{0}', space=vmem, size = 0x1400, scoped, tag = 'input window, operand 2, single buffered']
    #allocation10 [shape = 'u8[294912]{0}', space=vmem, size = 0x48000, scoped, tag = 'input window, operand 3, single buffered']
    #allocation11 [shape = 's32[1]{0}', space=sflag, size = 0x4, scoped, tag = 'scoped memory for tpu_custom_call.1']
    #allocation12 [shape = 'u8[24576]{0}', space=vmem, size = 0x6000, scoped, tag = 'output window, operand 0']
    %10 = vsyncpa [#allocation5], 0
    %s11 = scalar_lea.sflag [#allocation5], 1
    %12 = vsyncpa %s11, 0
    %13 = vsyncpa [#allocation8], 0
    %14 = vsyncpa [#allocation11], 0
    %15 = vsyncpa [#allocation6], 0
    %s16 = scalar_lea.sflag [#allocation6], 1
    %17 = vsyncpa %s16, 0
    loop: start=0, step=1, limit=4
    $region2: #{tpu_custom_call.1} parent=1 // loop_pre_header
      _
    $region3: #{tpu_custom_call.1} parent=1 // loop_header
      %s19 = sphi 0, %s23
      %p20 = scmp.ge.s32.totalorder %s19, 4
      %s29 = sphi 0, %s31
      %s32 = sphi 0, %s29
      %s33 = sphi 0, %s32
      %s49 = sphi 0, %s33
      %s53 = sphi 0, %s53
      %s55 = sphi 0, %s53
      %s56 = sphi 0, %s55
      %s70 = sphi 0, %s56
      %s74 = sphi 0, %s74
      %s76 = sphi 0, %s74
      %s77 = sphi 0, %s76
      %s91 = sphi 0, %s77
      %s95 = sphi 0, %s95
      %s97 = sphi 0, %s95
      %s98 = sphi 0, %s97
      %s112 = sphi 0, %s98
      %s116 = sphi 0, %s116
      %s118 = sphi 0, %s116
      %s119 = sphi 0, %s118
      %s133 = sphi 0, %s119
      %s139 = sphi 0, %s141
      %s142 = sphi 0, %s139
      %s143 = sphi 0, %s142
      %s159 = sphi 0, %s143
    $region4: #{tpu_custom_call.1} parent=1 // loop_header_branch
      %22 = sbr.rel (%p20) target = $region8
    $region5: #{tpu_custom_call.1} parent=1 // loop_body
      %s24 = ssub.s32 %s19, 1
      %s25 = ssub.s32 %s19, 2
      %s26 = sadd.s32 %s19, 1
      %s27 = ssub.s32 %s19, %s26
      %p28 = scmp.eq.s32.totalorder %s27, 0
      %s30 = sadd.s32 %s29, 1
      %s31 = scalar_select %p28, %s29, %s30
      %p34 = pneg %p28
      %p35 = scmp.eq.s32.totalorder %s19, 1
      %p36 = por %p34, %p35
      %p37 = scmp.ne.s32.totalorder %s29, %s32
      %p38 = scmp.eq.s32.totalorder %s19, 0
      %p39 = por %p37, %p38
      %p40 = scmp.ne.s32.totalorder %s29, %s32
      %p41 = scmp.eq.s32.totalorder %s24, 1
      %p42 = por %p40, %p41
      %p43 = scmp.ne.s32.totalorder %s32, %s33
      %p44 = scmp.eq.s32.totalorder %s24, 0
      %p45 = por %p43, %p44
      %p46 = scmp.ne.s32.totalorder %s32, %s33
      %p47 = scmp.eq.s32.totalorder %s25, 1
      %p48 = por %p46, %p47
      %p50 = scmp.ne.s32.totalorder %s33, %s49
      %p51 = scmp.eq.s32.totalorder %s25, 0
      %p52 = por %p50, %p51
      %s54 = sadd.s32 %s53, 1
      %p57 = scmp.eq.s32.totalorder %s19, 1
      %p58 = scmp.ne.s32.totalorder %s53, %s55
      %p59 = scmp.eq.s32.totalorder %s19, 0
      %p60 = por %p58, %p59
      %p61 = scmp.ne.s32.totalorder %s53, %s55
      %p62 = scmp.eq.s32.totalorder %s24, 1
      %p63 = por %p61, %p62
      %p64 = scmp.ne.s32.totalorder %s55, %s56
      %p65 = scmp.eq.s32.totalorder %s24, 0
      %p66 = por %p64, %p65
      %p67 = scmp.ne.s32.totalorder %s55, %s56
      %p68 = scmp.eq.s32.totalorder %s25, 1
      %p69 = por %p67, %p68
      %p71 = scmp.ne.s32.totalorder %s56, %s70
      %p72 = scmp.eq.s32.totalorder %s25, 0
      %p73 = por %p71, %p72
      %s75 = sadd.s32 %s74, 1
      %p78 = scmp.eq.s32.totalorder %s19, 1
      %p79 = scmp.ne.s32.totalorder %s74, %s76
      %p80 = scmp.eq.s32.totalorder %s19, 0
      %p81 = por %p79, %p80
      %p82 = scmp.ne.s32.totalorder %s74, %s76
      %p83 = scmp.eq.s32.totalorder %s24, 1
      %p84 = por %p82, %p83
      %p85 = scmp.ne.s32.totalorder %s76, %s77
      %p86 = scmp.eq.s32.totalorder %s24, 0
      %p87 = por %p85, %p86
      %p88 = scmp.ne.s32.totalorder %s76, %s77
      %p89 = scmp.eq.s32.totalorder %s25, 1
      %p90 = por %p88, %p89
      %p92 = scmp.ne.s32.totalorder %s77, %s91
      %p93 = scmp.eq.s32.totalorder %s25, 0
      %p94 = por %p92, %p93
      %s96 = sadd.s32 %s95, 1
      %p99 = scmp.eq.s32.totalorder %s19, 1
      %p100 = scmp.ne.s32.totalorder %s95, %s97
      %p101 = scmp.eq.s32.totalorder %s19, 0
      %p102 = por %p100, %p101
      %p103 = scmp.ne.s32.totalorder %s95, %s97
      %p104 = scmp.eq.s32.totalorder %s24, 1
      %p105 = por %p103, %p104
      %p106 = scmp.ne.s32.totalorder %s97, %s98
      %p107 = scmp.eq.s32.totalorder %s24, 0
      %p108 = por %p106, %p107
      %p109 = scmp.ne.s32.totalorder %s97, %s98
      %p110 = scmp.eq.s32.totalorder %s25, 1
      %p111 = por %p109, %p110
      %p113 = scmp.ne.s32.totalorder %s98, %s112
      %p114 = scmp.eq.s32.totalorder %s25, 0
      %p115 = por %p113, %p114
      %s117 = sadd.s32 %s116, 1
      %p120 = scmp.eq.s32.totalorder %s19, 1
      %p121 = scmp.ne.s32.totalorder %s116, %s118
      %p122 = scmp.eq.s32.totalorder %s19, 0
      %p123 = por %p121, %p122
      %p124 = scmp.ne.s32.totalorder %s116, %s118
      %p125 = scmp.eq.s32.totalorder %s24, 1
      %p126 = por %p124, %p125
      %p127 = scmp.ne.s32.totalorder %s118, %s119
      %p128 = scmp.eq.s32.totalorder %s24, 0
      %p129 = por %p127, %p128
      %p130 = scmp.ne.s32.totalorder %s118, %s119
      %p131 = scmp.eq.s32.totalorder %s25, 1
      %p132 = por %p130, %p131
      %p134 = scmp.ne.s32.totalorder %s119, %s133
      %p135 = scmp.eq.s32.totalorder %s25, 0
      %p136 = por %p134, %p135
      %s137 = ssub.s32 %s19, %s26
      %p138 = scmp.eq.s32.totalorder %s137, 0
      %s140 = sadd.s32 %s139, 1
      %s141 = scalar_select %p138, %s139, %s140
      %p144 = pneg %p138
      %p145 = scmp.eq.s32.totalorder %s19, 1
      %p146 = por %p144, %p145
      %p147 = scmp.ne.s32.totalorder %s139, %s142
      %p148 = scmp.eq.s32.totalorder %s19, 0
      %p149 = por %p147, %p148
      %p150 = scmp.ne.s32.totalorder %s139, %s142
      %p151 = scmp.eq.s32.totalorder %s24, 1
      %p152 = por %p150, %p151
      %p153 = scmp.ne.s32.totalorder %s142, %s143
      %p154 = scmp.eq.s32.totalorder %s24, 0
      %p155 = por %p153, %p154
      %p156 = scmp.ne.s32.totalorder %s142, %s143
      %p157 = scmp.eq.s32.totalorder %s25, 1
      %p158 = por %p156, %p157
      %p160 = scmp.ne.s32.totalorder %s143, %s159
      %p161 = scmp.eq.s32.totalorder %s25, 0
      %p162 = por %p160, %p161
      %p163 = scmp.le.s32.totalorder 1, %s19
      %p164 = scmp.lt.s32.totalorder %s19, 3
      %p165 = pnand %p163, %p164
      %p166 = pneg %p165
      // Predicated region
      $region9: #{tpu_custom_call.1} parent=5 // pred_check
        _
      $region10: #{tpu_custom_call.1} parent=5 // pred_check_branch
        %168 = sbr.rel (%p165) target = $region12
      $region11: #{tpu_custom_call.1} parent=5 // pred_region
        %s169 = ssub.s32 %s19, 1
        // Predicated region
        $region13: #{tpu_custom_call.1} parent=11 // pred_check
          %p170 = pneg %p66
        $region14: #{tpu_custom_call.1} parent=11 // pred_check_branch
          %172 = sbr.rel (%p170) target = $region16
        $region15: #{tpu_custom_call.1} parent=11 // pred_region
          %s174 = ssub.s32 27648, 27648
          %175 = vsyncadd [#allocation8], %s174
          %s176 = sshll.u32 [#allocation7], 4
          %s177 = int_to_ptr.vmem [resolvable:$true] %s176
          %182 = dma.hbm_to_vmem [thread:$0]  %s1, 27648, %s177, [#allocation8], 576, 576, 36
        $region16: #{tpu_custom_call.1} parent=11 // pred_fallthru
          _
        // Predicated region
        $region17: #{tpu_custom_call.1} parent=11 // pred_check
          %p183 = pneg %p87
        $region18: #{tpu_custom_call.1} parent=11 // pred_check_branch
          %185 = sbr.rel (%p183) target = $region20
        $region19: #{tpu_custom_call.1} parent=11 // pred_region
          %s187 = ssub.s32 144, 144
          %188 = vsyncadd [#allocation8], %s187
          %s190 = sshll.u32 [#allocation9], 4
          %s191 = int_to_ptr.vmem [resolvable:$true] %s190
          %193 = dma.hbm_to_vmem [thread:$0]  %s2, 144, %s191, [#allocation8]
        $region20: #{tpu_custom_call.1} parent=11 // pred_fallthru
          _
        // Predicated region
        $region21: #{tpu_custom_call.1} parent=11 // pred_check
          %p194 = pneg %p108
        $region22: #{tpu_custom_call.1} parent=11 // pred_check_branch
          %196 = sbr.rel (%p194) target = $region24
        $region23: #{tpu_custom_call.1} parent=11 // pred_region
          %s198 = ssub.s32 9216, 9216
          %199 = vsyncadd [#allocation11], %s198
          %s200 = sshll.u32 [#allocation10], 4
          %s201 = int_to_ptr.vmem [resolvable:$true] %s200
          %206 = dma.hbm_to_vmem [thread:$0]  %s3, 9216, %s201, [#allocation11], 192, 192, 12
        $region24: #{tpu_custom_call.1} parent=11 // pred_fallthru
          _
        // Predicated region
        $region25: #{tpu_custom_call.1} parent=11 // pred_check
          %p207 = pneg %p129
        $region26: #{tpu_custom_call.1} parent=11 // pred_check_branch
          %209 = sbr.rel (%p207) target = $region28
        $region27: #{tpu_custom_call.1} parent=11 // pred_region
          _
        $region28: #{tpu_custom_call.1} parent=11 // pred_fallthru
          _
      $region12: #{tpu_custom_call.1} parent=5 // pred_fallthru
        _
      %p210 = scmp.lt.s32.totalorder %s19, 2
      // Predicated region
      $region29: #{tpu_custom_call.1} parent=5 // pred_check
        %p211 = pneg %p210
      $region30: #{tpu_custom_call.1} parent=5 // pred_check_branch
        %213 = sbr.rel (%p211) target = $region32
      $region31: #{tpu_custom_call.1} parent=5 // pred_region
        // Predicated region
        $region33: #{tpu_custom_call.1} parent=31 // pred_check
          %p214 = pneg %p39
        $region34: #{tpu_custom_call.1} parent=31 // pred_check_branch
          %216 = sbr.rel (%p214) target = $region36
        $region35: #{tpu_custom_call.1} parent=31 // pred_region
          %s217 = sand.u32 %s29, 1
          %s218 = scalar_lea.sflag [#allocation5], %s217
          %s219 = sand.u32 %s29, 1
          %s220 = smul.addr %s219, 24
          %s221 = scalar_lea.vmem [#allocation4], %s220
          %s223 = ssub.s32 384, 384
          %224 = vsyncadd %s218, %s223
          %s225 = smul.addr %s19, 3
          %s226 = smul.addr %s225, 128
          %s227 = scalar_lea.hbm %s0, %s226
          %s229 = sshll.u32 %s221, 4
          %s230 = int_to_ptr.vmem [resolvable:$true] %s229
          %232 = dma.hbm_to_vmem [thread:$0]  %s227, 384, %s230, %s218
        $region36: #{tpu_custom_call.1} parent=31 // pred_fallthru
          _
      $region32: #{tpu_custom_call.1} parent=5 // pred_fallthru
        _
      %p233 = scmp.le.s32.totalorder 1, %s19
      %p234 = scmp.lt.s32.totalorder %s19, 3
      %p235 = pnand %p233, %p234
      %p236 = pneg %p235
      // Predicated region
      $region37: #{tpu_custom_call.1} parent=5 // pred_check
        _
      $region38: #{tpu_custom_call.1} parent=5 // pred_check_branch
        %238 = sbr.rel (%p235) target = $region40
      $region39: #{tpu_custom_call.1} parent=5 // pred_region
        %s239 = ssub.s32 %s19, 1
        %s240 = sand.u32 %s32, 1
        %s241 = scalar_lea.sflag [#allocation5], %s240
        %s242 = sand.u32 %s32, 1
        %s243 = smul.addr %s242, 24
        %s244 = scalar_lea.vmem [#allocation4], %s243
        // Predicated region
        $region41: #{tpu_custom_call.1} parent=39 // pred_check
          %p245 = pneg %p45
        $region42: #{tpu_custom_call.1} parent=39 // pred_check_branch
          %247 = sbr.rel (%p245) target = $region44
        $region43: #{tpu_custom_call.1} parent=39 // pred_region
          %248 = dma.done %s241, 384
        $region44: #{tpu_custom_call.1} parent=39 // pred_fallthru
          _
        // Predicated region
        $region45: #{tpu_custom_call.1} parent=39 // pred_check
          %p249 = pneg %p66
        $region46: #{tpu_custom_call.1} parent=39 // pred_check_branch
          %251 = sbr.rel (%p249) target = $region48
        $region47: #{tpu_custom_call.1} parent=39 // pred_region
          %252 = dma.done [#allocation8], 27648
        $region48: #{tpu_custom_call.1} parent=39 // pred_fallthru
          _
        // Predicated region
        $region49: #{tpu_custom_call.1} parent=39 // pred_check
          %p253 = pneg %p87
        $region50: #{tpu_custom_call.1} parent=39 // pred_check_branch
          %255 = sbr.rel (%p253) target = $region52
        $region51: #{tpu_custom_call.1} parent=39 // pred_region
          %256 = dma.done [#allocation8], 144
        $region52: #{tpu_custom_call.1} parent=39 // pred_fallthru
          _
        // Predicated region
        $region53: #{tpu_custom_call.1} parent=39 // pred_check
          %p257 = pneg %p108
        $region54: #{tpu_custom_call.1} parent=39 // pred_check_branch
          %259 = sbr.rel (%p257) target = $region56
        $region55: #{tpu_custom_call.1} parent=39 // pred_region
          %260 = dma.done [#allocation11], 9216
        $region56: #{tpu_custom_call.1} parent=39 // pred_fallthru
          _
        %s261 = sand.u32 %s32, 1
        %s262 = scalar_lea.sflag [#allocation5], %s261
        %s263 = sand.u32 %s32, 1
        %s264 = smul.addr %s263, 24
        %s265 = scalar_lea.vmem [#allocation4], %s264
        %p266 = pneg %p45
        %p267 = pneg %p42
        %p268 = pneg %p66
        %p269 = pneg %p63
        %p270 = pneg %p87
        %p271 = pneg %p84
        %p272 = pneg %p108
        %p273 = pneg %p105
        %p274 = pneg %p129
        %p275 = pneg %p126
        %p276 = pneg %p155
        %p277 = pneg %p152
        %s278 = sand.u32 %s142, 1
        %s279 = scalar_lea.sflag [#allocation6], %s278
        %s280 = sand.u32 %s142, 1
        %s281 = smul.addr %s280, 24
        %s282 = scalar_lea.vmem [#allocation12], %s281
        %v284 = vlaneseq
        %v285 = vshrl.u32 %v284, 7
        %v286 = vlaneseq
        %v287 = vand.u32 %v286, 127
        %vm288 = vcmp.le.s32.totalorder %v287, %v285
        %v289 = vld [vmem:[%s244] sm:$0xff]
        %v290 = vld [vmem:[%s244 + $0x8] sm:$0xff]
        %v291 = vld [vmem:[%s244 + $0x10] sm:$0xff]
        %v292 = vpack.c.bf16 %v289, %v289
        %v293 = vpack.c.bf16 %v290, %v290
        %v294 = vpack.c.bf16 %v291, %v291
        %v295 = vld [vmem:[#allocation7] sm:$0xff]
        %v296 = vld [vmem:[#allocation7 + $0x8] sm:$0xff]
        %v297 = vld [vmem:[#allocation7 + $0x10] sm:$0xff]
        %v298 = vld [vmem:[#allocation7 + $0x18] sm:$0xff]
        %v299 = vld [vmem:[#allocation7 + $0x20] sm:$0xf]
        %v300 = vld [vmem:[#allocation7 + $0x24] sm:$0xff]
        %v301 = vld [vmem:[#allocation7 + $0x2c] sm:$0xff]
        %v302 = vld [vmem:[#allocation7 + $0x34] sm:$0xff]
        %v303 = vld [vmem:[#allocation7 + $0x3c] sm:$0xff]
        %v304 = vld [vmem:[#allocation7 + $0x44] sm:$0xf]
        %v305 = vld [vmem:[#allocation7 + $0x48] sm:$0xff]
        %v306 = vld [vmem:[#allocation7 + $0x50] sm:$0xff]
        %v307 = vld [vmem:[#allocation7 + $0x58] sm:$0xff]
        %v308 = vld [vmem:[#allocation7 + $0x60] sm:$0xff]
        %v309 = vld [vmem:[#allocation7 + $0x68] sm:$0xf]
        %v310 = vld [vmem:[#allocation7 + $0x6c] sm:$0xff]
        %v311 = vld [vmem:[#allocation7 + $0x74] sm:$0xff]
        %v312 = vld [vmem:[#allocation7 + $0x7c] sm:$0xff]
        %v313 = vld [vmem:[#allocation7 + $0x84] sm:$0xff]
        %v314 = vld [vmem:[#allocation7 + $0x8c] sm:$0xf]
        %v315 = vld [vmem:[#allocation7 + $0x90] sm:$0xff]
        %v316 = vld [vmem:[#allocation7 + $0x98] sm:$0xff]
        %v317 = vld [vmem:[#allocation7 + $0xa0] sm:$0xff]
        %v318 = vld [vmem:[#allocation7 + $0xa8] sm:$0xff]
        %v319 = vld [vmem:[#allocation7 + $0xb0] sm:$0xf]
        %v320 = vld [vmem:[#allocation7 + $0xb4] sm:$0xff]
        %v321 = vld [vmem:[#allocation7 + $0xbc] sm:$0xff]
        %v322 = vld [vmem:[#allocation7 + $0xc4] sm:$0xff]
        %v323 = vld [vmem:[#allocation7 + $0xcc] sm:$0xff]
        %v324 = vld [vmem:[#allocation7 + $0xd4] sm:$0xf]
        %v325 = vld [vmem:[#allocation7 + $0xd8] sm:$0xff]
        %v326 = vld [vmem:[#allocation7 + $0xe0] sm:$0xff]
        %v327 = vld [vmem:[#allocation7 + $0xe8] sm:$0xff]
        %v328 = vld [vmem:[#allocation7 + $0xf0] sm:$0xff]
        %v329 = vld [vmem:[#allocation7 + $0xf8] sm:$0xf]
        %v330 = vld [vmem:[#allocation7 + $0xfc] sm:$0xff]
        %v331 = vld [vmem:[#allocation7 + $0x104] sm:$0xff]
        %v332 = vld [vmem:[#allocation7 + $0x10c] sm:$0xff]
        %v333 = vld [vmem:[#allocation7 + $0x114] sm:$0xff]
        %v334 = vld [vmem:[#allocation7 + $0x11c] sm:$0xf]
        %v335 = vld [vmem:[#allocation7 + $0x120] sm:$0xff]
        %v336 = vld [vmem:[#allocation7 + $0x128] sm:$0xff]
        %v337 = vld [vmem:[#allocation7 + $0x130] sm:$0xff]
        %v338 = vld [vmem:[#allocation7 + $0x138] sm:$0xff]
        %v339 = vld [vmem:[#allocation7 + $0x140] sm:$0xf]
        %v340 = vld [vmem:[#allocation7 + $0x144] sm:$0xff]
        %v341 = vld [vmem:[#allocation7 + $0x14c] sm:$0xff]
        %v342 = vld [vmem:[#allocation7 + $0x154] sm:$0xff]
        %v343 = vld [vmem:[#allocation7 + $0x15c] sm:$0xff]
        %v344 = vld [vmem:[#allocation7 + $0x164] sm:$0xf]
        %v345 = vld [vmem:[#allocation7 + $0x168] sm:$0xff]
        %v346 = vld [vmem:[#allocation7 + $0x170] sm:$0xff]
        %v347 = vld [vmem:[#allocation7 + $0x178] sm:$0xff]
        %v348 = vld [vmem:[#allocation7 + $0x180] sm:$0xff]
        %v349 = vld [vmem:[#allocation7 + $0x188] sm:$0xf]
        %v350 = vld [vmem:[#allocation7 + $0x18c] sm:$0xff]
        %v351 = vld [vmem:[#allocation7 + $0x194] sm:$0xff]
        %v352 = vld [vmem:[#allocation7 + $0x19c] sm:$0xff]
        %v353 = vld [vmem:[#allocation7 + $0x1a4] sm:$0xff]
        %v354 = vld [vmem:[#allocation7 + $0x1ac] sm:$0xf]
        %v355 = vld [vmem:[#allocation7 + $0x1b0] sm:$0xff]
        %v356 = vld [vmem:[#allocation7 + $0x1b8] sm:$0xff]
        %v357 = vld [vmem:[#allocation7 + $0x1c0] sm:$0xff]
        %v358 = vld [vmem:[#allocation7 + $0x1c8] sm:$0xff]
        %v359 = vld [vmem:[#allocation7 + $0x1d0] sm:$0xf]
        %v360 = vld [vmem:[#allocation7 + $0x1d4] sm:$0xff]
        %v361 = vld [vmem:[#allocation7 + $0x1dc] sm:$0xff]
        %v362 = vld [vmem:[#allocation7 + $0x1e4] sm:$0xff]
        %v363 = vld [vmem:[#allocation7 + $0x1ec] sm:$0xff]
        %v364 = vld [vmem:[#allocation7 + $0x1f4] sm:$0xf]
        %v365 = vld [vmem:[#allocation7 + $0x1f8] sm:$0xff]
        %v366 = vld [vmem:[#allocation7 + $0x200] sm:$0xff]
        %v367 = vld [vmem:[#allocation7 + $0x208] sm:$0xff]
        %v368 = vld [vmem:[#allocation7 + $0x210] sm:$0xff]
        %v369 = vld [vmem:[#allocation7 + $0x218] sm:$0xf]
        %v370 = vld [vmem:[#allocation7 + $0x21c] sm:$0xff]
        %v371 = vld [vmem:[#allocation7 + $0x224] sm:$0xff]
        %v372 = vld [vmem:[#allocation7 + $0x22c] sm:$0xff]
        %v373 = vld [vmem:[#allocation7 + $0x234] sm:$0xff]
        %v374 = vld [vmem:[#allocation7 + $0x23c] sm:$0xf]
        %v375 = vld [vmem:[#allocation7 + $0x240] sm:$0xff]
        %v376 = vld [vmem:[#allocation7 + $0x248] sm:$0xff]
        %v377 = vld [vmem:[#allocation7 + $0x250] sm:$0xff]
        %v378 = vld [vmem:[#allocation7 + $0x258] sm:$0xff]
        %v379 = vld [vmem:[#allocation7 + $0x260] sm:$0xf]
        %v380 = vld [vmem:[#allocation7 + $0x264] sm:$0xff]
        %v381 = vld [vmem:[#allocation7 + $0x26c] sm:$0xff]
        %v382 = vld [vmem:[#allocation7 + $0x274] sm:$0xff]
        %v383 = vld [vmem:[#allocation7 + $0x27c] sm:$0xff]
        %v384 = vld [vmem:[#allocation7 + $0x284] sm:$0xf]
        %v385 = vld [vmem:[#allocation7 + $0x288] sm:$0xff]
        %v386 = vld [vmem:[#allocation7 + $0x290] sm:$0xff]
        %v387 = vld [vmem:[#allocation7 + $0x298] sm:$0xff]
        %v388 = vld [vmem:[#allocation7 + $0x2a0] sm:$0xff]
        %v389 = vld [vmem:[#allocation7 + $0x2a8] sm:$0xf]
        %v390 = vld [vmem:[#allocation7 + $0x2ac] sm:$0xff]
        %v391 = vld [vmem:[#allocation7 + $0x2b4] sm:$0xff]
        %v392 = vld [vmem:[#allocation7 + $0x2bc] sm:$0xff]
        %v393 = vld [vmem:[#allocation7 + $0x2c4] sm:$0xff]
        %v394 = vld [vmem:[#allocation7 + $0x2cc] sm:$0xf]
        %v395 = vld [vmem:[#allocation7 + $0x2d0] sm:$0xff]
        %v396 = vld [vmem:[#allocation7 + $0x2d8] sm:$0xff]
        %v397 = vld [vmem:[#allocation7 + $0x2e0] sm:$0xff]
        %v398 = vld [vmem:[#allocation7 + $0x2e8] sm:$0xff]
        %v399 = vld [vmem:[#allocation7 + $0x2f0] sm:$0xf]
        %v400 = vld [vmem:[#allocation7 + $0x2f4] sm:$0xff]
        %v401 = vld [vmem:[#allocation7 + $0x2fc] sm:$0xff]
        %v402 = vld [vmem:[#allocation7 + $0x304] sm:$0xff]
        %v403 = vld [vmem:[#allocation7 + $0x30c] sm:$0xff]
        %v404 = vld [vmem:[#allocation7 + $0x314] sm:$0xf]
        %v405 = vld [vmem:[#allocation7 + $0x318] sm:$0xff]
        %v406 = vld [vmem:[#allocation7 + $0x320] sm:$0xff]
        %v407 = vld [vmem:[#allocation7 + $0x328] sm:$0xff]
        %v408 = vld [vmem:[#allocation7 + $0x330] sm:$0xff]
        %v409 = vld [vmem:[#allocation7 + $0x338] sm:$0xf]
        %v410 = vld [vmem:[#allocation7 + $0x33c] sm:$0xff]
        %v411 = vld [vmem:[#allocation7 + $0x344] sm:$0xff]
        %v412 = vld [vmem:[#allocation7 + $0x34c] sm:$0xff]
        %v413 = vld [vmem:[#allocation7 + $0x354] sm:$0xff]
        %v414 = vld [vmem:[#allocation7 + $0x35c] sm:$0xf]
        %v415 = vld [vmem:[#allocation7 + $0x360] sm:$0xff]
        %v416 = vld [vmem:[#allocation7 + $0x368] sm:$0xff]
        %v417 = vld [vmem:[#allocation7 + $0x370] sm:$0xff]
        %v418 = vld [vmem:[#allocation7 + $0x378] sm:$0xff]
        %v419 = vld [vmem:[#allocation7 + $0x380] sm:$0xf]
        %v420 = vld [vmem:[#allocation7 + $0x384] sm:$0xff]
        %v421 = vld [vmem:[#allocation7 + $0x38c] sm:$0xff]
        %v422 = vld [vmem:[#allocation7 + $0x394] sm:$0xff]
        %v423 = vld [vmem:[#allocation7 + $0x39c] sm:$0xff]
        %v424 = vld [vmem:[#allocation7 + $0x3a4] sm:$0xf]
        %v425 = vld [vmem:[#allocation7 + $0x3a8] sm:$0xff]
        %v426 = vld [vmem:[#allocation7 + $0x3b0] sm:$0xff]
        %v427 = vld [vmem:[#allocation7 + $0x3b8] sm:$0xff]
        %v428 = vld [vmem:[#allocation7 + $0x3c0] sm:$0xff]
        %v429 = vld [vmem:[#allocation7 + $0x3c8] sm:$0xf]
        %v430 = vld [vmem:[#allocation7 + $0x3cc] sm:$0xff]
        %v431 = vld [vmem:[#allocation7 + $0x3d4] sm:$0xff]
        %v432 = vld [vmem:[#allocation7 + $0x3dc] sm:$0xff]
        %v433 = vld [vmem:[#allocation7 + $0x3e4] sm:$0xff]
        %v434 = vld [vmem:[#allocation7 + $0x3ec] sm:$0xf]
        %v435 = vld [vmem:[#allocation7 + $0x3f0] sm:$0xff]
        %v436 = vld [vmem:[#allocation7 + $0x3f8] sm:$0xff]
        %v437 = vld [vmem:[#allocation7 + $0x400] sm:$0xff]
        %v438 = vld [vmem:[#allocation7 + $0x408] sm:$0xff]
        %v439 = vld [vmem:[#allocation7 + $0x410] sm:$0xf]
        %v440 = vld [vmem:[#allocation7 + $0x414] sm:$0xff]
        %v441 = vld [vmem:[#allocation7 + $0x41c] sm:$0xff]
        %v442 = vld [vmem:[#allocation7 + $0x424] sm:$0xff]
        %v443 = vld [vmem:[#allocation7 + $0x42c] sm:$0xff]
        %v444 = vld [vmem:[#allocation7 + $0x434] sm:$0xf]
        %v445 = vld [vmem:[#allocation7 + $0x438] sm:$0xff]
        %v446 = vld [vmem:[#allocation7 + $0x440] sm:$0xff]
        %v447 = vld [vmem:[#allocation7 + $0x448] sm:$0xff]
        %v448 = vld [vmem:[#allocation7 + $0x450] sm:$0xff]
        %v449 = vld [vmem:[#allocation7 + $0x458] sm:$0xf]
        %v450 = vld [vmem:[#allocation7 + $0x45c] sm:$0xff]
        %v451 = vld [vmem:[#allocation7 + $0x464] sm:$0xff]
        %v452 = vld [vmem:[#allocation7 + $0x46c] sm:$0xff]
        %v453 = vld [vmem:[#allocation7 + $0x474] sm:$0xff]
        %v454 = vld [vmem:[#allocation7 + $0x47c] sm:$0xf]
        %v455 = vld [vmem:[#allocation7 + $0x480] sm:$0xff]
        %v456 = vld [vmem:[#allocation7 + $0x488] sm:$0xff]
        %v457 = vld [vmem:[#allocation7 + $0x490] sm:$0xff]
        %v458 = vld [vmem:[#allocation7 + $0x498] sm:$0xff]
        %v459 = vld [vmem:[#allocation7 + $0x4a0] sm:$0xf]
        %v460 = vld [vmem:[#allocation7 + $0x4a4] sm:$0xff]
        %v461 = vld [vmem:[#allocation7 + $0x4ac] sm:$0xff]
        %v462 = vld [vmem:[#allocation7 + $0x4b4] sm:$0xff]
        %v463 = vld [vmem:[#allocation7 + $0x4bc] sm:$0xff]
        %v464 = vld [vmem:[#allocation7 + $0x4c4] sm:$0xf]
        %v465 = vld [vmem:[#allocation7 + $0x4c8] sm:$0xff]
        %v466 = vld [vmem:[#allocation7 + $0x4d0] sm:$0xff]
        %v467 = vld [vmem:[#allocation7 + $0x4d8] sm:$0xff]
        %v468 = vld [vmem:[#allocation7 + $0x4e0] sm:$0xff]
        %v469 = vld [vmem:[#allocation7 + $0x4e8] sm:$0xf]
        %v470 = vld [vmem:[#allocation7 + $0x4ec] sm:$0xff]
        %v471 = vld [vmem:[#allocation7 + $0x4f4] sm:$0xff]
        %v472 = vld [vmem:[#allocation7 + $0x4fc] sm:$0xff]
        %v473 = vld [vmem:[#allocation7 + $0x504] sm:$0xff]
        %v474 = vld [vmem:[#allocation7 + $0x50c] sm:$0xf]
        %v475 = vld [vmem:[#allocation7 + $0x510] sm:$0xff]
        %v476 = vld [vmem:[#allocation7 + $0x518] sm:$0xff]
        %v477 = vld [vmem:[#allocation7 + $0x520] sm:$0xff]
        %v478 = vld [vmem:[#allocation7 + $0x528] sm:$0xff]
        %v479 = vld [vmem:[#allocation7 + $0x530] sm:$0xf]
        %v480 = vld [vmem:[#allocation7 + $0x534] sm:$0xff]
        %v481 = vld [vmem:[#allocation7 + $0x53c] sm:$0xff]
        %v482 = vld [vmem:[#allocation7 + $0x544] sm:$0xff]
        %v483 = vld [vmem:[#allocation7 + $0x54c] sm:$0xff]
        %v484 = vld [vmem:[#allocation7 + $0x554] sm:$0xf]
        %v485 = vld [vmem:[#allocation7 + $0x558] sm:$0xff]
        %v486 = vld [vmem:[#allocation7 + $0x560] sm:$0xff]
        %v487 = vld [vmem:[#allocation7 + $0x568] sm:$0xff]
        %v488 = vld [vmem:[#allocation7 + $0x570] sm:$0xff]
        %v489 = vld [vmem:[#allocation7 + $0x578] sm:$0xf]
        %v490 = vld [vmem:[#allocation7 + $0x57c] sm:$0xff]
        %v491 = vld [vmem:[#allocation7 + $0x584] sm:$0xff]
        %v492 = vld [vmem:[#allocation7 + $0x58c] sm:$0xff]
        %v493 = vld [vmem:[#allocation7 + $0x594] sm:$0xff]
        %v494 = vld [vmem:[#allocation7 + $0x59c] sm:$0xf]
        %v495 = vld [vmem:[#allocation7 + $0x5a0] sm:$0xff]
        %v496 = vld [vmem:[#allocation7 + $0x5a8] sm:$0xff]
        %v497 = vld [vmem:[#allocation7 + $0x5b0] sm:$0xff]
        %v498 = vld [vmem:[#allocation7 + $0x5b8] sm:$0xff]
        %v499 = vld [vmem:[#allocation7 + $0x5c0] sm:$0xf]
        %v500 = vld [vmem:[#allocation7 + $0x5c4] sm:$0xff]
        %v501 = vld [vmem:[#allocation7 + $0x5cc] sm:$0xff]
        %v502 = vld [vmem:[#allocation7 + $0x5d4] sm:$0xff]
        %v503 = vld [vmem:[#allocation7 + $0x5dc] sm:$0xff]
        %v504 = vld [vmem:[#allocation7 + $0x5e4] sm:$0xf]
        %v505 = vld [vmem:[#allocation7 + $0x5e8] sm:$0xff]
        %v506 = vld [vmem:[#allocation7 + $0x5f0] sm:$0xff]
        %v507 = vld [vmem:[#allocation7 + $0x5f8] sm:$0xff]
        %v508 = vld [vmem:[#allocation7 + $0x600] sm:$0xff]
        %v509 = vld [vmem:[#allocation7 + $0x608] sm:$0xf]
        %v510 = vld [vmem:[#allocation7 + $0x60c] sm:$0xff]
        %v511 = vld [vmem:[#allocation7 + $0x614] sm:$0xff]
        %v512 = vld [vmem:[#allocation7 + $0x61c] sm:$0xff]
        %v513 = vld [vmem:[#allocation7 + $0x624] sm:$0xff]
        %v514 = vld [vmem:[#allocation7 + $0x62c] sm:$0xf]
        %v515 = vld [vmem:[#allocation7 + $0x630] sm:$0xff]
        %v516 = vld [vmem:[#allocation7 + $0x638] sm:$0xff]
        %v517 = vld [vmem:[#allocation7 + $0x640] sm:$0xff]
        %v518 = vld [vmem:[#allocation7 + $0x648] sm:$0xff]
        %v519 = vld [vmem:[#allocation7 + $0x650] sm:$0xf]
        %v520 = vld [vmem:[#allocation7 + $0x654] sm:$0xff]
        %v521 = vld [vmem:[#allocation7 + $0x65c] sm:$0xff]
        %v522 = vld [vmem:[#allocation7 + $0x664] sm:$0xff]
        %v523 = vld [vmem:[#allocation7 + $0x66c] sm:$0xff]
        %v524 = vld [vmem:[#allocation7 + $0x674] sm:$0xf]
        %v525 = vld [vmem:[#allocation7 + $0x678] sm:$0xff]
        %v526 = vld [vmem:[#allocation7 + $0x680] sm:$0xff]
        %v527 = vld [vmem:[#allocation7 + $0x688] sm:$0xff]
        %v528 = vld [vmem:[#allocation7 + $0x690] sm:$0xff]
        %v529 = vld [vmem:[#allocation7 + $0x698] sm:$0xf]
        %v530 = vld [vmem:[#allocation7 + $0x69c] sm:$0xff]
        %v531 = vld [vmem:[#allocation7 + $0x6a4] sm:$0xff]
        %v532 = vld [vmem:[#allocation7 + $0x6ac] sm:$0xff]
        %v533 = vld [vmem:[#allocation7 + $0x6b4] sm:$0xff]
        %v534 = vld [vmem:[#allocation7 + $0x6bc] sm:$0xf]
        %v535 = vld [vmem:[#allocation9] sm:$0xff]
        %v536 = vld [vmem:[#allocation9 + $0x8] sm:$0x1]
        %v539 = vlaneseq
        %v540 = vshrl.u32 %v539, 7
        %v541 = vsub.s32 0, %v540
        %v542 = vrot.slane %v535, %v541
        %v543 = vlaneseq
        %v544 = vshrl.u32 %v543, 7
        %v545 = vsub.s32 1, %v544
        %v546 = vrot.slane %v535, %v545
        %v547 = vlaneseq
        %v548 = vshrl.u32 %v547, 7
        %v549 = vsub.s32 2, %v548
        %v550 = vrot.slane %v535, %v549
        %v551 = vlaneseq
        %v552 = vshrl.u32 %v551, 7
        %v553 = vsub.s32 3, %v552
        %v554 = vrot.slane %v535, %v553
        %v555 = vlaneseq
        %v556 = vshrl.u32 %v555, 7
        %v557 = vsub.s32 4, %v556
        %v558 = vrot.slane %v535, %v557
        %v559 = vlaneseq
        %v560 = vshrl.u32 %v559, 7
        %v561 = vsub.s32 5, %v560
        %v562 = vrot.slane %v535, %v561
        %v563 = vlaneseq
        %v564 = vshrl.u32 %v563, 7
        %v565 = vsub.s32 6, %v564
        %v566 = vrot.slane %v535, %v565
        %v567 = vlaneseq
        %v568 = vshrl.u32 %v567, 7
        %v569 = vsub.s32 7, %v568
        %v570 = vrot.slane %v535, %v569
        %v571 = vlaneseq
        %v572 = vshrl.u32 %v571, 7
        %v573 = vsub.s32 0, %v572
        %v574 = vrot.slane %v536, %v573
        %v824 = vunpack.c.l.b16 %v295
        %v825 = vunpack.c.h.b16 %v295
        %v826 = vunpack.c.l.b16 %v296
        %v827 = vunpack.c.h.b16 %v296
        %v828 = vunpack.c.l.b16 %v297
        %v829 = vunpack.c.h.b16 %v297
        %v830 = vunpack.c.l.b16 %v298
        %v831 = vunpack.c.h.b16 %v298
        %v832 = vunpack.c.l.b16 %v299
        %v833 = vunpack.c.l.b16 %v300
        %v834 = vunpack.c.h.b16 %v300
        %v835 = vunpack.c.l.b16 %v301
        %v836 = vunpack.c.h.b16 %v301
        %v837 = vunpack.c.l.b16 %v302
        %v838 = vunpack.c.h.b16 %v302
        %v839 = vunpack.c.l.b16 %v303
        %v840 = vunpack.c.h.b16 %v303
        %v841 = vunpack.c.l.b16 %v304
        %v842 = vunpack.c.l.b16 %v305
        %v843 = vunpack.c.h.b16 %v305
        %v844 = vunpack.c.l.b16 %v306
        %v845 = vunpack.c.h.b16 %v306
        %v846 = vunpack.c.l.b16 %v307
        %v847 = vunpack.c.h.b16 %v307
        %v848 = vunpack.c.l.b16 %v308
        %v849 = vunpack.c.h.b16 %v308
        %v850 = vunpack.c.l.b16 %v309
        %v851 = vunpack.c.l.b16 %v310
        %v852 = vunpack.c.h.b16 %v310
        %v853 = vunpack.c.l.b16 %v311
        %v854 = vunpack.c.h.b16 %v311
        %v855 = vunpack.c.l.b16 %v312
        %v856 = vunpack.c.h.b16 %v312
        %v857 = vunpack.c.l.b16 %v313
        %v858 = vunpack.c.h.b16 %v313
        %v859 = vunpack.c.l.b16 %v314
        %v860 = vunpack.c.l.b16 %v315
        %v861 = vunpack.c.h.b16 %v315
        %v862 = vunpack.c.l.b16 %v316
        %v863 = vunpack.c.h.b16 %v316
        %v864 = vunpack.c.l.b16 %v317
        %v865 = vunpack.c.h.b16 %v317
        %v866 = vunpack.c.l.b16 %v318
        %v867 = vunpack.c.h.b16 %v318
        %v868 = vunpack.c.l.b16 %v319
        %v869 = vunpack.c.l.b16 %v320
        %v870 = vunpack.c.h.b16 %v320
        %v871 = vunpack.c.l.b16 %v321
        %v872 = vunpack.c.h.b16 %v321
        %v873 = vunpack.c.l.b16 %v322
        %v874 = vunpack.c.h.b16 %v322
        %v875 = vunpack.c.l.b16 %v323
        %v876 = vunpack.c.h.b16 %v323
        %v877 = vunpack.c.l.b16 %v324
        %v878 = vunpack.c.l.b16 %v325
        %v879 = vunpack.c.h.b16 %v325
        %v880 = vunpack.c.l.b16 %v326
        %v881 = vunpack.c.h.b16 %v326
        %v882 = vunpack.c.l.b16 %v327
        %v883 = vunpack.c.h.b16 %v327
        %v884 = vunpack.c.l.b16 %v328
        %v885 = vunpack.c.h.b16 %v328
        %v886 = vunpack.c.l.b16 %v329
        %v887 = vunpack.c.l.b16 %v330
        %v888 = vunpack.c.h.b16 %v330
        %v889 = vunpack.c.l.b16 %v331
        %v890 = vunpack.c.h.b16 %v331
        %v891 = vunpack.c.l.b16 %v332
        %v892 = vunpack.c.h.b16 %v332
        %v893 = vunpack.c.l.b16 %v333
        %v894 = vunpack.c.h.b16 %v333
        %v895 = vunpack.c.l.b16 %v334
        %v896 = vunpack.c.l.b16 %v335
        %v897 = vunpack.c.h.b16 %v335
        %v898 = vunpack.c.l.b16 %v336
        %v899 = vunpack.c.h.b16 %v336
        %v900 = vunpack.c.l.b16 %v337
        %v901 = vunpack.c.h.b16 %v337
        %v902 = vunpack.c.l.b16 %v338
        %v903 = vunpack.c.h.b16 %v338
        %v904 = vunpack.c.l.b16 %v339
        %v905 = vunpack.c.l.b16 %v340
        %v906 = vunpack.c.h.b16 %v340
        %v907 = vunpack.c.l.b16 %v341
        %v908 = vunpack.c.h.b16 %v341
        %v909 = vunpack.c.l.b16 %v342
        %v910 = vunpack.c.h.b16 %v342
        %v911 = vunpack.c.l.b16 %v343
        %v912 = vunpack.c.h.b16 %v343
        %v913 = vunpack.c.l.b16 %v344
        %v914 = vunpack.c.l.b16 %v345
        %v915 = vunpack.c.h.b16 %v345
        %v916 = vunpack.c.l.b16 %v346
        %v917 = vunpack.c.h.b16 %v346
        %v918 = vunpack.c.l.b16 %v347
        %v919 = vunpack.c.h.b16 %v347
        %v920 = vunpack.c.l.b16 %v348
        %v921 = vunpack.c.h.b16 %v348
        %v922 = vunpack.c.l.b16 %v349
        %v923 = vunpack.c.l.b16 %v350
        %v924 = vunpack.c.h.b16 %v350
        %v925 = vunpack.c.l.b16 %v351
        %v926 = vunpack.c.h.b16 %v351
        %v927 = vunpack.c.l.b16 %v352
        %v928 = vunpack.c.h.b16 %v352
        %v929 = vunpack.c.l.b16 %v353
        %v930 = vunpack.c.h.b16 %v353
        %v931 = vunpack.c.l.b16 %v354
        %v932 = vunpack.c.l.b16 %v355
        %v933 = vunpack.c.h.b16 %v355
        %v934 = vunpack.c.l.b16 %v356
        %v935 = vunpack.c.h.b16 %v356
        %v936 = vunpack.c.l.b16 %v357
        %v937 = vunpack.c.h.b16 %v357
        %v938 = vunpack.c.l.b16 %v358
        %v939 = vunpack.c.h.b16 %v358
        %v940 = vunpack.c.l.b16 %v359
        %v941 = vunpack.c.l.b16 %v360
        %v942 = vunpack.c.h.b16 %v360
        %v943 = vunpack.c.l.b16 %v361
        %v944 = vunpack.c.h.b16 %v361
        %v945 = vunpack.c.l.b16 %v362
        %v946 = vunpack.c.h.b16 %v362
        %v947 = vunpack.c.l.b16 %v363
        %v948 = vunpack.c.h.b16 %v363
        %v949 = vunpack.c.l.b16 %v364
        %v950 = vunpack.c.l.b16 %v365
        %v951 = vunpack.c.h.b16 %v365
        %v952 = vunpack.c.l.b16 %v366
        %v953 = vunpack.c.h.b16 %v366
        %v954 = vunpack.c.l.b16 %v367
        %v955 = vunpack.c.h.b16 %v367
        %v956 = vunpack.c.l.b16 %v368
        %v957 = vunpack.c.h.b16 %v368
        %v958 = vunpack.c.l.b16 %v369
        %v959 = vunpack.c.l.b16 %v370
        %v960 = vunpack.c.h.b16 %v370
        %v961 = vunpack.c.l.b16 %v371
        %v962 = vunpack.c.h.b16 %v371
        %v963 = vunpack.c.l.b16 %v372
        %v964 = vunpack.c.h.b16 %v372
        %v965 = vunpack.c.l.b16 %v373
        %v966 = vunpack.c.h.b16 %v373
        %v967 = vunpack.c.l.b16 %v374
        %v968 = vunpack.c.l.b16 %v375
        %v969 = vunpack.c.h.b16 %v375
        %v970 = vunpack.c.l.b16 %v376
        %v971 = vunpack.c.h.b16 %v376
        %v972 = vunpack.c.l.b16 %v377
        %v973 = vunpack.c.h.b16 %v377
        %v974 = vunpack.c.l.b16 %v378
        %v975 = vunpack.c.h.b16 %v378
        %v976 = vunpack.c.l.b16 %v379
        %v977 = vunpack.c.l.b16 %v380
        %v978 = vunpack.c.h.b16 %v380
        %v979 = vunpack.c.l.b16 %v381
        %v980 = vunpack.c.h.b16 %v381
        %v981 = vunpack.c.l.b16 %v382
        %v982 = vunpack.c.h.b16 %v382
        %v983 = vunpack.c.l.b16 %v383
        %v984 = vunpack.c.h.b16 %v383
        %v985 = vunpack.c.l.b16 %v384
        %v986 = vunpack.c.l.b16 %v385
        %v987 = vunpack.c.h.b16 %v385
        %v988 = vunpack.c.l.b16 %v386
        %v989 = vunpack.c.h.b16 %v386
        %v990 = vunpack.c.l.b16 %v387
        %v991 = vunpack.c.h.b16 %v387
        %v992 = vunpack.c.l.b16 %v388
        %v993 = vunpack.c.h.b16 %v388
        %v994 = vunpack.c.l.b16 %v389
        %v995 = vunpack.c.l.b16 %v390
        %v996 = vunpack.c.h.b16 %v390
        %v997 = vunpack.c.l.b16 %v391
        %v998 = vunpack.c.h.b16 %v391
        %v999 = vunpack.c.l.b16 %v392
        %v1000 = vunpack.c.h.b16 %v392
        %v1001 = vunpack.c.l.b16 %v393
        %v1002 = vunpack.c.h.b16 %v393
        %v1003 = vunpack.c.l.b16 %v394
        %v1004 = vunpack.c.l.b16 %v395
        %v1005 = vunpack.c.h.b16 %v395
        %v1006 = vunpack.c.l.b16 %v396
        %v1007 = vunpack.c.h.b16 %v396
        %v1008 = vunpack.c.l.b16 %v397
        %v1009 = vunpack.c.h.b16 %v397
        %v1010 = vunpack.c.l.b16 %v398
        %v1011 = vunpack.c.h.b16 %v398
        %v1012 = vunpack.c.l.b16 %v399
        %v1013 = vunpack.c.l.b16 %v400
        %v1014 = vunpack.c.h.b16 %v400
        %v1015 = vunpack.c.l.b16 %v401
        %v1016 = vunpack.c.h.b16 %v401
        %v1017 = vunpack.c.l.b16 %v402
        %v1018 = vunpack.c.h.b16 %v402
        %v1019 = vunpack.c.l.b16 %v403
        %v1020 = vunpack.c.h.b16 %v403
        %v1021 = vunpack.c.l.b16 %v404
        %v1022 = vunpack.c.l.b16 %v405
        %v1023 = vunpack.c.h.b16 %v405
        %v1024 = vunpack.c.l.b16 %v406
        %v1025 = vunpack.c.h.b16 %v406
        %v1026 = vunpack.c.l.b16 %v407
        %v1027 = vunpack.c.h.b16 %v407
        %v1028 = vunpack.c.l.b16 %v408
        %v1029 = vunpack.c.h.b16 %v408
        %v1030 = vunpack.c.l.b16 %v409
        %v1031 = vunpack.c.l.b16 %v410
        %v1032 = vunpack.c.h.b16 %v410
        %v1033 = vunpack.c.l.b16 %v411
        %v1034 = vunpack.c.h.b16 %v411
        %v1035 = vunpack.c.l.b16 %v412
        %v1036 = vunpack.c.h.b16 %v412
        %v1037 = vunpack.c.l.b16 %v413
        %v1038 = vunpack.c.h.b16 %v413
        %v1039 = vunpack.c.l.b16 %v414
        %v1040 = vunpack.c.l.b16 %v415
        %v1041 = vunpack.c.h.b16 %v415
        %v1042 = vunpack.c.l.b16 %v416
        %v1043 = vunpack.c.h.b16 %v416
        %v1044 = vunpack.c.l.b16 %v417
        %v1045 = vunpack.c.h.b16 %v417
        %v1046 = vunpack.c.l.b16 %v418
        %v1047 = vunpack.c.h.b16 %v418
        %v1048 = vunpack.c.l.b16 %v419
        %v1049 = vunpack.c.l.b16 %v420
        %v1050 = vunpack.c.h.b16 %v420
        %v1051 = vunpack.c.l.b16 %v421
        %v1052 = vunpack.c.h.b16 %v421
        %v1053 = vunpack.c.l.b16 %v422
        %v1054 = vunpack.c.h.b16 %v422
        %v1055 = vunpack.c.l.b16 %v423
        %v1056 = vunpack.c.h.b16 %v423
        %v1057 = vunpack.c.l.b16 %v424
        %v1058 = vunpack.c.l.b16 %v425
        %v1059 = vunpack.c.h.b16 %v425
        %v1060 = vunpack.c.l.b16 %v426
        %v1061 = vunpack.c.h.b16 %v426
        %v1062 = vunpack.c.l.b16 %v427
        %v1063 = vunpack.c.h.b16 %v427
        %v1064 = vunpack.c.l.b16 %v428
        %v1065 = vunpack.c.h.b16 %v428
        %v1066 = vunpack.c.l.b16 %v429
        %v1067 = vunpack.c.l.b16 %v430
        %v1068 = vunpack.c.h.b16 %v430
        %v1069 = vunpack.c.l.b16 %v431
        %v1070 = vunpack.c.h.b16 %v431
        %v1071 = vunpack.c.l.b16 %v432
        %v1072 = vunpack.c.h.b16 %v432
        %v1073 = vunpack.c.l.b16 %v433
        %v1074 = vunpack.c.h.b16 %v433
        %v1075 = vunpack.c.l.b16 %v434
        %v1076 = vunpack.c.l.b16 %v435
        %v1077 = vunpack.c.h.b16 %v435
        %v1078 = vunpack.c.l.b16 %v436
        %v1079 = vunpack.c.h.b16 %v436
        %v1080 = vunpack.c.l.b16 %v437
        %v1081 = vunpack.c.h.b16 %v437
        %v1082 = vunpack.c.l.b16 %v438
        %v1083 = vunpack.c.h.b16 %v438
        %v1084 = vunpack.c.l.b16 %v439
        %v1085 = vunpack.c.l.b16 %v440
        %v1086 = vunpack.c.h.b16 %v440
        %v1087 = vunpack.c.l.b16 %v441
        %v1088 = vunpack.c.h.b16 %v441
        %v1089 = vunpack.c.l.b16 %v442
        %v1090 = vunpack.c.h.b16 %v442
        %v1091 = vunpack.c.l.b16 %v443
        %v1092 = vunpack.c.h.b16 %v443
        %v1093 = vunpack.c.l.b16 %v444
        %v1094 = vunpack.c.l.b16 %v445
        %v1095 = vunpack.c.h.b16 %v445
        %v1096 = vunpack.c.l.b16 %v446
        %v1097 = vunpack.c.h.b16 %v446
        %v1098 = vunpack.c.l.b16 %v447
        %v1099 = vunpack.c.h.b16 %v447
        %v1100 = vunpack.c.l.b16 %v448
        %v1101 = vunpack.c.h.b16 %v448
        %v1102 = vunpack.c.l.b16 %v449
        %v1103 = vunpack.c.l.b16 %v450
        %v1104 = vunpack.c.h.b16 %v450
        %v1105 = vunpack.c.l.b16 %v451
        %v1106 = vunpack.c.h.b16 %v451
        %v1107 = vunpack.c.l.b16 %v452
        %v1108 = vunpack.c.h.b16 %v452
        %v1109 = vunpack.c.l.b16 %v453
        %v1110 = vunpack.c.h.b16 %v453
        %v1111 = vunpack.c.l.b16 %v454
        %v1112 = vunpack.c.l.b16 %v455
        %v1113 = vunpack.c.h.b16 %v455
        %v1114 = vunpack.c.l.b16 %v456
        %v1115 = vunpack.c.h.b16 %v456
        %v1116 = vunpack.c.l.b16 %v457
        %v1117 = vunpack.c.h.b16 %v457
        %v1118 = vunpack.c.l.b16 %v458
        %v1119 = vunpack.c.h.b16 %v458
        %v1120 = vunpack.c.l.b16 %v459
        %v1121 = vunpack.c.l.b16 %v460
        %v1122 = vunpack.c.h.b16 %v460
        %v1123 = vunpack.c.l.b16 %v461
        %v1124 = vunpack.c.h.b16 %v461
        %v1125 = vunpack.c.l.b16 %v462
        %v1126 = vunpack.c.h.b16 %v462
        %v1127 = vunpack.c.l.b16 %v463
        %v1128 = vunpack.c.h.b16 %v463
        %v1129 = vunpack.c.l.b16 %v464
        %v1130 = vunpack.c.l.b16 %v465
        %v1131 = vunpack.c.h.b16 %v465
        %v1132 = vunpack.c.l.b16 %v466
        %v1133 = vunpack.c.h.b16 %v466
        %v1134 = vunpack.c.l.b16 %v467
        %v1135 = vunpack.c.h.b16 %v467
        %v1136 = vunpack.c.l.b16 %v468
        %v1137 = vunpack.c.h.b16 %v468
        %v1138 = vunpack.c.l.b16 %v469
        %v1139 = vunpack.c.l.b16 %v470
        %v1140 = vunpack.c.h.b16 %v470
        %v1141 = vunpack.c.l.b16 %v471
        %v1142 = vunpack.c.h.b16 %v471
        %v1143 = vunpack.c.l.b16 %v472
        %v1144 = vunpack.c.h.b16 %v472
        %v1145 = vunpack.c.l.b16 %v473
        %v1146 = vunpack.c.h.b16 %v473
        %v1147 = vunpack.c.l.b16 %v474
        %v1148 = vunpack.c.l.b16 %v475
        %v1149 = vunpack.c.h.b16 %v475
        %v1150 = vunpack.c.l.b16 %v476
        %v1151 = vunpack.c.h.b16 %v476
        %v1152 = vunpack.c.l.b16 %v477
        %v1153 = vunpack.c.h.b16 %v477
        %v1154 = vunpack.c.l.b16 %v478
        %v1155 = vunpack.c.h.b16 %v478
        %v1156 = vunpack.c.l.b16 %v479
        %v1157 = vunpack.c.l.b16 %v480
        %v1158 = vunpack.c.h.b16 %v480
        %v1159 = vunpack.c.l.b16 %v481
        %v1160 = vunpack.c.h.b16 %v481
        %v1161 = vunpack.c.l.b16 %v482
        %v1162 = vunpack.c.h.b16 %v482
        %v1163 = vunpack.c.l.b16 %v483
        %v1164 = vunpack.c.h.b16 %v483
        %v1165 = vunpack.c.l.b16 %v484
        %v1166 = vunpack.c.l.b16 %v485
        %v1167 = vunpack.c.h.b16 %v485
        %v1168 = vunpack.c.l.b16 %v486
        %v1169 = vunpack.c.h.b16 %v486
        %v1170 = vunpack.c.l.b16 %v487
        %v1171 = vunpack.c.h.b16 %v487
        %v1172 = vunpack.c.l.b16 %v488
        %v1173 = vunpack.c.h.b16 %v488
        %v1174 = vunpack.c.l.b16 %v489
        %v1175 = vunpack.c.l.b16 %v490
        %v1176 = vunpack.c.h.b16 %v490
        %v1177 = vunpack.c.l.b16 %v491
        %v1178 = vunpack.c.h.b16 %v491
        %v1179 = vunpack.c.l.b16 %v492
        %v1180 = vunpack.c.h.b16 %v492
        %v1181 = vunpack.c.l.b16 %v493
        %v1182 = vunpack.c.h.b16 %v493
        %v1183 = vunpack.c.l.b16 %v494
        %v1184 = vunpack.c.l.b16 %v495
        %v1185 = vunpack.c.h.b16 %v495
        %v1186 = vunpack.c.l.b16 %v496
        %v1187 = vunpack.c.h.b16 %v496
        %v1188 = vunpack.c.l.b16 %v497
        %v1189 = vunpack.c.h.b16 %v497
        %v1190 = vunpack.c.l.b16 %v498
        %v1191 = vunpack.c.h.b16 %v498
        %v1192 = vunpack.c.l.b16 %v499
        %v1193 = vunpack.c.l.b16 %v500
        %v1194 = vunpack.c.h.b16 %v500
        %v1195 = vunpack.c.l.b16 %v501
        %v1196 = vunpack.c.h.b16 %v501
        %v1197 = vunpack.c.l.b16 %v502
        %v1198 = vunpack.c.h.b16 %v502
        %v1199 = vunpack.c.l.b16 %v503
        %v1200 = vunpack.c.h.b16 %v503
        %v1201 = vunpack.c.l.b16 %v504
        %v1202 = vunpack.c.l.b16 %v505
        %v1203 = vunpack.c.h.b16 %v505
        %v1204 = vunpack.c.l.b16 %v506
        %v1205 = vunpack.c.h.b16 %v506
        %v1206 = vunpack.c.l.b16 %v507
        %v1207 = vunpack.c.h.b16 %v507
        %v1208 = vunpack.c.l.b16 %v508
        %v1209 = vunpack.c.h.b16 %v508
        %v1210 = vunpack.c.l.b16 %v509
        %v1211 = vunpack.c.l.b16 %v510
        %v1212 = vunpack.c.h.b16 %v510
        %v1213 = vunpack.c.l.b16 %v511
        %v1214 = vunpack.c.h.b16 %v511
        %v1215 = vunpack.c.l.b16 %v512
        %v1216 = vunpack.c.h.b16 %v512
        %v1217 = vunpack.c.l.b16 %v513
        %v1218 = vunpack.c.h.b16 %v513
        %v1219 = vunpack.c.l.b16 %v514
        %v1220 = vunpack.c.l.b16 %v515
        %v1221 = vunpack.c.h.b16 %v515
        %v1222 = vunpack.c.l.b16 %v516
        %v1223 = vunpack.c.h.b16 %v516
        %v1224 = vunpack.c.l.b16 %v517
        %v1225 = vunpack.c.h.b16 %v517
        %v1226 = vunpack.c.l.b16 %v518
        %v1227 = vunpack.c.h.b16 %v518
        %v1228 = vunpack.c.l.b16 %v519
        %v1229 = vunpack.c.l.b16 %v520
        %v1230 = vunpack.c.h.b16 %v520
        %v1231 = vunpack.c.l.b16 %v521
        %v1232 = vunpack.c.h.b16 %v521
        %v1233 = vunpack.c.l.b16 %v522
        %v1234 = vunpack.c.h.b16 %v522
        %v1235 = vunpack.c.l.b16 %v523
        %v1236 = vunpack.c.h.b16 %v523
        %v1237 = vunpack.c.l.b16 %v524
        %v1238 = vunpack.c.l.b16 %v525
        %v1239 = vunpack.c.h.b16 %v525
        %v1240 = vunpack.c.l.b16 %v526
        %v1241 = vunpack.c.h.b16 %v526
        %v1242 = vunpack.c.l.b16 %v527
        %v1243 = vunpack.c.h.b16 %v527
        %v1244 = vunpack.c.l.b16 %v528
        %v1245 = vunpack.c.h.b16 %v528
        %v1246 = vunpack.c.l.b16 %v529
        %v1247 = vunpack.c.l.b16 %v530
        %v1248 = vunpack.c.h.b16 %v530
        %v1249 = vunpack.c.l.b16 %v531
        %v1250 = vunpack.c.h.b16 %v531
        %v1251 = vunpack.c.l.b16 %v532
        %v1252 = vunpack.c.h.b16 %v532
        %v1253 = vunpack.c.l.b16 %v533
        %v1254 = vunpack.c.h.b16 %v533
        %v1255 = vunpack.c.l.b16 %v534
        %v1256 = vpack.c.b16 %v833, %v824
        %v1257 = vpack.c.b16 %v834, %v825
        %v1258 = vpack.c.b16 %v835, %v826
        %v1259 = vpack.c.b16 %v836, %v827
        %v1260 = vpack.c.b16 %v837, %v828
        %v1261 = vpack.c.b16 %v838, %v829
        %v1262 = vpack.c.b16 %v839, %v830
        %v1263 = vpack.c.b16 %v840, %v831
        %v1264 = vpack.c.b16 %v841, %v832
        %v1265 = vpack.c.b16 %v851, %v842
        %v1266 = vpack.c.b16 %v852, %v843
        %v1267 = vpack.c.b16 %v853, %v844
        %v1268 = vpack.c.b16 %v854, %v845
        %v1269 = vpack.c.b16 %v855, %v846
        %v1270 = vpack.c.b16 %v856, %v847
        %v1271 = vpack.c.b16 %v857, %v848
        %v1272 = vpack.c.b16 %v858, %v849
        %v1273 = vpack.c.b16 %v859, %v850
        %v1274 = vpack.c.b16 %v869, %v860
        %v1275 = vpack.c.b16 %v870, %v861
        %v1276 = vpack.c.b16 %v871, %v862
        %v1277 = vpack.c.b16 %v872, %v863
        %v1278 = vpack.c.b16 %v873, %v864
        %v1279 = vpack.c.b16 %v874, %v865
        %v1280 = vpack.c.b16 %v875, %v866
        %v1281 = vpack.c.b16 %v876, %v867
        %v1282 = vpack.c.b16 %v877, %v868
        %v1283 = vpack.c.b16 %v887, %v878
        %v1284 = vpack.c.b16 %v888, %v879
        %v1285 = vpack.c.b16 %v889, %v880
        %v1286 = vpack.c.b16 %v890, %v881
        %v1287 = vpack.c.b16 %v891, %v882
        %v1288 = vpack.c.b16 %v892, %v883
        %v1289 = vpack.c.b16 %v893, %v884
        %v1290 = vpack.c.b16 %v894, %v885
        %v1291 = vpack.c.b16 %v895, %v886
        %v1292 = vpack.c.b16 %v905, %v896
        %v1293 = vpack.c.b16 %v906, %v897
        %v1294 = vpack.c.b16 %v907, %v898
        %v1295 = vpack.c.b16 %v908, %v899
        %v1296 = vpack.c.b16 %v909, %v900
        %v1297 = vpack.c.b16 %v910, %v901
        %v1298 = vpack.c.b16 %v911, %v902
        %v1299 = vpack.c.b16 %v912, %v903
        %v1300 = vpack.c.b16 %v913, %v904
        %v1301 = vpack.c.b16 %v923, %v914
        %v1302 = vpack.c.b16 %v924, %v915
        %v1303 = vpack.c.b16 %v925, %v916
        %v1304 = vpack.c.b16 %v926, %v917
        %v1305 = vpack.c.b16 %v927, %v918
        %v1306 = vpack.c.b16 %v928, %v919
        %v1307 = vpack.c.b16 %v929, %v920
        %v1308 = vpack.c.b16 %v930, %v921
        %v1309 = vpack.c.b16 %v931, %v922
        %v1310 = vpack.c.b16 %v941, %v932
        %v1311 = vpack.c.b16 %v942, %v933
        %v1312 = vpack.c.b16 %v943, %v934
        %v1313 = vpack.c.b16 %v944, %v935
        %v1314 = vpack.c.b16 %v945, %v936
        %v1315 = vpack.c.b16 %v946, %v937
        %v1316 = vpack.c.b16 %v947, %v938
        %v1317 = vpack.c.b16 %v948, %v939
        %v1318 = vpack.c.b16 %v949, %v940
        %v1319 = vpack.c.b16 %v959, %v950
        %v1320 = vpack.c.b16 %v960, %v951
        %v1321 = vpack.c.b16 %v961, %v952
        %v1322 = vpack.c.b16 %v962, %v953
        %v1323 = vpack.c.b16 %v963, %v954
        %v1324 = vpack.c.b16 %v964, %v955
        %v1325 = vpack.c.b16 %v965, %v956
        %v1326 = vpack.c.b16 %v966, %v957
        %v1327 = vpack.c.b16 %v967, %v958
        %v1328 = vpack.c.b16 %v977, %v968
        %v1329 = vpack.c.b16 %v978, %v969
        %v1330 = vpack.c.b16 %v979, %v970
        %v1331 = vpack.c.b16 %v980, %v971
        %v1332 = vpack.c.b16 %v981, %v972
        %v1333 = vpack.c.b16 %v982, %v973
        %v1334 = vpack.c.b16 %v983, %v974
        %v1335 = vpack.c.b16 %v984, %v975
        %v1336 = vpack.c.b16 %v985, %v976
        %v1337 = vpack.c.b16 %v995, %v986
        %v1338 = vpack.c.b16 %v996, %v987
        %v1339 = vpack.c.b16 %v997, %v988
        %v1340 = vpack.c.b16 %v998, %v989
        %v1341 = vpack.c.b16 %v999, %v990
        %v1342 = vpack.c.b16 %v1000, %v991
        %v1343 = vpack.c.b16 %v1001, %v992
        %v1344 = vpack.c.b16 %v1002, %v993
        %v1345 = vpack.c.b16 %v1003, %v994
        %v1346 = vpack.c.b16 %v1013, %v1004
        %v1347 = vpack.c.b16 %v1014, %v1005
        %v1348 = vpack.c.b16 %v1015, %v1006
        %v1349 = vpack.c.b16 %v1016, %v1007
        %v1350 = vpack.c.b16 %v1017, %v1008
        %v1351 = vpack.c.b16 %v1018, %v1009
        %v1352 = vpack.c.b16 %v1019, %v1010
        %v1353 = vpack.c.b16 %v1020, %v1011
        %v1354 = vpack.c.b16 %v1021, %v1012
        %v1355 = vpack.c.b16 %v1031, %v1022
        %v1356 = vpack.c.b16 %v1032, %v1023
        %v1357 = vpack.c.b16 %v1033, %v1024
        %v1358 = vpack.c.b16 %v1034, %v1025
        %v1359 = vpack.c.b16 %v1035, %v1026
        %v1360 = vpack.c.b16 %v1036, %v1027
        %v1361 = vpack.c.b16 %v1037, %v1028
        %v1362 = vpack.c.b16 %v1038, %v1029
        %v1363 = vpack.c.b16 %v1039, %v1030
        %v1364 = vpack.c.b16 %v1049, %v1040
        %v1365 = vpack.c.b16 %v1050, %v1041
        %v1366 = vpack.c.b16 %v1051, %v1042
        %v1367 = vpack.c.b16 %v1052, %v1043
        %v1368 = vpack.c.b16 %v1053, %v1044
        %v1369 = vpack.c.b16 %v1054, %v1045
        %v1370 = vpack.c.b16 %v1055, %v1046
        %v1371 = vpack.c.b16 %v1056, %v1047
        %v1372 = vpack.c.b16 %v1057, %v1048
        %v1373 = vpack.c.b16 %v1067, %v1058
        %v1374 = vpack.c.b16 %v1068, %v1059
        %v1375 = vpack.c.b16 %v1069, %v1060
        %v1376 = vpack.c.b16 %v1070, %v1061
        %v1377 = vpack.c.b16 %v1071, %v1062
        %v1378 = vpack.c.b16 %v1072, %v1063
        %v1379 = vpack.c.b16 %v1073, %v1064
        %v1380 = vpack.c.b16 %v1074, %v1065
        %v1381 = vpack.c.b16 %v1075, %v1066
        %v1382 = vpack.c.b16 %v1085, %v1076
        %v1383 = vpack.c.b16 %v1086, %v1077
        %v1384 = vpack.c.b16 %v1087, %v1078
        %v1385 = vpack.c.b16 %v1088, %v1079
        %v1386 = vpack.c.b16 %v1089, %v1080
        %v1387 = vpack.c.b16 %v1090, %v1081
        %v1388 = vpack.c.b16 %v1091, %v1082
        %v1389 = vpack.c.b16 %v1092, %v1083
        %v1390 = vpack.c.b16 %v1093, %v1084
        %v1391 = vpack.c.b16 %v1103, %v1094
        %v1392 = vpack.c.b16 %v1104, %v1095
        %v1393 = vpack.c.b16 %v1105, %v1096
        %v1394 = vpack.c.b16 %v1106, %v1097
        %v1395 = vpack.c.b16 %v1107, %v1098
        %v1396 = vpack.c.b16 %v1108, %v1099
        %v1397 = vpack.c.b16 %v1109, %v1100
        %v1398 = vpack.c.b16 %v1110, %v1101
        %v1399 = vpack.c.b16 %v1111, %v1102
        %v1400 = vpack.c.b16 %v1121, %v1112
        %v1401 = vpack.c.b16 %v1122, %v1113
        %v1402 = vpack.c.b16 %v1123, %v1114
        %v1403 = vpack.c.b16 %v1124, %v1115
        %v1404 = vpack.c.b16 %v1125, %v1116
        %v1405 = vpack.c.b16 %v1126, %v1117
        %v1406 = vpack.c.b16 %v1127, %v1118
        %v1407 = vpack.c.b16 %v1128, %v1119
        %v1408 = vpack.c.b16 %v1129, %v1120
        %v1409 = vpack.c.b16 %v1139, %v1130
        %v1410 = vpack.c.b16 %v1140, %v1131
        %v1411 = vpack.c.b16 %v1141, %v1132
        %v1412 = vpack.c.b16 %v1142, %v1133
        %v1413 = vpack.c.b16 %v1143, %v1134
        %v1414 = vpack.c.b16 %v1144, %v1135
        %v1415 = vpack.c.b16 %v1145, %v1136
        %v1416 = vpack.c.b16 %v1146, %v1137
        %v1417 = vpack.c.b16 %v1147, %v1138
        %v1418 = vpack.c.b16 %v1157, %v1148
        %v1419 = vpack.c.b16 %v1158, %v1149
        %v1420 = vpack.c.b16 %v1159, %v1150
        %v1421 = vpack.c.b16 %v1160, %v1151
        %v1422 = vpack.c.b16 %v1161, %v1152
        %v1423 = vpack.c.b16 %v1162, %v1153
        %v1424 = vpack.c.b16 %v1163, %v1154
        %v1425 = vpack.c.b16 %v1164, %v1155
        %v1426 = vpack.c.b16 %v1165, %v1156
        %v1427 = vpack.c.b16 %v1175, %v1166
        %v1428 = vpack.c.b16 %v1176, %v1167
        %v1429 = vpack.c.b16 %v1177, %v1168
        %v1430 = vpack.c.b16 %v1178, %v1169
        %v1431 = vpack.c.b16 %v1179, %v1170
        %v1432 = vpack.c.b16 %v1180, %v1171
        %v1433 = vpack.c.b16 %v1181, %v1172
        %v1434 = vpack.c.b16 %v1182, %v1173
        %v1435 = vpack.c.b16 %v1183, %v1174
        %v1436 = vpack.c.b16 %v1193, %v1184
        %v1437 = vpack.c.b16 %v1194, %v1185
        %v1438 = vpack.c.b16 %v1195, %v1186
        %v1439 = vpack.c.b16 %v1196, %v1187
        %v1440 = vpack.c.b16 %v1197, %v1188
        %v1441 = vpack.c.b16 %v1198, %v1189
        %v1442 = vpack.c.b16 %v1199, %v1190
        %v1443 = vpack.c.b16 %v1200, %v1191
        %v1444 = vpack.c.b16 %v1201, %v1192
        %v1445 = vpack.c.b16 %v1211, %v1202
        %v1446 = vpack.c.b16 %v1212, %v1203
        %v1447 = vpack.c.b16 %v1213, %v1204
        %v1448 = vpack.c.b16 %v1214, %v1205
        %v1449 = vpack.c.b16 %v1215, %v1206
        %v1450 = vpack.c.b16 %v1216, %v1207
        %v1451 = vpack.c.b16 %v1217, %v1208
        %v1452 = vpack.c.b16 %v1218, %v1209
        %v1453 = vpack.c.b16 %v1219, %v1210
        %v1454 = vpack.c.b16 %v1229, %v1220
        %v1455 = vpack.c.b16 %v1230, %v1221
        %v1456 = vpack.c.b16 %v1231, %v1222
        %v1457 = vpack.c.b16 %v1232, %v1223
        %v1458 = vpack.c.b16 %v1233, %v1224
        %v1459 = vpack.c.b16 %v1234, %v1225
        %v1460 = vpack.c.b16 %v1235, %v1226
        %v1461 = vpack.c.b16 %v1236, %v1227
        %v1462 = vpack.c.b16 %v1237, %v1228
        %v1463 = vpack.c.b16 %v1247, %v1238
        %v1464 = vpack.c.b16 %v1248, %v1239
        %v1465 = vpack.c.b16 %v1249, %v1240
        %v1466 = vpack.c.b16 %v1250, %v1241
        %v1467 = vpack.c.b16 %v1251, %v1242
        %v1468 = vpack.c.b16 %v1252, %v1243
        %v1469 = vpack.c.b16 %v1253, %v1244
        %v1470 = vpack.c.b16 %v1254, %v1245
        %v1471 = vpack.c.b16 %v1255, %v1246
        %1688 = vmatprep.subr.bf16.mxu0 %v1320
        %1689 = vmatpush1.bf16.msra.mxu0 %v1319
        %1690 = vmatprep.subr.bf16.mxu0 %v1311
        %1691 = vmatpush1.bf16.msra.mxu0 %v1310
        %1692 = vmatprep.subr.bf16.mxu0 %v1302
        %1693 = vmatpush1.bf16.msra.mxu0 %v1301
        %1694 = vmatprep.subr.bf16.mxu0 %v1293
        %1695 = vmatpush1.bf16.msra.mxu0 %v1292
        %1696 = vmatprep.subr.bf16.mxu0 %v1284
        %1697 = vmatpush1.bf16.msra.mxu0 %v1283
        %1698 = vmatprep.subr.bf16.mxu0 %v1275
        %1699 = vmatpush1.bf16.msra.mxu0 %v1274
        %1700 = vmatprep.subr.bf16.mxu0 %v1266
        %1701 = vmatpush1.bf16.msra.mxu0 %v1265
        %1702 = vmatprep.subr.bf16.mxu0 %v1257
        %1703 = vmatpush1.bf16.msra.mxu0 %v1256
        %1704 = vmatprep.subr.bf16.mxu0 %v1392
        %1705 = vmatpush2.bf16.msra.mxu0 %v1391
        %1706 = vmatprep.subr.bf16.mxu0 %v1383
        %1707 = vmatpush2.bf16.msra.mxu0 %v1382
        %1708 = vmatprep.subr.bf16.mxu0 %v1374
        %1709 = vmatpush2.bf16.msra.mxu0 %v1373
        %1710 = vmatprep.subr.bf16.mxu0 %v1365
        %1711 = vmatpush2.bf16.msra.mxu0 %v1364
        %1712 = vmatprep.subr.bf16.mxu0 %v1356
        %1713 = vmatpush2.bf16.msra.mxu0 %v1355
        %1714 = vmatprep.subr.bf16.mxu0 %v1347
        %1715 = vmatpush2.bf16.msra.mxu0 %v1346
        %1716 = vmatprep.subr.bf16.mxu0 %v1338
        %1717 = vmatpush2.bf16.msra.mxu0 %v1337
        %1718 = vmatprep.subr.bf16.mxu0 %v1329
        %1719 = vmatpush2.bf16.msra.mxu0 %v1328
        %1720 = vmatprep.mubr.bf16.mxu0 %v293
        %1721 = vmatmul.mubr.bf16.gmra.mxu0 %v292
        %v1722 = vpop.f32.mrf.mxu0
        %v1723 = vadd.f32 %v542, %v1722
        %v1724 = vpop.f32.mrf.mxu0
        %v1725 = vadd.f32 %v546, %v1724
        %v1726 = vpop.f32.mrf.mxu0
        %v1727 = vpop.f32.mrf.mxu0
        %1728 = vdwg.mxu0
        %1729 = vmatprep.subr.bf16.mxu0 %v1464
        %1730 = vmatpush1.bf16.msra.mxu0 %v1463
        %1731 = vmatprep.subr.bf16.mxu0 %v1455
        %1732 = vmatpush1.bf16.msra.mxu0 %v1454
        %1733 = vmatprep.subr.bf16.mxu0 %v1446
        %1734 = vmatpush1.bf16.msra.mxu0 %v1445
        %1735 = vmatprep.subr.bf16.mxu0 %v1437
        %1736 = vmatpush1.bf16.msra.mxu0 %v1436
        %1737 = vmatprep.subr.bf16.mxu0 %v1428
        %1738 = vmatpush1.bf16.msra.mxu0 %v1427
        %1739 = vmatprep.subr.bf16.mxu0 %v1419
        %1740 = vmatpush1.bf16.msra.mxu0 %v1418
        %1741 = vmatprep.subr.bf16.mxu0 %v1410
        %1742 = vmatpush1.bf16.msra.mxu0 %v1409
        %1743 = vmatprep.subr.bf16.mxu0 %v1401
        %1744 = vmatpush1.bf16.msra.mxu0 %v1400
        %1745 = vmatprep.subr.bf16.mxu0 0
        %1746 = vmatpush2.bf16.msra.mxu0 0
        %1747 = vmatprep.subr.bf16.mxu0 0
        %1748 = vmatpush2.bf16.msra.mxu0 0
        %1749 = vmatprep.subr.bf16.mxu0 0
        %1750 = vmatpush2.bf16.msra.mxu0 0
        %1751 = vmatprep.subr.bf16.mxu0 0
        %1752 = vmatpush2.bf16.msra.mxu0 0
        %1753 = vmatprep.subr.bf16.mxu0 0
        %1754 = vmatpush2.bf16.msra.mxu0 0
        %1755 = vmatprep.subr.bf16.mxu0 0
        %1756 = vmatpush2.bf16.msra.mxu0 0
        %1757 = vmatprep.subr.bf16.mxu0 0
        %1758 = vmatpush2.bf16.msra.mxu0 0
        %1759 = vmatprep.subr.bf16.mxu0 0
        %1760 = vmatpush2.bf16.msra.mxu0 0
        %1761 = vmatprep.mubr.bf16.mxu0 0
        %1762 = vmatmul.mubr.bf16.gmra.mxu0 %v294
        %v1763 = vpop.f32.mrf.mxu0
        %v1764 = vadd.f32 %v1723, %v1763
        %v1765 = vpop.f32.mrf.mxu0
        %v1766 = vadd.f32 %v1725, %v1765
        %v1767 = vpop.f32.mrf.mxu0
        %v1768 = vpop.f32.mrf.mxu0
        %1769 = vdwg.mxu0
        %1770 = vmatprep.subr.bf16.mxu0 %v1322
        %1771 = vmatpush1.bf16.msra.mxu0 %v1321
        %1772 = vmatprep.subr.bf16.mxu0 %v1313
        %1773 = vmatpush1.bf16.msra.mxu0 %v1312
        %1774 = vmatprep.subr.bf16.mxu0 %v1304
        %1775 = vmatpush1.bf16.msra.mxu0 %v1303
        %1776 = vmatprep.subr.bf16.mxu0 %v1295
        %1777 = vmatpush1.bf16.msra.mxu0 %v1294
        %1778 = vmatprep.subr.bf16.mxu0 %v1286
        %1779 = vmatpush1.bf16.msra.mxu0 %v1285
        %1780 = vmatprep.subr.bf16.mxu0 %v1277
        %1781 = vmatpush1.bf16.msra.mxu0 %v1276
        %1782 = vmatprep.subr.bf16.mxu0 %v1268
        %1783 = vmatpush1.bf16.msra.mxu0 %v1267
        %1784 = vmatprep.subr.bf16.mxu0 %v1259
        %1785 = vmatpush1.bf16.msra.mxu0 %v1258
        %1786 = vmatprep.subr.bf16.mxu0 %v1394
        %1787 = vmatpush2.bf16.msra.mxu0 %v1393
        %1788 = vmatprep.subr.bf16.mxu0 %v1385
        %1789 = vmatpush2.bf16.msra.mxu0 %v1384
        %1790 = vmatprep.subr.bf16.mxu0 %v1376
        %1791 = vmatpush2.bf16.msra.mxu0 %v1375
        %1792 = vmatprep.subr.bf16.mxu0 %v1367
        %1793 = vmatpush2.bf16.msra.mxu0 %v1366
        %1794 = vmatprep.subr.bf16.mxu0 %v1358
        %1795 = vmatpush2.bf16.msra.mxu0 %v1357
        %1796 = vmatprep.subr.bf16.mxu0 %v1349
        %1797 = vmatpush2.bf16.msra.mxu0 %v1348
        %1798 = vmatprep.subr.bf16.mxu0 %v1340
        %1799 = vmatpush2.bf16.msra.mxu0 %v1339
        %1800 = vmatprep.subr.bf16.mxu0 %v1331
        %1801 = vmatpush2.bf16.msra.mxu0 %v1330
        %1802 = vmatprep.mubr.bf16.mxu0 %v293
        %1803 = vmatmul.mubr.bf16.gmra.mxu0 %v292
        %v1804 = vpop.f32.mrf.mxu0
        %v1805 = vadd.f32 %v550, %v1804
        %v1806 = vpop.f32.mrf.mxu0
        %v1807 = vadd.f32 %v554, %v1806
        %v1808 = vpop.f32.mrf.mxu0
        %v1809 = vpop.f32.mrf.mxu0
        %1810 = vdwg.mxu0
        %1811 = vmatprep.subr.bf16.mxu0 %v1466
        %1812 = vmatpush1.bf16.msra.mxu0 %v1465
        %1813 = vmatprep.subr.bf16.mxu0 %v1457
        %1814 = vmatpush1.bf16.msra.mxu0 %v1456
        %1815 = vmatprep.subr.bf16.mxu0 %v1448
        %1816 = vmatpush1.bf16.msra.mxu0 %v1447
        %1817 = vmatprep.subr.bf16.mxu0 %v1439
        %1818 = vmatpush1.bf16.msra.mxu0 %v1438
        %1819 = vmatprep.subr.bf16.mxu0 %v1430
        %1820 = vmatpush1.bf16.msra.mxu0 %v1429
        %1821 = vmatprep.subr.bf16.mxu0 %v1421
        %1822 = vmatpush1.bf16.msra.mxu0 %v1420
        %1823 = vmatprep.subr.bf16.mxu0 %v1412
        %1824 = vmatpush1.bf16.msra.mxu0 %v1411
        %1825 = vmatprep.subr.bf16.mxu0 %v1403
        %1826 = vmatpush1.bf16.msra.mxu0 %v1402
        %1827 = vmatprep.subr.bf16.mxu0 0
        %1828 = vmatpush2.bf16.msra.mxu0 0
        %1829 = vmatprep.subr.bf16.mxu0 0
        %1830 = vmatpush2.bf16.msra.mxu0 0
        %1831 = vmatprep.subr.bf16.mxu0 0
        %1832 = vmatpush2.bf16.msra.mxu0 0
        %1833 = vmatprep.subr.bf16.mxu0 0
        %1834 = vmatpush2.bf16.msra.mxu0 0
        %1835 = vmatprep.subr.bf16.mxu0 0
        %1836 = vmatpush2.bf16.msra.mxu0 0
        %1837 = vmatprep.subr.bf16.mxu0 0
        %1838 = vmatpush2.bf16.msra.mxu0 0
        %1839 = vmatprep.subr.bf16.mxu0 0
        %1840 = vmatpush2.bf16.msra.mxu0 0
        %1841 = vmatprep.subr.bf16.mxu0 0
        %1842 = vmatpush2.bf16.msra.mxu0 0
        %1843 = vmatprep.mubr.bf16.mxu0 0
        %1844 = vmatmul.mubr.bf16.gmra.mxu0 %v294
        %v1845 = vpop.f32.mrf.mxu0
        %v1846 = vadd.f32 %v1805, %v1845
        %v1847 = vpop.f32.mrf.mxu0
        %v1848 = vadd.f32 %v1807, %v1847
        %v1849 = vpop.f32.mrf.mxu0
        %v1850 = vpop.f32.mrf.mxu0
        %1851 = vdwg.mxu0
        %1852 = vmatprep.subr.bf16.mxu0 %v1324
        %1853 = vmatpush1.bf16.msra.mxu0 %v1323
        %1854 = vmatprep.subr.bf16.mxu0 %v1315
        %1855 = vmatpush1.bf16.msra.mxu0 %v1314
        %1856 = vmatprep.subr.bf16.mxu0 %v1306
        %1857 = vmatpush1.bf16.msra.mxu0 %v1305
        %1858 = vmatprep.subr.bf16.mxu0 %v1297
        %1859 = vmatpush1.bf16.msra.mxu0 %v1296
        %1860 = vmatprep.subr.bf16.mxu0 %v1288
        %1861 = vmatpush1.bf16.msra.mxu0 %v1287
        %1862 = vmatprep.subr.bf16.mxu0 %v1279
        %1863 = vmatpush1.bf16.msra.mxu0 %v1278
        %1864 = vmatprep.subr.bf16.mxu0 %v1270
        %1865 = vmatpush1.bf16.msra.mxu0 %v1269
        %1866 = vmatprep.subr.bf16.mxu0 %v1261
        %1867 = vmatpush1.bf16.msra.mxu0 %v1260
        %1868 = vmatprep.subr.bf16.mxu0 %v1396
        %1869 = vmatpush2.bf16.msra.mxu0 %v1395
        %1870 = vmatprep.subr.bf16.mxu0 %v1387
        %1871 = vmatpush2.bf16.msra.mxu0 %v1386
        %1872 = vmatprep.subr.bf16.mxu0 %v1378
        %1873 = vmatpush2.bf16.msra.mxu0 %v1377
        %1874 = vmatprep.subr.bf16.mxu0 %v1369
        %1875 = vmatpush2.bf16.msra.mxu0 %v1368
        %1876 = vmatprep.subr.bf16.mxu0 %v1360
        %1877 = vmatpush2.bf16.msra.mxu0 %v1359
        %1878 = vmatprep.subr.bf16.mxu0 %v1351
        %1879 = vmatpush2.bf16.msra.mxu0 %v1350
        %1880 = vmatprep.subr.bf16.mxu0 %v1342
        %1881 = vmatpush2.bf16.msra.mxu0 %v1341
        %1882 = vmatprep.subr.bf16.mxu0 %v1333
        %1883 = vmatpush2.bf16.msra.mxu0 %v1332
        %1884 = vmatprep.mubr.bf16.mxu0 %v293
        %1885 = vmatmul.mubr.bf16.gmra.mxu0 %v292
        %v1886 = vpop.f32.mrf.mxu0
        %v1887 = vadd.f32 %v558, %v1886
        %v1888 = vpop.f32.mrf.mxu0
        %v1889 = vadd.f32 %v562, %v1888
        %v1890 = vpop.f32.mrf.mxu0
        %v1891 = vpop.f32.mrf.mxu0
        %1892 = vdwg.mxu0
        %1893 = vmatprep.subr.bf16.mxu0 %v1468
        %1894 = vmatpush1.bf16.msra.mxu0 %v1467
        %1895 = vmatprep.subr.bf16.mxu0 %v1459
        %1896 = vmatpush1.bf16.msra.mxu0 %v1458
        %1897 = vmatprep.subr.bf16.mxu0 %v1450
        %1898 = vmatpush1.bf16.msra.mxu0 %v1449
        %1899 = vmatprep.subr.bf16.mxu0 %v1441
        %1900 = vmatpush1.bf16.msra.mxu0 %v1440
        %1901 = vmatprep.subr.bf16.mxu0 %v1432
        %1902 = vmatpush1.bf16.msra.mxu0 %v1431
        %1903 = vmatprep.subr.bf16.mxu0 %v1423
        %1904 = vmatpush1.bf16.msra.mxu0 %v1422
        %1905 = vmatprep.subr.bf16.mxu0 %v1414
        %1906 = vmatpush1.bf16.msra.mxu0 %v1413
        %1907 = vmatprep.subr.bf16.mxu0 %v1405
        %1908 = vmatpush1.bf16.msra.mxu0 %v1404
        %1909 = vmatprep.subr.bf16.mxu0 0
        %1910 = vmatpush2.bf16.msra.mxu0 0
        %1911 = vmatprep.subr.bf16.mxu0 0
        %1912 = vmatpush2.bf16.msra.mxu0 0
        %1913 = vmatprep.subr.bf16.mxu0 0
        %1914 = vmatpush2.bf16.msra.mxu0 0
        %1915 = vmatprep.subr.bf16.mxu0 0
        %1916 = vmatpush2.bf16.msra.mxu0 0
        %1917 = vmatprep.subr.bf16.mxu0 0
        %1918 = vmatpush2.bf16.msra.mxu0 0
        %1919 = vmatprep.subr.bf16.mxu0 0
        %1920 = vmatpush2.bf16.msra.mxu0 0
        %1921 = vmatprep.subr.bf16.mxu0 0
        %1922 = vmatpush2.bf16.msra.mxu0 0
        %1923 = vmatprep.subr.bf16.mxu0 0
        %1924 = vmatpush2.bf16.msra.mxu0 0
        %1925 = vmatprep.mubr.bf16.mxu0 0
        %1926 = vmatmul.mubr.bf16.gmra.mxu0 %v294
        %v1927 = vpop.f32.mrf.mxu0
        %v1928 = vadd.f32 %v1887, %v1927
        %v1929 = vpop.f32.mrf.mxu0
        %v1930 = vadd.f32 %v1889, %v1929
        %v1931 = vpop.f32.mrf.mxu0
        %v1932 = vpop.f32.mrf.mxu0
        %1933 = vdwg.mxu0
        %1934 = vmatprep.subr.bf16.mxu0 %v1326
        %1935 = vmatpush1.bf16.msra.mxu0 %v1325
        %1936 = vmatprep.subr.bf16.mxu0 %v1317
        %1937 = vmatpush1.bf16.msra.mxu0 %v1316
        %1938 = vmatprep.subr.bf16.mxu0 %v1308
        %1939 = vmatpush1.bf16.msra.mxu0 %v1307
        %1940 = vmatprep.subr.bf16.mxu0 %v1299
        %1941 = vmatpush1.bf16.msra.mxu0 %v1298
        %1942 = vmatprep.subr.bf16.mxu0 %v1290
        %1943 = vmatpush1.bf16.msra.mxu0 %v1289
        %1944 = vmatprep.subr.bf16.mxu0 %v1281
        %1945 = vmatpush1.bf16.msra.mxu0 %v1280
        %1946 = vmatprep.subr.bf16.mxu0 %v1272
        %1947 = vmatpush1.bf16.msra.mxu0 %v1271
        %1948 = vmatprep.subr.bf16.mxu0 %v1263
        %1949 = vmatpush1.bf16.msra.mxu0 %v1262
        %1950 = vmatprep.subr.bf16.mxu0 %v1398
        %1951 = vmatpush2.bf16.msra.mxu0 %v1397
        %1952 = vmatprep.subr.bf16.mxu0 %v1389
        %1953 = vmatpush2.bf16.msra.mxu0 %v1388
        %1954 = vmatprep.subr.bf16.mxu0 %v1380
        %1955 = vmatpush2.bf16.msra.mxu0 %v1379
        %1956 = vmatprep.subr.bf16.mxu0 %v1371
        %1957 = vmatpush2.bf16.msra.mxu0 %v1370
        %1958 = vmatprep.subr.bf16.mxu0 %v1362
        %1959 = vmatpush2.bf16.msra.mxu0 %v1361
        %1960 = vmatprep.subr.bf16.mxu0 %v1353
        %1961 = vmatpush2.bf16.msra.mxu0 %v1352
        %1962 = vmatprep.subr.bf16.mxu0 %v1344
        %1963 = vmatpush2.bf16.msra.mxu0 %v1343
        %1964 = vmatprep.subr.bf16.mxu0 %v1335
        %1965 = vmatpush2.bf16.msra.mxu0 %v1334
        %1966 = vmatprep.mubr.bf16.mxu0 %v293
        %1967 = vmatmul.mubr.bf16.gmra.mxu0 %v292
        %v1968 = vpop.f32.mrf.mxu0
        %v1969 = vadd.f32 %v566, %v1968
        %v1970 = vpop.f32.mrf.mxu0
        %v1971 = vadd.f32 %v570, %v1970
        %v1972 = vpop.f32.mrf.mxu0
        %v1973 = vpop.f32.mrf.mxu0
        %1974 = vdwg.mxu0
        %1975 = vmatprep.subr.bf16.mxu0 %v1470
        %1976 = vmatpush1.bf16.msra.mxu0 %v1469
        %1977 = vmatprep.subr.bf16.mxu0 %v1461
        %1978 = vmatpush1.bf16.msra.mxu0 %v1460
        %1979 = vmatprep.subr.bf16.mxu0 %v1452
        %1980 = vmatpush1.bf16.msra.mxu0 %v1451
        %1981 = vmatprep.subr.bf16.mxu0 %v1443
        %1982 = vmatpush1.bf16.msra.mxu0 %v1442
        %1983 = vmatprep.subr.bf16.mxu0 %v1434
        %1984 = vmatpush1.bf16.msra.mxu0 %v1433
        %1985 = vmatprep.subr.bf16.mxu0 %v1425
        %1986 = vmatpush1.bf16.msra.mxu0 %v1424
        %1987 = vmatprep.subr.bf16.mxu0 %v1416
        %1988 = vmatpush1.bf16.msra.mxu0 %v1415
        %1989 = vmatprep.subr.bf16.mxu0 %v1407
        %1990 = vmatpush1.bf16.msra.mxu0 %v1406
        %1991 = vmatprep.subr.bf16.mxu0 0
        %1992 = vmatpush2.bf16.msra.mxu0 0
        %1993 = vmatprep.subr.bf16.mxu0 0
        %1994 = vmatpush2.bf16.msra.mxu0 0
        %1995 = vmatprep.subr.bf16.mxu0 0
        %1996 = vmatpush2.bf16.msra.mxu0 0
        %1997 = vmatprep.subr.bf16.mxu0 0
        %1998 = vmatpush2.bf16.msra.mxu0 0
        %1999 = vmatprep.subr.bf16.mxu0 0
        %2000 = vmatpush2.bf16.msra.mxu0 0
        %2001 = vmatprep.subr.bf16.mxu0 0
        %2002 = vmatpush2.bf16.msra.mxu0 0
        %2003 = vmatprep.subr.bf16.mxu0 0
        %2004 = vmatpush2.bf16.msra.mxu0 0
        %2005 = vmatprep.subr.bf16.mxu0 0
        %2006 = vmatpush2.bf16.msra.mxu0 0
        %2007 = vmatprep.mubr.bf16.mxu0 0
        %2008 = vmatmul.mubr.bf16.gmra.mxu0 %v294
        %v2009 = vpop.f32.mrf.mxu0
        %v2010 = vadd.f32 %v1969, %v2009
        %v2011 = vpop.f32.mrf.mxu0
        %v2012 = vadd.f32 %v1971, %v2011
        %v2013 = vpop.f32.mrf.mxu0
        %v2014 = vpop.f32.mrf.mxu0
        %2015 = vdwg.mxu0
        %2016 = vmatprep.subr.bf16.mxu0 0
        %2017 = vmatpush1.bf16.msra.mxu0 %v1327
        %2018 = vmatprep.subr.bf16.mxu0 0
        %2019 = vmatpush1.bf16.msra.mxu0 %v1318
        %2020 = vmatprep.subr.bf16.mxu0 0
        %2021 = vmatpush1.bf16.msra.mxu0 %v1309
        %2022 = vmatprep.subr.bf16.mxu0 0
        %2023 = vmatpush1.bf16.msra.mxu0 %v1300
        %2024 = vmatprep.subr.bf16.mxu0 0
        %2025 = vmatpush1.bf16.msra.mxu0 %v1291
        %2026 = vmatprep.subr.bf16.mxu0 0
        %2027 = vmatpush1.bf16.msra.mxu0 %v1282
        %2028 = vmatprep.subr.bf16.mxu0 0
        %2029 = vmatpush1.bf16.msra.mxu0 %v1273
        %2030 = vmatprep.subr.bf16.mxu0 0
        %2031 = vmatpush1.bf16.msra.mxu0 %v1264
        %2032 = vmatprep.subr.bf16.mxu0 0
        %2033 = vmatpush2.bf16.msra.mxu0 %v1399
        %2034 = vmatprep.subr.bf16.mxu0 0
        %2035 = vmatpush2.bf16.msra.mxu0 %v1390
        %2036 = vmatprep.subr.bf16.mxu0 0
        %2037 = vmatpush2.bf16.msra.mxu0 %v1381
        %2038 = vmatprep.subr.bf16.mxu0 0
        %2039 = vmatpush2.bf16.msra.mxu0 %v1372
        %2040 = vmatprep.subr.bf16.mxu0 0
        %2041 = vmatpush2.bf16.msra.mxu0 %v1363
        %2042 = vmatprep.subr.bf16.mxu0 0
        %2043 = vmatpush2.bf16.msra.mxu0 %v1354
        %2044 = vmatprep.subr.bf16.mxu0 0
        %2045 = vmatpush2.bf16.msra.mxu0 %v1345
        %2046 = vmatprep.subr.bf16.mxu0 0
        %2047 = vmatpush2.bf16.msra.mxu0 %v1336
        %2048 = vmatprep.mubr.bf16.mxu0 %v293
        %2049 = vmatmul.mubr.bf16.gmra.mxu0 %v292
        %v2050 = vpop.f32.mrf.mxu0
        %v2051 = vadd.f32 %v574, %v2050
        %v2052 = vpop.f32.mrf.mxu0
        %v2053 = vpop.f32.mrf.mxu0
        %v2054 = vpop.f32.mrf.mxu0
        %2055 = vdwg.mxu0
        %2056 = vmatprep.subr.bf16.mxu0 0
        %2057 = vmatpush1.bf16.msra.mxu0 %v1471
        %2058 = vmatprep.subr.bf16.mxu0 0
        %2059 = vmatpush1.bf16.msra.mxu0 %v1462
        %2060 = vmatprep.subr.bf16.mxu0 0
        %2061 = vmatpush1.bf16.msra.mxu0 %v1453
        %2062 = vmatprep.subr.bf16.mxu0 0
        %2063 = vmatpush1.bf16.msra.mxu0 %v1444
        %2064 = vmatprep.subr.bf16.mxu0 0
        %2065 = vmatpush1.bf16.msra.mxu0 %v1435
        %2066 = vmatprep.subr.bf16.mxu0 0
        %2067 = vmatpush1.bf16.msra.mxu0 %v1426
        %2068 = vmatprep.subr.bf16.mxu0 0
        %2069 = vmatpush1.bf16.msra.mxu0 %v1417
        %2070 = vmatprep.subr.bf16.mxu0 0
        %2071 = vmatpush1.bf16.msra.mxu0 %v1408
        %2072 = vmatprep.subr.bf16.mxu0 0
        %2073 = vmatpush2.bf16.msra.mxu0 0
        %2074 = vmatprep.subr.bf16.mxu0 0
        %2075 = vmatpush2.bf16.msra.mxu0 0
        %2076 = vmatprep.subr.bf16.mxu0 0
        %2077 = vmatpush2.bf16.msra.mxu0 0
        %2078 = vmatprep.subr.bf16.mxu0 0
        %2079 = vmatpush2.bf16.msra.mxu0 0
        %2080 = vmatprep.subr.bf16.mxu0 0
        %2081 = vmatpush2.bf16.msra.mxu0 0
        %2082 = vmatprep.subr.bf16.mxu0 0
        %2083 = vmatpush2.bf16.msra.mxu0 0
        %2084 = vmatprep.subr.bf16.mxu0 0
        %2085 = vmatpush2.bf16.msra.mxu0 0
        %2086 = vmatprep.subr.bf16.mxu0 0
        %2087 = vmatpush2.bf16.msra.mxu0 0
        %2088 = vmatprep.mubr.bf16.mxu0 0
        %2089 = vmatmul.mubr.bf16.gmra.mxu0 %v294
        %v2090 = vpop.f32.mrf.mxu0
        %v2091 = vadd.f32 %v2051, %v2090
        %v2092 = vpop.f32.mrf.mxu0
        %v2093 = vpop.f32.mrf.mxu0
        %v2094 = vpop.f32.mrf.mxu0
        %2095 = vdwg.mxu0
        %v2096 = vpack.c.bf16 %v1764, %v1764
        %v2097 = vpack.c.bf16 %v1766, %v1766
        %v2098 = vpack.c.bf16 %v1846, %v1846
        %v2099 = vpack.c.bf16 %v1848, %v1848
        %v2100 = vpack.c.bf16 %v1928, %v1928
        %v2101 = vpack.c.bf16 %v1930, %v1930
        %v2102 = vpack.c.bf16 %v2010, %v2010
        %v2103 = vpack.c.bf16 %v2012, %v2012
        %v2104 = vpack.c.bf16 %v2091, %v2091
        %v2114 = vunpack.c.l.b16 %v2096
        %v2115 = vunpack.c.l.b16 %v2097
        %v2116 = vunpack.c.l.b16 %v2098
        %v2117 = vunpack.c.l.b16 %v2099
        %v2118 = vunpack.c.l.b16 %v2100
        %v2119 = vunpack.c.l.b16 %v2101
        %v2120 = vunpack.c.l.b16 %v2102
        %v2121 = vunpack.c.l.b16 %v2103
        %v2122 = vunpack.c.l.b16 %v2104
        %v2123 = vpack.c.b16 %v2115, %v2114
        %v2124 = vpack.c.b16 %v2117, %v2116
        %v2125 = vpack.c.b16 %v2119, %v2118
        %v2126 = vpack.c.b16 %v2121, %v2120
        %v2127 = vpack.c.b16 %v2122, %v2122
        %2133 = vst [vmem:[#allocation2] sm:$0xff] %v2123
        %2134 = vst [vmem:[#allocation2 + $0x8] sm:$0xff] %v2124
        %2135 = vst [vmem:[#allocation2 + $0x10] sm:$0xff] %v2125
        %2136 = vst [vmem:[#allocation2 + $0x18] sm:$0xff] %v2126
        %2137 = vst [vmem:[#allocation2 + $0x20] sm:$0xf] %v2127
        %s2138 = smul.u32 0, 9
        %s2139 = smul.addr %s2138, 4
        %s2140 = scalar_lea.vmem [#allocation2], %s2139
        %v2141 = vld [vmem:[%s2140] sm:$0xf]
        %v2142 = vld [vmem:[%s2140 + $0xc] sm:$0xf]
        %v2143 = vld [vmem:[%s2140 + $0x18] sm:$0xf]
        %vm2144 = vcmask 523264
        %v2146 = vsel %vm2144, %v2141, 0
        %v2149 = vsel %vm2144, %v2142, 0
        %2151 = vmatprep.subr.bf16.mxu0 0
        %2152 = vmatpush1.bf16.xpose.msra.mxu0 0
        %2153 = vmatprep.subr.bf16.mxu0 0
        %2154 = vmatpush1.bf16.xpose.msra.mxu0 0
        %2155 = vmatprep.subr.bf16.mxu0 0
        %2156 = vmatpush1.bf16.xpose.msra.mxu0 0
        %2157 = vmatprep.subr.bf16.mxu0 0
        %2158 = vmatpush1.bf16.xpose.msra.mxu0 0
        %2159 = vmatprep.subr.bf16.mxu0 0
        %2160 = vmatpush1.bf16.xpose.msra.mxu0 0
        %2161 = vmatprep.subr.bf16.mxu0 0
        %2162 = vmatpush1.bf16.xpose.msra.mxu0 0
        %2163 = vmatprep.subr.bf16.mxu0 0
        %2164 = vmatpush1.bf16.xpose.msra.mxu0 0
        %2165 = vmatprep.subr.bf16.mxu0 0
        %2166 = vmatpush1.bf16.xpose.msra.mxu0 %v2149
        %2167 = vmatprep.subr.bf16.mxu0 0
        %2168 = vmatpush2.bf16.xpose.msra.mxu0 0
        %2169 = vmatprep.subr.bf16.mxu0 0
        %2170 = vmatpush2.bf16.xpose.msra.mxu0 0
        %2171 = vmatprep.subr.bf16.mxu0 0
        %2172 = vmatpush2.bf16.xpose.msra.mxu0 0
        %2173 = vmatprep.subr.bf16.mxu0 0
        %2174 = vmatpush2.bf16.xpose.msra.mxu0 0
        %2175 = vmatprep.subr.bf16.mxu0 0
        %2176 = vmatpush2.bf16.xpose.msra.mxu0 0
        %2177 = vmatprep.subr.bf16.mxu0 0
        %2178 = vmatpush2.bf16.xpose.msra.mxu0 0
        %2179 = vmatprep.subr.bf16.mxu0 0
        %2180 = vmatpush2.bf16.xpose.msra.mxu0 0
        %2181 = vmatprep.subr.bf16.mxu0 0
        %2182 = vmatpush2.bf16.xpose.msra.mxu0 0
        %2183 = vmatprep.mubr.bf16.mxu0 0
        %2184 = vmatmul.mubr.bf16.gmra.mxu0 %v2146
        %v2185 = vpop.f32.mrf.mxu0
        %v2186 = vadd.f32 0.0, %v2185
        %v2187 = vpop.f32.mrf.mxu0
        %v2188 = vpop.f32.mrf.mxu0
        %v2189 = vpop.f32.mrf.mxu0
        %2190 = vdwg.mxu0
        %v2191 = vsel %vm288, %v2186, -1e+30
        %vm2192 = vcmask 64512
        %v2193 = vsel %vm2192, %v2191, -inf
        %2194 = vmax.xlane.f32.xlu0 %v2193
        %v2195 = vpop.xlane.xlu0 %2194
        %v2196 = vsub.f32 %v2191, %v2195
        %v2197 = vmul.f32 %v2196, 1.442695
        %v2198 = vpow.pop %v2197
        %v2199 = vsel %vm2192, %v2198, 0.0
        %2200 = vadd.xlane.f32.xlu0 %v2199
        %v2201 = vpop.xlane.xlu0 %2200
        %v2202 = vrcp.pop %v2201
        %v2203 = vmul.f32 %v2198, %v2202
        %v2204 = vpack.c.bf16 %v2203, %v2203
        %v2206 = vsel %vm2192, %v2204, 0
        %vm2208 = vcmask 1043456
        %v2210 = vsel %vm2208, %v2143, 0
        %2212 = vmatprep.subr.bf16.mxu0 0
        %2213 = vmatpush1.bf16.msra.mxu0 0
        %2214 = vmatprep.subr.bf16.mxu0 0
        %2215 = vmatpush1.bf16.msra.mxu0 0
        %2216 = vmatprep.subr.bf16.mxu0 0
        %2217 = vmatpush1.bf16.msra.mxu0 0
        %2218 = vmatprep.subr.bf16.mxu0 0
        %2219 = vmatpush1.bf16.msra.mxu0 0
        %2220 = vmatprep.subr.bf16.mxu0 0
        %2221 = vmatpush1.bf16.msra.mxu0 0
        %2222 = vmatprep.subr.bf16.mxu0 0
        %2223 = vmatpush1.bf16.msra.mxu0 0
        %2224 = vmatprep.subr.bf16.mxu0 0
        %2225 = vmatpush1.bf16.msra.mxu0 0
        %2226 = vmatprep.subr.bf16.mxu0 0
        %2227 = vmatpush1.bf16.msra.mxu0 %v2210
        %2228 = vmatprep.subr.bf16.mxu0 0
        %2229 = vmatpush2.bf16.msra.mxu0 0
        %2230 = vmatprep.subr.bf16.mxu0 0
        %2231 = vmatpush2.bf16.msra.mxu0 0
        %2232 = vmatprep.subr.bf16.mxu0 0
        %2233 = vmatpush2.bf16.msra.mxu0 0
        %2234 = vmatprep.subr.bf16.mxu0 0
        %2235 = vmatpush2.bf16.msra.mxu0 0
        %2236 = vmatprep.subr.bf16.mxu0 0
        %2237 = vmatpush2.bf16.msra.mxu0 0
        %2238 = vmatprep.subr.bf16.mxu0 0
        %2239 = vmatpush2.bf16.msra.mxu0 0
        %2240 = vmatprep.subr.bf16.mxu0 0
        %2241 = vmatpush2.bf16.msra.mxu0 0
        %2242 = vmatprep.subr.bf16.mxu0 0
        %2243 = vmatpush2.bf16.msra.mxu0 0
        %2244 = vmatprep.mubr.bf16.mxu0 0
        %2245 = vmatmul.mubr.bf16.gmra.mxu0 %v2206
        %v2246 = vpop.f32.mrf.mxu0
        %v2247 = vadd.f32 0.0, %v2246
        %v2248 = vpop.f32.mrf.mxu0
        %v2249 = vpop.f32.mrf.mxu0
        %v2250 = vpop.f32.mrf.mxu0
        %2251 = vdwg.mxu0
        %v2252 = vpack.c.bf16 %v2247, %v2247
        %s2253 = smul.u32 0, 3
        %s2254 = smul.addr %s2253, 4
        %s2255 = scalar_lea.vmem [#allocation3], %s2254
        %vm2256 = vcmask 519168
        %2257 = vst.msk [vmem:[%s2255] sm:$0xf] %vm2256, %v2252
        %v2258 = vld [vmem:[%s2140] sm:$0xf]
        %v2259 = vld [vmem:[%s2140 + $0xc] sm:$0xf]
        %v2260 = vld [vmem:[%s2140 + $0x18] sm:$0xf]
        %v2262 = vunpack.c.l.b16 %v2258
        %v2263 = vpack.c.b16 %v2262, %v2262
        %2264 = vrot.lane.b32.xlu0 %v2263, 64
        %v2265 = vpop.permute.xlu0 %2264
        %v2267 = vunpack.c.l.b16 %v2259
        %v2268 = vpack.c.b16 %v2267, %v2267
        %2269 = vrot.lane.b32.xlu0 %v2268, 64
        %v2270 = vpop.permute.xlu0 %2269
        %v2272 = vsel %vm2144, %v2265, 0
        %v2275 = vsel %vm2144, %v2270, 0
        %2277 = vmatprep.subr.bf16.mxu0 0
        %2278 = vmatpush1.bf16.xpose.msra.mxu0 0
        %2279 = vmatprep.subr.bf16.mxu0 0
        %2280 = vmatpush1.bf16.xpose.msra.mxu0 0
        %2281 = vmatprep.subr.bf16.mxu0 0
        %2282 = vmatpush1.bf16.xpose.msra.mxu0 0
        %2283 = vmatprep.subr.bf16.mxu0 0
        %2284 = vmatpush1.bf16.xpose.msra.mxu0 0
        %2285 = vmatprep.subr.bf16.mxu0 0
        %2286 = vmatpush1.bf16.xpose.msra.mxu0 0
        %2287 = vmatprep.subr.bf16.mxu0 0
        %2288 = vmatpush1.bf16.xpose.msra.mxu0 0
        %2289 = vmatprep.subr.bf16.mxu0 0
        %2290 = vmatpush1.bf16.xpose.msra.mxu0 0
        %2291 = vmatprep.subr.bf16.mxu0 0
        %2292 = vmatpush1.bf16.xpose.msra.mxu0 %v2275
        %2293 = vmatprep.subr.bf16.mxu0 0
        %2294 = vmatpush2.bf16.xpose.msra.mxu0 0
        %2295 = vmatprep.subr.bf16.mxu0 0
        %2296 = vmatpush2.bf16.xpose.msra.mxu0 0
        %2297 = vmatprep.subr.bf16.mxu0 0
        %2298 = vmatpush2.bf16.xpose.msra.mxu0 0
        %2299 = vmatprep.subr.bf16.mxu0 0
        %2300 = vmatpush2.bf16.xpose.msra.mxu0 0
        %2301 = vmatprep.subr.bf16.mxu0 0
        %2302 = vmatpush2.bf16.xpose.msra.mxu0 0
        %2303 = vmatprep.subr.bf16.mxu0 0
        %2304 = vmatpush2.bf16.xpose.msra.mxu0 0
        %2305 = vmatprep.subr.bf16.mxu0 0
        %2306 = vmatpush2.bf16.xpose.msra.mxu0 0
        %2307 = vmatprep.subr.bf16.mxu0 0
        %2308 = vmatpush2.bf16.xpose.msra.mxu0 0
        %2309 = vmatprep.mubr.bf16.mxu0 0
        %2310 = vmatmul.mubr.bf16.gmra.mxu0 %v2272
        %v2311 = vpop.f32.mrf.mxu0
        %v2312 = vadd.f32 0.0, %v2311
        %v2313 = vpop.f32.mrf.mxu0
        %v2314 = vpop.f32.mrf.mxu0
        %v2315 = vpop.f32.mrf.mxu0
        %2316 = vdwg.mxu0
        %v2317 = vsel %vm288, %v2312, -1e+30
        %v2318 = vsel %vm2192, %v2317, -inf
        %2319 = vmax.xlane.f32.xlu0 %v2318
        %v2320 = vpop.xlane.xlu0 %2319
        %v2321 = vsub.f32 %v2317, %v2320
        %v2322 = vmul.f32 %v2321, 1.442695
        %v2323 = vpow.pop %v2322
        %v2324 = vsel %vm2192, %v2323, 0.0
        %2325 = vadd.xlane.f32.xlu0 %v2324
        %v2326 = vpop.xlane.xlu0 %2325
        %v2327 = vrcp.pop %v2326
        %v2328 = vmul.f32 %v2323, %v2327
        %v2329 = vpack.c.bf16 %v2328, %v2328
        %v2331 = vunpack.c.l.b16 %v2260
        %v2332 = vpack.c.b16 %v2331, %v2331
        %2333 = vrot.lane.b32.xlu0 %v2332, 64
        %v2334 = vpop.permute.xlu0 %2333
        %v2336 = vsel %vm2192, %v2329, 0
        %v2339 = vsel %vm2208, %v2334, 0
        %2341 = vmatprep.subr.bf16.mxu0 0
        %2342 = vmatpush1.bf16.msra.mxu0 0
        %2343 = vmatprep.subr.bf16.mxu0 0
        %2344 = vmatpush1.bf16.msra.mxu0 0
        %2345 = vmatprep.subr.bf16.mxu0 0
        %2346 = vmatpush1.bf16.msra.mxu0 0
        %2347 = vmatprep.subr.bf16.mxu0 0
        %2348 = vmatpush1.bf16.msra.mxu0 0
        %2349 = vmatprep.subr.bf16.mxu0 0
        %2350 = vmatpush1.bf16.msra.mxu0 0
        %2351 = vmatprep.subr.bf16.mxu0 0
        %2352 = vmatpush1.bf16.msra.mxu0 0
        %2353 = vmatprep.subr.bf16.mxu0 0
        %2354 = vmatpush1.bf16.msra.mxu0 0
        %2355 = vmatprep.subr.bf16.mxu0 0
        %2356 = vmatpush1.bf16.msra.mxu0 %v2339
        %2357 = vmatprep.subr.bf16.mxu0 0
        %2358 = vmatpush2.bf16.msra.mxu0 0
        %2359 = vmatprep.subr.bf16.mxu0 0
        %2360 = vmatpush2.bf16.msra.mxu0 0
        %2361 = vmatprep.subr.bf16.mxu0 0
        %2362 = vmatpush2.bf16.msra.mxu0 0
        %2363 = vmatprep.subr.bf16.mxu0 0
        %2364 = vmatpush2.bf16.msra.mxu0 0
        %2365 = vmatprep.subr.bf16.mxu0 0
        %2366 = vmatpush2.bf16.msra.mxu0 0
        %2367 = vmatprep.subr.bf16.mxu0 0
        %2368 = vmatpush2.bf16.msra.mxu0 0
        %2369 = vmatprep.subr.bf16.mxu0 0
        %2370 = vmatpush2.bf16.msra.mxu0 0
        %2371 = vmatprep.subr.bf16.mxu0 0
        %2372 = vmatpush2.bf16.msra.mxu0 0
        %2373 = vmatprep.mubr.bf16.mxu0 0
        %2374 = vmatmul.mubr.bf16.gmra.mxu0 %v2336
        %v2375 = vpop.f32.mrf.mxu0
        %v2376 = vadd.f32 0.0, %v2375
        %v2377 = vpop.f32.mrf.mxu0
        %v2378 = vpop.f32.mrf.mxu0
        %v2379 = vpop.f32.mrf.mxu0
        %2380 = vdwg.mxu0
        %v2381 = vpack.c.bf16 %v2376, %v2376
        %v2383 = vunpack.c.l.b16 %v2381
        %v2384 = vpack.c.b16 %v2383, %v2383
        %2385 = vrot.lane.b32.xlu0 %v2384, 64
        %v2386 = vpop.permute.xlu0 %2385
        %vm2388 = vcmask 1043968
        %2389 = vst.msk [vmem:[%s2255] sm:$0xf] %vm2388, %v2386
        %v2390 = vld [vmem:[%s2140 + $0x4] sm:$0xf]
        %v2391 = vld [vmem:[%s2140 + $0x10] sm:$0xf]
        %v2392 = vld [vmem:[%s2140 + $0x1c] sm:$0xf]
        %v2394 = vsel %vm2144, %v2390, 0
        %v2397 = vsel %vm2144, %v2391, 0
        %2399 = vmatprep.subr.bf16.mxu0 0
        %2400 = vmatpush1.bf16.xpose.msra.mxu0 0
        %2401 = vmatprep.subr.bf16.mxu0 0
        %2402 = vmatpush1.bf16.xpose.msra.mxu0 0
        %2403 = vmatprep.subr.bf16.mxu0 0
        %2404 = vmatpush1.bf16.xpose.msra.mxu0 0
        %2405 = vmatprep.subr.bf16.mxu0 0
        %2406 = vmatpush1.bf16.xpose.msra.mxu0 0
        %2407 = vmatprep.subr.bf16.mxu0 0
        %2408 = vmatpush1.bf16.xpose.msra.mxu0 0
        %2409 = vmatprep.subr.bf16.mxu0 0
        %2410 = vmatpush1.bf16.xpose.msra.mxu0 0
        %2411 = vmatprep.subr.bf16.mxu0 0
        %2412 = vmatpush1.bf16.xpose.msra.mxu0 0
        %2413 = vmatprep.subr.bf16.mxu0 0
        %2414 = vmatpush1.bf16.xpose.msra.mxu0 %v2397
        %2415 = vmatprep.subr.bf16.mxu0 0
        %2416 = vmatpush2.bf16.xpose.msra.mxu0 0
        %2417 = vmatprep.subr.bf16.mxu0 0
        %2418 = vmatpush2.bf16.xpose.msra.mxu0 0
        %2419 = vmatprep.subr.bf16.mxu0 0
        %2420 = vmatpush2.bf16.xpose.msra.mxu0 0
        %2421 = vmatprep.subr.bf16.mxu0 0
        %2422 = vmatpush2.bf16.xpose.msra.mxu0 0
        %2423 = vmatprep.subr.bf16.mxu0 0
        %2424 = vmatpush2.bf16.xpose.msra.mxu0 0
        %2425 = vmatprep.subr.bf16.mxu0 0
        %2426 = vmatpush2.bf16.xpose.msra.mxu0 0
        %2427 = vmatprep.subr.bf16.mxu0 0
        %2428 = vmatpush2.bf16.xpose.msra.mxu0 0
        %2429 = vmatprep.subr.bf16.mxu0 0
        %2430 = vmatpush2.bf16.xpose.msra.mxu0 0
        %2431 = vmatprep.mubr.bf16.mxu0 0
        %2432 = vmatmul.mubr.bf16.gmra.mxu0 %v2394
        %v2433 = vpop.f32.mrf.mxu0
        %v2434 = vadd.f32 0.0, %v2433
        %v2435 = vpop.f32.mrf.mxu0
        %v2436 = vpop.f32.mrf.mxu0
        %v2437 = vpop.f32.mrf.mxu0
        %2438 = vdwg.mxu0
        %v2439 = vsel %vm288, %v2434, -1e+30
        %v2440 = vsel %vm2192, %v2439, -inf
        %2441 = vmax.xlane.f32.xlu0 %v2440
        %v2442 = vpop.xlane.xlu0 %2441
        %v2443 = vsub.f32 %v2439, %v2442
        %v2444 = vmul.f32 %v2443, 1.442695
        %v2445 = vpow.pop %v2444
        %v2446 = vsel %vm2192, %v2445, 0.0
        %2447 = vadd.xlane.f32.xlu0 %v2446
        %v2448 = vpop.xlane.xlu0 %2447
        %v2449 = vrcp.pop %v2448
        %v2450 = vmul.f32 %v2445, %v2449
        %v2451 = vpack.c.bf16 %v2450, %v2450
        %v2453 = vsel %vm2192, %v2451, 0
        %v2456 = vsel %vm2208, %v2392, 0
        %2458 = vmatprep.subr.bf16.mxu0 0
        %2459 = vmatpush1.bf16.msra.mxu0 0
        %2460 = vmatprep.subr.bf16.mxu0 0
        %2461 = vmatpush1.bf16.msra.mxu0 0
        %2462 = vmatprep.subr.bf16.mxu0 0
        %2463 = vmatpush1.bf16.msra.mxu0 0
        %2464 = vmatprep.subr.bf16.mxu0 0
        %2465 = vmatpush1.bf16.msra.mxu0 0
        %2466 = vmatprep.subr.bf16.mxu0 0
        %2467 = vmatpush1.bf16.msra.mxu0 0
        %2468 = vmatprep.subr.bf16.mxu0 0
        %2469 = vmatpush1.bf16.msra.mxu0 0
        %2470 = vmatprep.subr.bf16.mxu0 0
        %2471 = vmatpush1.bf16.msra.mxu0 0
        %2472 = vmatprep.subr.bf16.mxu0 0
        %2473 = vmatpush1.bf16.msra.mxu0 %v2456
        %2474 = vmatprep.subr.bf16.mxu0 0
        %2475 = vmatpush2.bf16.msra.mxu0 0
        %2476 = vmatprep.subr.bf16.mxu0 0
        %2477 = vmatpush2.bf16.msra.mxu0 0
        %2478 = vmatprep.subr.bf16.mxu0 0
        %2479 = vmatpush2.bf16.msra.mxu0 0
        %2480 = vmatprep.subr.bf16.mxu0 0
        %2481 = vmatpush2.bf16.msra.mxu0 0
        %2482 = vmatprep.subr.bf16.mxu0 0
        %2483 = vmatpush2.bf16.msra.mxu0 0
        %2484 = vmatprep.subr.bf16.mxu0 0
        %2485 = vmatpush2.bf16.msra.mxu0 0
        %2486 = vmatprep.subr.bf16.mxu0 0
        %2487 = vmatpush2.bf16.msra.mxu0 0
        %2488 = vmatprep.subr.bf16.mxu0 0
        %2489 = vmatpush2.bf16.msra.mxu0 0
        %2490 = vmatprep.mubr.bf16.mxu0 0
        %2491 = vmatmul.mubr.bf16.gmra.mxu0 %v2453
        %v2492 = vpop.f32.mrf.mxu0
        %v2493 = vadd.f32 0.0, %v2492
        %v2494 = vpop.f32.mrf.mxu0
        %v2495 = vpop.f32.mrf.mxu0
        %v2496 = vpop.f32.mrf.mxu0
        %2497 = vdwg.mxu0
        %v2498 = vpack.c.bf16 %v2493, %v2493
        %2499 = vst.msk [vmem:[%s2255 + $0x4] sm:$0xf] %vm2256, %v2498
        %v2500 = vld [vmem:[%s2140 + $0x4] sm:$0xf]
        %v2501 = vld [vmem:[%s2140 + $0x10] sm:$0xf]
        %v2502 = vld [vmem:[%s2140 + $0x1c] sm:$0xf]
        %v2504 = vunpack.c.l.b16 %v2500
        %v2505 = vpack.c.b16 %v2504, %v2504
        %2506 = vrot.lane.b32.xlu0 %v2505, 64
        %v2507 = vpop.permute.xlu0 %2506
        %v2509 = vunpack.c.l.b16 %v2501
        %v2510 = vpack.c.b16 %v2509, %v2509
        %2511 = vrot.lane.b32.xlu0 %v2510, 64
        %v2512 = vpop.permute.xlu0 %2511
        %v2514 = vsel %vm2144, %v2507, 0
        %v2517 = vsel %vm2144, %v2512, 0
        %2519 = vmatprep.subr.bf16.mxu0 0
        %2520 = vmatpush1.bf16.xpose.msra.mxu0 0
        %2521 = vmatprep.subr.bf16.mxu0 0
        %2522 = vmatpush1.bf16.xpose.msra.mxu0 0
        %2523 = vmatprep.subr.bf16.mxu0 0
        %2524 = vmatpush1.bf16.xpose.msra.mxu0 0
        %2525 = vmatprep.subr.bf16.mxu0 0
        %2526 = vmatpush1.bf16.xpose.msra.mxu0 0
        %2527 = vmatprep.subr.bf16.mxu0 0
        %2528 = vmatpush1.bf16.xpose.msra.mxu0 0
        %2529 = vmatprep.subr.bf16.mxu0 0
        %2530 = vmatpush1.bf16.xpose.msra.mxu0 0
        %2531 = vmatprep.subr.bf16.mxu0 0
        %2532 = vmatpush1.bf16.xpose.msra.mxu0 0
        %2533 = vmatprep.subr.bf16.mxu0 0
        %2534 = vmatpush1.bf16.xpose.msra.mxu0 %v2517
        %2535 = vmatprep.subr.bf16.mxu0 0
        %2536 = vmatpush2.bf16.xpose.msra.mxu0 0
        %2537 = vmatprep.subr.bf16.mxu0 0
        %2538 = vmatpush2.bf16.xpose.msra.mxu0 0
        %2539 = vmatprep.subr.bf16.mxu0 0
        %2540 = vmatpush2.bf16.xpose.msra.mxu0 0
        %2541 = vmatprep.subr.bf16.mxu0 0
        %2542 = vmatpush2.bf16.xpose.msra.mxu0 0
        %2543 = vmatprep.subr.bf16.mxu0 0
        %2544 = vmatpush2.bf16.xpose.msra.mxu0 0
        %2545 = vmatprep.subr.bf16.mxu0 0
        %2546 = vmatpush2.bf16.xpose.msra.mxu0 0
        %2547 = vmatprep.subr.bf16.mxu0 0
        %2548 = vmatpush2.bf16.xpose.msra.mxu0 0
        %2549 = vmatprep.subr.bf16.mxu0 0
        %2550 = vmatpush2.bf16.xpose.msra.mxu0 0
        %2551 = vmatprep.mubr.bf16.mxu0 0
        %2552 = vmatmul.mubr.bf16.gmra.mxu0 %v2514
        %v2553 = vpop.f32.mrf.mxu0
        %v2554 = vadd.f32 0.0, %v2553
        %v2555 = vpop.f32.mrf.mxu0
        %v2556 = vpop.f32.mrf.mxu0
        %v2557 = vpop.f32.mrf.mxu0
        %2558 = vdwg.mxu0
        %v2559 = vsel %vm288, %v2554, -1e+30
        %v2560 = vsel %vm2192, %v2559, -inf
        %2561 = vmax.xlane.f32.xlu0 %v2560
        %v2562 = vpop.xlane.xlu0 %2561
        %v2563 = vsub.f32 %v2559, %v2562
        %v2564 = vmul.f32 %v2563, 1.442695
        %v2565 = vpow.pop %v2564
        %v2566 = vsel %vm2192, %v2565, 0.0
        %2567 = vadd.xlane.f32.xlu0 %v2566
        %v2568 = vpop.xlane.xlu0 %2567
        %v2569 = vrcp.pop %v2568
        %v2570 = vmul.f32 %v2565, %v2569
        %v2571 = vpack.c.bf16 %v2570, %v2570
        %v2573 = vunpack.c.l.b16 %v2502
        %v2574 = vpack.c.b16 %v2573, %v2573
        %2575 = vrot.lane.b32.xlu0 %v2574, 64
        %v2576 = vpop.permute.xlu0 %2575
        %v2578 = vsel %vm2192, %v2571, 0
        %v2581 = vsel %vm2208, %v2576, 0
        %2583 = vmatprep.subr.bf16.mxu0 0
        %2584 = vmatpush1.bf16.msra.mxu0 0
        %2585 = vmatprep.subr.bf16.mxu0 0
        %2586 = vmatpush1.bf16.msra.mxu0 0
        %2587 = vmatprep.subr.bf16.mxu0 0
        %2588 = vmatpush1.bf16.msra.mxu0 0
        %2589 = vmatprep.subr.bf16.mxu0 0
        %2590 = vmatpush1.bf16.msra.mxu0 0
        %2591 = vmatprep.subr.bf16.mxu0 0
        %2592 = vmatpush1.bf16.msra.mxu0 0
        %2593 = vmatprep.subr.bf16.mxu0 0
        %2594 = vmatpush1.bf16.msra.mxu0 0
        %2595 = vmatprep.subr.bf16.mxu0 0
        %2596 = vmatpush1.bf16.msra.mxu0 0
        %2597 = vmatprep.subr.bf16.mxu0 0
        %2598 = vmatpush1.bf16.msra.mxu0 %v2581
        %2599 = vmatprep.subr.bf16.mxu0 0
        %2600 = vmatpush2.bf16.msra.mxu0 0
        %2601 = vmatprep.subr.bf16.mxu0 0
        %2602 = vmatpush2.bf16.msra.mxu0 0
        %2603 = vmatprep.subr.bf16.mxu0 0
        %2604 = vmatpush2.bf16.msra.mxu0 0
        %2605 = vmatprep.subr.bf16.mxu0 0
        %2606 = vmatpush2.bf16.msra.mxu0 0
        %2607 = vmatprep.subr.bf16.mxu0 0
        %2608 = vmatpush2.bf16.msra.mxu0 0
        %2609 = vmatprep.subr.bf16.mxu0 0
        %2610 = vmatpush2.bf16.msra.mxu0 0
        %2611 = vmatprep.subr.bf16.mxu0 0
        %2612 = vmatpush2.bf16.msra.mxu0 0
        %2613 = vmatprep.subr.bf16.mxu0 0
        %2614 = vmatpush2.bf16.msra.mxu0 0
        %2615 = vmatprep.mubr.bf16.mxu0 0
        %2616 = vmatmul.mubr.bf16.gmra.mxu0 %v2578
        %v2617 = vpop.f32.mrf.mxu0
        %v2618 = vadd.f32 0.0, %v2617
        %v2619 = vpop.f32.mrf.mxu0
        %v2620 = vpop.f32.mrf.mxu0
        %v2621 = vpop.f32.mrf.mxu0
        %2622 = vdwg.mxu0
        %v2623 = vpack.c.bf16 %v2618, %v2618
        %v2625 = vunpack.c.l.b16 %v2623
        %v2626 = vpack.c.b16 %v2625, %v2625
        %2627 = vrot.lane.b32.xlu0 %v2626, 64
        %v2628 = vpop.permute.xlu0 %2627
        %2630 = vst.msk [vmem:[%s2255 + $0x4] sm:$0xf] %vm2388, %v2628
        %v2631 = vld [vmem:[%s2140 + $0x8] sm:$0xf]
        %v2632 = vld [vmem:[%s2140 + $0x14] sm:$0xf]
        %v2633 = vld [vmem:[%s2140 + $0x20] sm:$0xf]
        %v2635 = vsel %vm2144, %v2631, 0
        %v2638 = vsel %vm2144, %v2632, 0
        %2640 = vmatprep.subr.bf16.mxu0 0
        %2641 = vmatpush1.bf16.xpose.msra.mxu0 0
        %2642 = vmatprep.subr.bf16.mxu0 0
        %2643 = vmatpush1.bf16.xpose.msra.mxu0 0
        %2644 = vmatprep.subr.bf16.mxu0 0
        %2645 = vmatpush1.bf16.xpose.msra.mxu0 0
        %2646 = vmatprep.subr.bf16.mxu0 0
        %2647 = vmatpush1.bf16.xpose.msra.mxu0 0
        %2648 = vmatprep.subr.bf16.mxu0 0
        %2649 = vmatpush1.bf16.xpose.msra.mxu0 0
        %2650 = vmatprep.subr.bf16.mxu0 0
        %2651 = vmatpush1.bf16.xpose.msra.mxu0 0
        %2652 = vmatprep.subr.bf16.mxu0 0
        %2653 = vmatpush1.bf16.xpose.msra.mxu0 0
        %2654 = vmatprep.subr.bf16.mxu0 0
        %2655 = vmatpush1.bf16.xpose.msra.mxu0 %v2638
        %2656 = vmatprep.subr.bf16.mxu0 0
        %2657 = vmatpush2.bf16.xpose.msra.mxu0 0
        %2658 = vmatprep.subr.bf16.mxu0 0
        %2659 = vmatpush2.bf16.xpose.msra.mxu0 0
        %2660 = vmatprep.subr.bf16.mxu0 0
        %2661 = vmatpush2.bf16.xpose.msra.mxu0 0
        %2662 = vmatprep.subr.bf16.mxu0 0
        %2663 = vmatpush2.bf16.xpose.msra.mxu0 0
        %2664 = vmatprep.subr.bf16.mxu0 0
        %2665 = vmatpush2.bf16.xpose.msra.mxu0 0
        %2666 = vmatprep.subr.bf16.mxu0 0
        %2667 = vmatpush2.bf16.xpose.msra.mxu0 0
        %2668 = vmatprep.subr.bf16.mxu0 0
        %2669 = vmatpush2.bf16.xpose.msra.mxu0 0
        %2670 = vmatprep.subr.bf16.mxu0 0
        %2671 = vmatpush2.bf16.xpose.msra.mxu0 0
        %2672 = vmatprep.mubr.bf16.mxu0 0
        %2673 = vmatmul.mubr.bf16.gmra.mxu0 %v2635
        %v2674 = vpop.f32.mrf.mxu0
        %v2675 = vadd.f32 0.0, %v2674
        %v2676 = vpop.f32.mrf.mxu0
        %v2677 = vpop.f32.mrf.mxu0
        %v2678 = vpop.f32.mrf.mxu0
        %2679 = vdwg.mxu0
        %v2680 = vsel %vm288, %v2675, -1e+30
        %v2681 = vsel %vm2192, %v2680, -inf
        %2682 = vmax.xlane.f32.xlu0 %v2681
        %v2683 = vpop.xlane.xlu0 %2682
        %v2684 = vsub.f32 %v2680, %v2683
        %v2685 = vmul.f32 %v2684, 1.442695
        %v2686 = vpow.pop %v2685
        %v2687 = vsel %vm2192, %v2686, 0.0
        %2688 = vadd.xlane.f32.xlu0 %v2687
        %v2689 = vpop.xlane.xlu0 %2688
        %v2690 = vrcp.pop %v2689
        %v2691 = vmul.f32 %v2686, %v2690
        %v2692 = vpack.c.bf16 %v2691, %v2691
        %v2694 = vsel %vm2192, %v2692, 0
        %v2697 = vsel %vm2208, %v2633, 0
        %2699 = vmatprep.subr.bf16.mxu0 0
        %2700 = vmatpush1.bf16.msra.mxu0 0
        %2701 = vmatprep.subr.bf16.mxu0 0
        %2702 = vmatpush1.bf16.msra.mxu0 0
        %2703 = vmatprep.subr.bf16.mxu0 0
        %2704 = vmatpush1.bf16.msra.mxu0 0
        %2705 = vmatprep.subr.bf16.mxu0 0
        %2706 = vmatpush1.bf16.msra.mxu0 0
        %2707 = vmatprep.subr.bf16.mxu0 0
        %2708 = vmatpush1.bf16.msra.mxu0 0
        %2709 = vmatprep.subr.bf16.mxu0 0
        %2710 = vmatpush1.bf16.msra.mxu0 0
        %2711 = vmatprep.subr.bf16.mxu0 0
        %2712 = vmatpush1.bf16.msra.mxu0 0
        %2713 = vmatprep.subr.bf16.mxu0 0
        %2714 = vmatpush1.bf16.msra.mxu0 %v2697
        %2715 = vmatprep.subr.bf16.mxu0 0
        %2716 = vmatpush2.bf16.msra.mxu0 0
        %2717 = vmatprep.subr.bf16.mxu0 0
        %2718 = vmatpush2.bf16.msra.mxu0 0
        %2719 = vmatprep.subr.bf16.mxu0 0
        %2720 = vmatpush2.bf16.msra.mxu0 0
        %2721 = vmatprep.subr.bf16.mxu0 0
        %2722 = vmatpush2.bf16.msra.mxu0 0
        %2723 = vmatprep.subr.bf16.mxu0 0
        %2724 = vmatpush2.bf16.msra.mxu0 0
        %2725 = vmatprep.subr.bf16.mxu0 0
        %2726 = vmatpush2.bf16.msra.mxu0 0
        %2727 = vmatprep.subr.bf16.mxu0 0
        %2728 = vmatpush2.bf16.msra.mxu0 0
        %2729 = vmatprep.subr.bf16.mxu0 0
        %2730 = vmatpush2.bf16.msra.mxu0 0
        %2731 = vmatprep.mubr.bf16.mxu0 0
        %2732 = vmatmul.mubr.bf16.gmra.mxu0 %v2694
        %v2733 = vpop.f32.mrf.mxu0
        %v2734 = vadd.f32 0.0, %v2733
        %v2735 = vpop.f32.mrf.mxu0
        %v2736 = vpop.f32.mrf.mxu0
        %v2737 = vpop.f32.mrf.mxu0
        %2738 = vdwg.mxu0
        %v2739 = vpack.c.bf16 %v2734, %v2734
        %2740 = vst.msk [vmem:[%s2255 + $0x8] sm:$0xf] %vm2256, %v2739
        %v2741 = vld [vmem:[%s2140 + $0x8] sm:$0xf]
        %v2742 = vld [vmem:[%s2140 + $0x14] sm:$0xf]
        %v2743 = vld [vmem:[%s2140 + $0x20] sm:$0xf]
        %v2745 = vunpack.c.l.b16 %v2741
        %v2746 = vpack.c.b16 %v2745, %v2745
        %2747 = vrot.lane.b32.xlu0 %v2746, 64
        %v2748 = vpop.permute.xlu0 %2747
        %v2750 = vunpack.c.l.b16 %v2742
        %v2751 = vpack.c.b16 %v2750, %v2750
        %2752 = vrot.lane.b32.xlu0 %v2751, 64
        %v2753 = vpop.permute.xlu0 %2752
        %v2755 = vsel %vm2144, %v2748, 0
        %v2758 = vsel %vm2144, %v2753, 0
        %2760 = vmatprep.subr.bf16.mxu0 0
        %2761 = vmatpush1.bf16.xpose.msra.mxu0 0
        %2762 = vmatprep.subr.bf16.mxu0 0
        %2763 = vmatpush1.bf16.xpose.msra.mxu0 0
        %2764 = vmatprep.subr.bf16.mxu0 0
        %2765 = vmatpush1.bf16.xpose.msra.mxu0 0
        %2766 = vmatprep.subr.bf16.mxu0 0
        %2767 = vmatpush1.bf16.xpose.msra.mxu0 0
        %2768 = vmatprep.subr.bf16.mxu0 0
        %2769 = vmatpush1.bf16.xpose.msra.mxu0 0
        %2770 = vmatprep.subr.bf16.mxu0 0
        %2771 = vmatpush1.bf16.xpose.msra.mxu0 0
        %2772 = vmatprep.subr.bf16.mxu0 0
        %2773 = vmatpush1.bf16.xpose.msra.mxu0 0
        %2774 = vmatprep.subr.bf16.mxu0 0
        %2775 = vmatpush1.bf16.xpose.msra.mxu0 %v2758
        %2776 = vmatprep.subr.bf16.mxu0 0
        %2777 = vmatpush2.bf16.xpose.msra.mxu0 0
        %2778 = vmatprep.subr.bf16.mxu0 0
        %2779 = vmatpush2.bf16.xpose.msra.mxu0 0
        %2780 = vmatprep.subr.bf16.mxu0 0
        %2781 = vmatpush2.bf16.xpose.msra.mxu0 0
        %2782 = vmatprep.subr.bf16.mxu0 0
        %2783 = vmatpush2.bf16.xpose.msra.mxu0 0
        %2784 = vmatprep.subr.bf16.mxu0 0
        %2785 = vmatpush2.bf16.xpose.msra.mxu0 0
        %2786 = vmatprep.subr.bf16.mxu0 0
        %2787 = vmatpush2.bf16.xpose.msra.mxu0 0
        %2788 = vmatprep.subr.bf16.mxu0 0
        %2789 = vmatpush2.bf16.xpose.msra.mxu0 0
        %2790 = vmatprep.subr.bf16.mxu0 0
        %2791 = vmatpush2.bf16.xpose.msra.mxu0 0
        %2792 = vmatprep.mubr.bf16.mxu0 0
        %2793 = vmatmul.mubr.bf16.gmra.mxu0 %v2755
        %v2794 = vpop.f32.mrf.mxu0
        %v2795 = vadd.f32 0.0, %v2794
        %v2796 = vpop.f32.mrf.mxu0
        %v2797 = vpop.f32.mrf.mxu0
        %v2798 = vpop.f32.mrf.mxu0
        %2799 = vdwg.mxu0
        %v2800 = vsel %vm288, %v2795, -1e+30
        %v2801 = vsel %vm2192, %v2800, -inf
        %2802 = vmax.xlane.f32.xlu0 %v2801
        %v2803 = vpop.xlane.xlu0 %2802
        %v2804 = vsub.f32 %v2800, %v2803
        %v2805 = vmul.f32 %v2804, 1.442695
        %v2806 = vpow.pop %v2805
        %v2807 = vsel %vm2192, %v2806, 0.0
        %2808 = vadd.xlane.f32.xlu0 %v2807
        %v2809 = vpop.xlane.xlu0 %2808
        %v2810 = vrcp.pop %v2809
        %v2811 = vmul.f32 %v2806, %v2810
        %v2812 = vpack.c.bf16 %v2811, %v2811
        %v2814 = vunpack.c.l.b16 %v2743
        %v2815 = vpack.c.b16 %v2814, %v2814
        %2816 = vrot.lane.b32.xlu0 %v2815, 64
        %v2817 = vpop.permute.xlu0 %2816
        %v2819 = vsel %vm2192, %v2812, 0
        %v2822 = vsel %vm2208, %v2817, 0
        %2824 = vmatprep.subr.bf16.mxu0 0
        %2825 = vmatpush1.bf16.msra.mxu0 0
        %2826 = vmatprep.subr.bf16.mxu0 0
        %2827 = vmatpush1.bf16.msra.mxu0 0
        %2828 = vmatprep.subr.bf16.mxu0 0
        %2829 = vmatpush1.bf16.msra.mxu0 0
        %2830 = vmatprep.subr.bf16.mxu0 0
        %2831 = vmatpush1.bf16.msra.mxu0 0
        %2832 = vmatprep.subr.bf16.mxu0 0
        %2833 = vmatpush1.bf16.msra.mxu0 0
        %2834 = vmatprep.subr.bf16.mxu0 0
        %2835 = vmatpush1.bf16.msra.mxu0 0
        %2836 = vmatprep.subr.bf16.mxu0 0
        %2837 = vmatpush1.bf16.msra.mxu0 0
        %2838 = vmatprep.subr.bf16.mxu0 0
        %2839 = vmatpush1.bf16.msra.mxu0 %v2822
        %2840 = vmatprep.subr.bf16.mxu0 0
        %2841 = vmatpush2.bf16.msra.mxu0 0
        %2842 = vmatprep.subr.bf16.mxu0 0
        %2843 = vmatpush2.bf16.msra.mxu0 0
        %2844 = vmatprep.subr.bf16.mxu0 0
        %2845 = vmatpush2.bf16.msra.mxu0 0
        %2846 = vmatprep.subr.bf16.mxu0 0
        %2847 = vmatpush2.bf16.msra.mxu0 0
        %2848 = vmatprep.subr.bf16.mxu0 0
        %2849 = vmatpush2.bf16.msra.mxu0 0
        %2850 = vmatprep.subr.bf16.mxu0 0
        %2851 = vmatpush2.bf16.msra.mxu0 0
        %2852 = vmatprep.subr.bf16.mxu0 0
        %2853 = vmatpush2.bf16.msra.mxu0 0
        %2854 = vmatprep.subr.bf16.mxu0 0
        %2855 = vmatpush2.bf16.msra.mxu0 0
        %2856 = vmatprep.mubr.bf16.mxu0 0
        %2857 = vmatmul.mubr.bf16.gmra.mxu0 %v2819
        %v2858 = vpop.f32.mrf.mxu0
        %v2859 = vadd.f32 0.0, %v2858
        %v2860 = vpop.f32.mrf.mxu0
        %v2861 = vpop.f32.mrf.mxu0
        %v2862 = vpop.f32.mrf.mxu0
        %2863 = vdwg.mxu0
        %v2864 = vpack.c.bf16 %v2859, %v2859
        %v2866 = vunpack.c.l.b16 %v2864
        %v2867 = vpack.c.b16 %v2866, %v2866
        %2868 = vrot.lane.b32.xlu0 %v2867, 64
        %v2869 = vpop.permute.xlu0 %2868
        %2871 = vst.msk [vmem:[%s2255 + $0x8] sm:$0xf] %vm2388, %v2869
        %v2872 = vld [vmem:[#allocation3] sm:$0xff]
        %v2873 = vld [vmem:[#allocation3 + $0x8] sm:$0xf]
        %v2874 = vld [vmem:[#allocation10] sm:$0xff]
        %v2875 = vld [vmem:[#allocation10 + $0x8] sm:$0xf]
        %v2876 = vld [vmem:[#allocation10 + $0xc] sm:$0xff]
        %v2877 = vld [vmem:[#allocation10 + $0x14] sm:$0xf]
        %v2878 = vld [vmem:[#allocation10 + $0x18] sm:$0xff]
        %v2879 = vld [vmem:[#allocation10 + $0x20] sm:$0xf]
        %v2880 = vld [vmem:[#allocation10 + $0x24] sm:$0xff]
        %v2881 = vld [vmem:[#allocation10 + $0x2c] sm:$0xf]
        %v2882 = vld [vmem:[#allocation10 + $0x30] sm:$0xff]
        %v2883 = vld [vmem:[#allocation10 + $0x38] sm:$0xf]
        %v2884 = vld [vmem:[#allocation10 + $0x3c] sm:$0xff]
        %v2885 = vld [vmem:[#allocation10 + $0x44] sm:$0xf]
        %v2886 = vld [vmem:[#allocation10 + $0x48] sm:$0xff]
        %v2887 = vld [vmem:[#allocation10 + $0x50] sm:$0xf]
        %v2888 = vld [vmem:[#allocation10 + $0x54] sm:$0xff]
        %v2889 = vld [vmem:[#allocation10 + $0x5c] sm:$0xf]
        %v2890 = vld [vmem:[#allocation10 + $0x60] sm:$0xff]
        %v2891 = vld [vmem:[#allocation10 + $0x68] sm:$0xf]
        %v2892 = vld [vmem:[#allocation10 + $0x6c] sm:$0xff]
        %v2893 = vld [vmem:[#allocation10 + $0x74] sm:$0xf]
        %v2894 = vld [vmem:[#allocation10 + $0x78] sm:$0xff]
        %v2895 = vld [vmem:[#allocation10 + $0x80] sm:$0xf]
        %v2896 = vld [vmem:[#allocation10 + $0x84] sm:$0xff]
        %v2897 = vld [vmem:[#allocation10 + $0x8c] sm:$0xf]
        %v2898 = vld [vmem:[#allocation10 + $0x90] sm:$0xff]
        %v2899 = vld [vmem:[#allocation10 + $0x98] sm:$0xf]
        %v2900 = vld [vmem:[#allocation10 + $0x9c] sm:$0xff]
        %v2901 = vld [vmem:[#allocation10 + $0xa4] sm:$0xf]
        %v2902 = vld [vmem:[#allocation10 + $0xa8] sm:$0xff]
        %v2903 = vld [vmem:[#allocation10 + $0xb0] sm:$0xf]
        %v2904 = vld [vmem:[#allocation10 + $0xb4] sm:$0xff]
        %v2905 = vld [vmem:[#allocation10 + $0xbc] sm:$0xf]
        %v2906 = vld [vmem:[#allocation10 + $0xc0] sm:$0xff]
        %v2907 = vld [vmem:[#allocation10 + $0xc8] sm:$0xf]
        %v2908 = vld [vmem:[#allocation10 + $0xcc] sm:$0xff]
        %v2909 = vld [vmem:[#allocation10 + $0xd4] sm:$0xf]
        %v2910 = vld [vmem:[#allocation10 + $0xd8] sm:$0xff]
        %v2911 = vld [vmem:[#allocation10 + $0xe0] sm:$0xf]
        %v2912 = vld [vmem:[#allocation10 + $0xe4] sm:$0xff]
        %v2913 = vld [vmem:[#allocation10 + $0xec] sm:$0xf]
        %v2914 = vld [vmem:[#allocation10 + $0xf0] sm:$0xff]
        %v2915 = vld [vmem:[#allocation10 + $0xf8] sm:$0xf]
        %v2916 = vld [vmem:[#allocation10 + $0xfc] sm:$0xff]
        %v2917 = vld [vmem:[#allocation10 + $0x104] sm:$0xf]
        %v2918 = vld [vmem:[#allocation10 + $0x108] sm:$0xff]
        %v2919 = vld [vmem:[#allocation10 + $0x110] sm:$0xf]
        %v2920 = vld [vmem:[#allocation10 + $0x114] sm:$0xff]
        %v2921 = vld [vmem:[#allocation10 + $0x11c] sm:$0xf]
        %v2922 = vld [vmem:[#allocation10 + $0x120] sm:$0xff]
        %v2923 = vld [vmem:[#allocation10 + $0x128] sm:$0xf]
        %v2924 = vld [vmem:[#allocation10 + $0x12c] sm:$0xff]
        %v2925 = vld [vmem:[#allocation10 + $0x134] sm:$0xf]
        %v2926 = vld [vmem:[#allocation10 + $0x138] sm:$0xff]
        %v2927 = vld [vmem:[#allocation10 + $0x140] sm:$0xf]
        %v2928 = vld [vmem:[#allocation10 + $0x144] sm:$0xff]
        %v2929 = vld [vmem:[#allocation10 + $0x14c] sm:$0xf]
        %v2930 = vld [vmem:[#allocation10 + $0x150] sm:$0xff]
        %v2931 = vld [vmem:[#allocation10 + $0x158] sm:$0xf]
        %v2932 = vld [vmem:[#allocation10 + $0x15c] sm:$0xff]
        %v2933 = vld [vmem:[#allocation10 + $0x164] sm:$0xf]
        %v2934 = vld [vmem:[#allocation10 + $0x168] sm:$0xff]
        %v2935 = vld [vmem:[#allocation10 + $0x170] sm:$0xf]
        %v2936 = vld [vmem:[#allocation10 + $0x174] sm:$0xff]
        %v2937 = vld [vmem:[#allocation10 + $0x17c] sm:$0xf]
        %v2938 = vld [vmem:[#allocation10 + $0x180] sm:$0xff]
        %v2939 = vld [vmem:[#allocation10 + $0x188] sm:$0xf]
        %v2940 = vld [vmem:[#allocation10 + $0x18c] sm:$0xff]
        %v2941 = vld [vmem:[#allocation10 + $0x194] sm:$0xf]
        %v2942 = vld [vmem:[#allocation10 + $0x198] sm:$0xff]
        %v2943 = vld [vmem:[#allocation10 + $0x1a0] sm:$0xf]
        %v2944 = vld [vmem:[#allocation10 + $0x1a4] sm:$0xff]
        %v2945 = vld [vmem:[#allocation10 + $0x1ac] sm:$0xf]
        %v2946 = vld [vmem:[#allocation10 + $0x1b0] sm:$0xff]
        %v2947 = vld [vmem:[#allocation10 + $0x1b8] sm:$0xf]
        %v2948 = vld [vmem:[#allocation10 + $0x1bc] sm:$0xff]
        %v2949 = vld [vmem:[#allocation10 + $0x1c4] sm:$0xf]
        %v2950 = vld [vmem:[#allocation10 + $0x1c8] sm:$0xff]
        %v2951 = vld [vmem:[#allocation10 + $0x1d0] sm:$0xf]
        %v2952 = vld [vmem:[#allocation10 + $0x1d4] sm:$0xff]
        %v2953 = vld [vmem:[#allocation10 + $0x1dc] sm:$0xf]
        %v2954 = vld [vmem:[#allocation10 + $0x1e0] sm:$0xff]
        %v2955 = vld [vmem:[#allocation10 + $0x1e8] sm:$0xf]
        %v2956 = vld [vmem:[#allocation10 + $0x1ec] sm:$0xff]
        %v2957 = vld [vmem:[#allocation10 + $0x1f4] sm:$0xf]
        %v2958 = vld [vmem:[#allocation10 + $0x1f8] sm:$0xff]
        %v2959 = vld [vmem:[#allocation10 + $0x200] sm:$0xf]
        %v2960 = vld [vmem:[#allocation10 + $0x204] sm:$0xff]
        %v2961 = vld [vmem:[#allocation10 + $0x20c] sm:$0xf]
        %v2962 = vld [vmem:[#allocation10 + $0x210] sm:$0xff]
        %v2963 = vld [vmem:[#allocation10 + $0x218] sm:$0xf]
        %v2964 = vld [vmem:[#allocation10 + $0x21c] sm:$0xff]
        %v2965 = vld [vmem:[#allocation10 + $0x224] sm:$0xf]
        %v2966 = vld [vmem:[#allocation10 + $0x228] sm:$0xff]
        %v2967 = vld [vmem:[#allocation10 + $0x230] sm:$0xf]
        %v2968 = vld [vmem:[#allocation10 + $0x234] sm:$0xff]
        %v2969 = vld [vmem:[#allocation10 + $0x23c] sm:$0xf]
        %v2970 = vld [vmem:[%s4] sm:$0x7]
        %v2972 = vlaneseq
        %v2973 = vshrl.u32 %v2972, 7
        %v2974 = vsub.s32 0, %v2973
        %v2975 = vrot.slane %v2970, %v2974
        %v2976 = vlaneseq
        %v2977 = vshrl.u32 %v2976, 7
        %v2978 = vsub.s32 1, %v2977
        %v2979 = vrot.slane %v2970, %v2978
        %v2980 = vlaneseq
        %v2981 = vshrl.u32 %v2980, 7
        %v2982 = vsub.s32 2, %v2981
        %v2983 = vrot.slane %v2970, %v2982
        %v2989 = vunpack.c.l.b16 %v2872
        %v2990 = vunpack.c.h.b16 %v2872
        %v2991 = vunpack.c.l.b16 %v2873
        %v2992 = vpack.c.b16 %v2989, %v2989
        %v2993 = vpack.c.b16 %v2990, %v2990
        %v2994 = vpack.c.b16 %v2991, %v2991
        %v3094 = vunpack.c.l.b16 %v2874
        %v3095 = vunpack.c.h.b16 %v2874
        %v3096 = vunpack.c.l.b16 %v2875
        %v3097 = vunpack.c.l.b16 %v2876
        %v3098 = vunpack.c.h.b16 %v2876
        %v3099 = vunpack.c.l.b16 %v2877
        %v3100 = vunpack.c.l.b16 %v2878
        %v3101 = vunpack.c.h.b16 %v2878
        %v3102 = vunpack.c.l.b16 %v2879
        %v3103 = vunpack.c.l.b16 %v2880
        %v3104 = vunpack.c.h.b16 %v2880
        %v3105 = vunpack.c.l.b16 %v2881
        %v3106 = vunpack.c.l.b16 %v2882
        %v3107 = vunpack.c.h.b16 %v2882
        %v3108 = vunpack.c.l.b16 %v2883
        %v3109 = vunpack.c.l.b16 %v2884
        %v3110 = vunpack.c.h.b16 %v2884
        %v3111 = vunpack.c.l.b16 %v2885
        %v3112 = vunpack.c.l.b16 %v2886
        %v3113 = vunpack.c.h.b16 %v2886
        %v3114 = vunpack.c.l.b16 %v2887
        %v3115 = vunpack.c.l.b16 %v2888
        %v3116 = vunpack.c.h.b16 %v2888
        %v3117 = vunpack.c.l.b16 %v2889
        %v3118 = vunpack.c.l.b16 %v2890
        %v3119 = vunpack.c.h.b16 %v2890
        %v3120 = vunpack.c.l.b16 %v2891
        %v3121 = vunpack.c.l.b16 %v2892
        %v3122 = vunpack.c.h.b16 %v2892
        %v3123 = vunpack.c.l.b16 %v2893
        %v3124 = vunpack.c.l.b16 %v2894
        %v3125 = vunpack.c.h.b16 %v2894
        %v3126 = vunpack.c.l.b16 %v2895
        %v3127 = vunpack.c.l.b16 %v2896
        %v3128 = vunpack.c.h.b16 %v2896
        %v3129 = vunpack.c.l.b16 %v2897
        %v3130 = vunpack.c.l.b16 %v2898
        %v3131 = vunpack.c.h.b16 %v2898
        %v3132 = vunpack.c.l.b16 %v2899
        %v3133 = vunpack.c.l.b16 %v2900
        %v3134 = vunpack.c.h.b16 %v2900
        %v3135 = vunpack.c.l.b16 %v2901
        %v3136 = vunpack.c.l.b16 %v2902
        %v3137 = vunpack.c.h.b16 %v2902
        %v3138 = vunpack.c.l.b16 %v2903
        %v3139 = vunpack.c.l.b16 %v2904
        %v3140 = vunpack.c.h.b16 %v2904
        %v3141 = vunpack.c.l.b16 %v2905
        %v3142 = vunpack.c.l.b16 %v2906
        %v3143 = vunpack.c.h.b16 %v2906
        %v3144 = vunpack.c.l.b16 %v2907
        %v3145 = vunpack.c.l.b16 %v2908
        %v3146 = vunpack.c.h.b16 %v2908
        %v3147 = vunpack.c.l.b16 %v2909
        %v3148 = vunpack.c.l.b16 %v2910
        %v3149 = vunpack.c.h.b16 %v2910
        %v3150 = vunpack.c.l.b16 %v2911
        %v3151 = vunpack.c.l.b16 %v2912
        %v3152 = vunpack.c.h.b16 %v2912
        %v3153 = vunpack.c.l.b16 %v2913
        %v3154 = vunpack.c.l.b16 %v2914
        %v3155 = vunpack.c.h.b16 %v2914
        %v3156 = vunpack.c.l.b16 %v2915
        %v3157 = vunpack.c.l.b16 %v2916
        %v3158 = vunpack.c.h.b16 %v2916
        %v3159 = vunpack.c.l.b16 %v2917
        %v3160 = vunpack.c.l.b16 %v2918
        %v3161 = vunpack.c.h.b16 %v2918
        %v3162 = vunpack.c.l.b16 %v2919
        %v3163 = vunpack.c.l.b16 %v2920
        %v3164 = vunpack.c.h.b16 %v2920
        %v3165 = vunpack.c.l.b16 %v2921
        %v3166 = vunpack.c.l.b16 %v2922
        %v3167 = vunpack.c.h.b16 %v2922
        %v3168 = vunpack.c.l.b16 %v2923
        %v3169 = vunpack.c.l.b16 %v2924
        %v3170 = vunpack.c.h.b16 %v2924
        %v3171 = vunpack.c.l.b16 %v2925
        %v3172 = vunpack.c.l.b16 %v2926
        %v3173 = vunpack.c.h.b16 %v2926
        %v3174 = vunpack.c.l.b16 %v2927
        %v3175 = vunpack.c.l.b16 %v2928
        %v3176 = vunpack.c.h.b16 %v2928
        %v3177 = vunpack.c.l.b16 %v2929
        %v3178 = vunpack.c.l.b16 %v2930
        %v3179 = vunpack.c.h.b16 %v2930
        %v3180 = vunpack.c.l.b16 %v2931
        %v3181 = vunpack.c.l.b16 %v2932
        %v3182 = vunpack.c.h.b16 %v2932
        %v3183 = vunpack.c.l.b16 %v2933
        %v3184 = vunpack.c.l.b16 %v2934
        %v3185 = vunpack.c.h.b16 %v2934
        %v3186 = vunpack.c.l.b16 %v2935
        %v3187 = vunpack.c.l.b16 %v2936
        %v3188 = vunpack.c.h.b16 %v2936
        %v3189 = vunpack.c.l.b16 %v2937
        %v3190 = vunpack.c.l.b16 %v2938
        %v3191 = vunpack.c.h.b16 %v2938
        %v3192 = vunpack.c.l.b16 %v2939
        %v3193 = vunpack.c.l.b16 %v2940
        %v3194 = vunpack.c.h.b16 %v2940
        %v3195 = vunpack.c.l.b16 %v2941
        %v3196 = vunpack.c.l.b16 %v2942
        %v3197 = vunpack.c.h.b16 %v2942
        %v3198 = vunpack.c.l.b16 %v2943
        %v3199 = vunpack.c.l.b16 %v2944
        %v3200 = vunpack.c.h.b16 %v2944
        %v3201 = vunpack.c.l.b16 %v2945
        %v3202 = vunpack.c.l.b16 %v2946
        %v3203 = vunpack.c.h.b16 %v2946
        %v3204 = vunpack.c.l.b16 %v2947
        %v3205 = vunpack.c.l.b16 %v2948
        %v3206 = vunpack.c.h.b16 %v2948
        %v3207 = vunpack.c.l.b16 %v2949
        %v3208 = vunpack.c.l.b16 %v2950
        %v3209 = vunpack.c.h.b16 %v2950
        %v3210 = vunpack.c.l.b16 %v2951
        %v3211 = vunpack.c.l.b16 %v2952
        %v3212 = vunpack.c.h.b16 %v2952
        %v3213 = vunpack.c.l.b16 %v2953
        %v3214 = vunpack.c.l.b16 %v2954
        %v3215 = vunpack.c.h.b16 %v2954
        %v3216 = vunpack.c.l.b16 %v2955
        %v3217 = vunpack.c.l.b16 %v2956
        %v3218 = vunpack.c.h.b16 %v2956
        %v3219 = vunpack.c.l.b16 %v2957
        %v3220 = vunpack.c.l.b16 %v2958
        %v3221 = vunpack.c.h.b16 %v2958
        %v3222 = vunpack.c.l.b16 %v2959
        %v3223 = vunpack.c.l.b16 %v2960
        %v3224 = vunpack.c.h.b16 %v2960
        %v3225 = vunpack.c.l.b16 %v2961
        %v3226 = vunpack.c.l.b16 %v2962
        %v3227 = vunpack.c.h.b16 %v2962
        %v3228 = vunpack.c.l.b16 %v2963
        %v3229 = vunpack.c.l.b16 %v2964
        %v3230 = vunpack.c.h.b16 %v2964
        %v3231 = vunpack.c.l.b16 %v2965
        %v3232 = vunpack.c.l.b16 %v2966
        %v3233 = vunpack.c.h.b16 %v2966
        %v3234 = vunpack.c.l.b16 %v2967
        %v3235 = vunpack.c.l.b16 %v2968
        %v3236 = vunpack.c.h.b16 %v2968
        %v3237 = vunpack.c.l.b16 %v2969
        %v3238 = vpack.c.b16 %v3097, %v3094
        %v3239 = vpack.c.b16 %v3098, %v3095
        %v3240 = vpack.c.b16 %v3099, %v3096
        %v3241 = vpack.c.b16 %v3103, %v3100
        %v3242 = vpack.c.b16 %v3104, %v3101
        %v3243 = vpack.c.b16 %v3105, %v3102
        %v3244 = vpack.c.b16 %v3109, %v3106
        %v3245 = vpack.c.b16 %v3110, %v3107
        %v3246 = vpack.c.b16 %v3111, %v3108
        %v3247 = vpack.c.b16 %v3115, %v3112
        %v3248 = vpack.c.b16 %v3116, %v3113
        %v3249 = vpack.c.b16 %v3117, %v3114
        %v3250 = vpack.c.b16 %v3121, %v3118
        %v3251 = vpack.c.b16 %v3122, %v3119
        %v3252 = vpack.c.b16 %v3123, %v3120
        %v3253 = vpack.c.b16 %v3127, %v3124
        %v3254 = vpack.c.b16 %v3128, %v3125
        %v3255 = vpack.c.b16 %v3129, %v3126
        %v3256 = vpack.c.b16 %v3133, %v3130
        %v3257 = vpack.c.b16 %v3134, %v3131
        %v3258 = vpack.c.b16 %v3135, %v3132
        %v3259 = vpack.c.b16 %v3139, %v3136
        %v3260 = vpack.c.b16 %v3140, %v3137
        %v3261 = vpack.c.b16 %v3141, %v3138
        %v3262 = vpack.c.b16 %v3145, %v3142
        %v3263 = vpack.c.b16 %v3146, %v3143
        %v3264 = vpack.c.b16 %v3147, %v3144
        %v3265 = vpack.c.b16 %v3151, %v3148
        %v3266 = vpack.c.b16 %v3152, %v3149
        %v3267 = vpack.c.b16 %v3153, %v3150
        %v3268 = vpack.c.b16 %v3157, %v3154
        %v3269 = vpack.c.b16 %v3158, %v3155
        %v3270 = vpack.c.b16 %v3159, %v3156
        %v3271 = vpack.c.b16 %v3163, %v3160
        %v3272 = vpack.c.b16 %v3164, %v3161
        %v3273 = vpack.c.b16 %v3165, %v3162
        %v3274 = vpack.c.b16 %v3169, %v3166
        %v3275 = vpack.c.b16 %v3170, %v3167
        %v3276 = vpack.c.b16 %v3171, %v3168
        %v3277 = vpack.c.b16 %v3175, %v3172
        %v3278 = vpack.c.b16 %v3176, %v3173
        %v3279 = vpack.c.b16 %v3177, %v3174
        %v3280 = vpack.c.b16 %v3181, %v3178
        %v3281 = vpack.c.b16 %v3182, %v3179
        %v3282 = vpack.c.b16 %v3183, %v3180
        %v3283 = vpack.c.b16 %v3187, %v3184
        %v3284 = vpack.c.b16 %v3188, %v3185
        %v3285 = vpack.c.b16 %v3189, %v3186
        %v3286 = vpack.c.b16 %v3193, %v3190
        %v3287 = vpack.c.b16 %v3194, %v3191
        %v3288 = vpack.c.b16 %v3195, %v3192
        %v3289 = vpack.c.b16 %v3199, %v3196
        %v3290 = vpack.c.b16 %v3200, %v3197
        %v3291 = vpack.c.b16 %v3201, %v3198
        %v3292 = vpack.c.b16 %v3205, %v3202
        %v3293 = vpack.c.b16 %v3206, %v3203
        %v3294 = vpack.c.b16 %v3207, %v3204
        %v3295 = vpack.c.b16 %v3211, %v3208
        %v3296 = vpack.c.b16 %v3212, %v3209
        %v3297 = vpack.c.b16 %v3213, %v3210
        %v3298 = vpack.c.b16 %v3217, %v3214
        %v3299 = vpack.c.b16 %v3218, %v3215
        %v3300 = vpack.c.b16 %v3219, %v3216
        %v3301 = vpack.c.b16 %v3223, %v3220
        %v3302 = vpack.c.b16 %v3224, %v3221
        %v3303 = vpack.c.b16 %v3225, %v3222
        %v3304 = vpack.c.b16 %v3229, %v3226
        %v3305 = vpack.c.b16 %v3230, %v3227
        %v3306 = vpack.c.b16 %v3231, %v3228
        %v3307 = vpack.c.b16 %v3235, %v3232
        %v3308 = vpack.c.b16 %v3236, %v3233
        %v3309 = vpack.c.b16 %v3237, %v3234
        %3382 = vmatprep.subr.bf16.mxu0 %v3260
        %3383 = vmatpush1.bf16.msra.mxu0 %v3259
        %3384 = vmatprep.subr.bf16.mxu0 %v3257
        %3385 = vmatpush1.bf16.msra.mxu0 %v3256
        %3386 = vmatprep.subr.bf16.mxu0 %v3254
        %3387 = vmatpush1.bf16.msra.mxu0 %v3253
        %3388 = vmatprep.subr.bf16.mxu0 %v3251
        %3389 = vmatpush1.bf16.msra.mxu0 %v3250
        %3390 = vmatprep.subr.bf16.mxu0 %v3248
        %3391 = vmatpush1.bf16.msra.mxu0 %v3247
        %3392 = vmatprep.subr.bf16.mxu0 %v3245
        %3393 = vmatpush1.bf16.msra.mxu0 %v3244
        %3394 = vmatprep.subr.bf16.mxu0 %v3242
        %3395 = vmatpush1.bf16.msra.mxu0 %v3241
        %3396 = vmatprep.subr.bf16.mxu0 %v3239
        %3397 = vmatpush1.bf16.msra.mxu0 %v3238
        %3398 = vmatprep.subr.bf16.mxu0 %v3284
        %3399 = vmatpush2.bf16.msra.mxu0 %v3283
        %3400 = vmatprep.subr.bf16.mxu0 %v3281
        %3401 = vmatpush2.bf16.msra.mxu0 %v3280
        %3402 = vmatprep.subr.bf16.mxu0 %v3278
        %3403 = vmatpush2.bf16.msra.mxu0 %v3277
        %3404 = vmatprep.subr.bf16.mxu0 %v3275
        %3405 = vmatpush2.bf16.msra.mxu0 %v3274
        %3406 = vmatprep.subr.bf16.mxu0 %v3272
        %3407 = vmatpush2.bf16.msra.mxu0 %v3271
        %3408 = vmatprep.subr.bf16.mxu0 %v3269
        %3409 = vmatpush2.bf16.msra.mxu0 %v3268
        %3410 = vmatprep.subr.bf16.mxu0 %v3266
        %3411 = vmatpush2.bf16.msra.mxu0 %v3265
        %3412 = vmatprep.subr.bf16.mxu0 %v3263
        %3413 = vmatpush2.bf16.msra.mxu0 %v3262
        %3414 = vmatprep.mubr.bf16.mxu0 %v2993
        %3415 = vmatmul.mubr.bf16.gmra.mxu0 %v2992
        %v3416 = vpop.f32.mrf.mxu0
        %v3417 = vadd.f32 %v2975, %v3416
        %v3418 = vpop.f32.mrf.mxu0
        %v3419 = vadd.f32 %v2979, %v3418
        %v3420 = vpop.f32.mrf.mxu0
        %v3421 = vpop.f32.mrf.mxu0
        %3422 = vdwg.mxu0
        %3423 = vmatprep.subr.bf16.mxu0 %v3308
        %3424 = vmatpush1.bf16.msra.mxu0 %v3307
        %3425 = vmatprep.subr.bf16.mxu0 %v3305
        %3426 = vmatpush1.bf16.msra.mxu0 %v3304
        %3427 = vmatprep.subr.bf16.mxu0 %v3302
        %3428 = vmatpush1.bf16.msra.mxu0 %v3301
        %3429 = vmatprep.subr.bf16.mxu0 %v3299
        %3430 = vmatpush1.bf16.msra.mxu0 %v3298
        %3431 = vmatprep.subr.bf16.mxu0 %v3296
        %3432 = vmatpush1.bf16.msra.mxu0 %v3295
        %3433 = vmatprep.subr.bf16.mxu0 %v3293
        %3434 = vmatpush1.bf16.msra.mxu0 %v3292
        %3435 = vmatprep.subr.bf16.mxu0 %v3290
        %3436 = vmatpush1.bf16.msra.mxu0 %v3289
        %3437 = vmatprep.subr.bf16.mxu0 %v3287
        %3438 = vmatpush1.bf16.msra.mxu0 %v3286
        %3439 = vmatprep.subr.bf16.mxu0 0
        %3440 = vmatpush2.bf16.msra.mxu0 0
        %3441 = vmatprep.subr.bf16.mxu0 0
        %3442 = vmatpush2.bf16.msra.mxu0 0
        %3443 = vmatprep.subr.bf16.mxu0 0
        %3444 = vmatpush2.bf16.msra.mxu0 0
        %3445 = vmatprep.subr.bf16.mxu0 0
        %3446 = vmatpush2.bf16.msra.mxu0 0
        %3447 = vmatprep.subr.bf16.mxu0 0
        %3448 = vmatpush2.bf16.msra.mxu0 0
        %3449 = vmatprep.subr.bf16.mxu0 0
        %3450 = vmatpush2.bf16.msra.mxu0 0
        %3451 = vmatprep.subr.bf16.mxu0 0
        %3452 = vmatpush2.bf16.msra.mxu0 0
        %3453 = vmatprep.subr.bf16.mxu0 0
        %3454 = vmatpush2.bf16.msra.mxu0 0
        %3455 = vmatprep.mubr.bf16.mxu0 0
        %3456 = vmatmul.mubr.bf16.gmra.mxu0 %v2994
        %v3457 = vpop.f32.mrf.mxu0
        %v3458 = vadd.f32 %v3417, %v3457
        %v3459 = vpop.f32.mrf.mxu0
        %v3460 = vadd.f32 %v3419, %v3459
        %v3461 = vpop.f32.mrf.mxu0
        %v3462 = vpop.f32.mrf.mxu0
        %3463 = vdwg.mxu0
        %3464 = vmatprep.subr.bf16.mxu0 0
        %3465 = vmatpush1.bf16.msra.mxu0 %v3261
        %3466 = vmatprep.subr.bf16.mxu0 0
        %3467 = vmatpush1.bf16.msra.mxu0 %v3258
        %3468 = vmatprep.subr.bf16.mxu0 0
        %3469 = vmatpush1.bf16.msra.mxu0 %v3255
        %3470 = vmatprep.subr.bf16.mxu0 0
        %3471 = vmatpush1.bf16.msra.mxu0 %v3252
        %3472 = vmatprep.subr.bf16.mxu0 0
        %3473 = vmatpush1.bf16.msra.mxu0 %v3249
        %3474 = vmatprep.subr.bf16.mxu0 0
        %3475 = vmatpush1.bf16.msra.mxu0 %v3246
        %3476 = vmatprep.subr.bf16.mxu0 0
        %3477 = vmatpush1.bf16.msra.mxu0 %v3243
        %3478 = vmatprep.subr.bf16.mxu0 0
        %3479 = vmatpush1.bf16.msra.mxu0 %v3240
        %3480 = vmatprep.subr.bf16.mxu0 0
        %3481 = vmatpush2.bf16.msra.mxu0 %v3285
        %3482 = vmatprep.subr.bf16.mxu0 0
        %3483 = vmatpush2.bf16.msra.mxu0 %v3282
        %3484 = vmatprep.subr.bf16.mxu0 0
        %3485 = vmatpush2.bf16.msra.mxu0 %v3279
        %3486 = vmatprep.subr.bf16.mxu0 0
        %3487 = vmatpush2.bf16.msra.mxu0 %v3276
        %3488 = vmatprep.subr.bf16.mxu0 0
        %3489 = vmatpush2.bf16.msra.mxu0 %v3273
        %3490 = vmatprep.subr.bf16.mxu0 0
        %3491 = vmatpush2.bf16.msra.mxu0 %v3270
        %3492 = vmatprep.subr.bf16.mxu0 0
        %3493 = vmatpush2.bf16.msra.mxu0 %v3267
        %3494 = vmatprep.subr.bf16.mxu0 0
        %3495 = vmatpush2.bf16.msra.mxu0 %v3264
        %3496 = vmatprep.mubr.bf16.mxu0 %v2993
        %3497 = vmatmul.mubr.bf16.gmra.mxu0 %v2992
        %v3498 = vpop.f32.mrf.mxu0
        %v3499 = vadd.f32 %v2983, %v3498
        %v3500 = vpop.f32.mrf.mxu0
        %v3501 = vpop.f32.mrf.mxu0
        %v3502 = vpop.f32.mrf.mxu0
        %3503 = vdwg.mxu0
        %3504 = vmatprep.subr.bf16.mxu0 0
        %3505 = vmatpush1.bf16.msra.mxu0 %v3309
        %3506 = vmatprep.subr.bf16.mxu0 0
        %3507 = vmatpush1.bf16.msra.mxu0 %v3306
        %3508 = vmatprep.subr.bf16.mxu0 0
        %3509 = vmatpush1.bf16.msra.mxu0 %v3303
        %3510 = vmatprep.subr.bf16.mxu0 0
        %3511 = vmatpush1.bf16.msra.mxu0 %v3300
        %3512 = vmatprep.subr.bf16.mxu0 0
        %3513 = vmatpush1.bf16.msra.mxu0 %v3297
        %3514 = vmatprep.subr.bf16.mxu0 0
        %3515 = vmatpush1.bf16.msra.mxu0 %v3294
        %3516 = vmatprep.subr.bf16.mxu0 0
        %3517 = vmatpush1.bf16.msra.mxu0 %v3291
        %3518 = vmatprep.subr.bf16.mxu0 0
        %3519 = vmatpush1.bf16.msra.mxu0 %v3288
        %3520 = vmatprep.subr.bf16.mxu0 0
        %3521 = vmatpush2.bf16.msra.mxu0 0
        %3522 = vmatprep.subr.bf16.mxu0 0
        %3523 = vmatpush2.bf16.msra.mxu0 0
        %3524 = vmatprep.subr.bf16.mxu0 0
        %3525 = vmatpush2.bf16.msra.mxu0 0
        %3526 = vmatprep.subr.bf16.mxu0 0
        %3527 = vmatpush2.bf16.msra.mxu0 0
        %3528 = vmatprep.subr.bf16.mxu0 0
        %3529 = vmatpush2.bf16.msra.mxu0 0
        %3530 = vmatprep.subr.bf16.mxu0 0
        %3531 = vmatpush2.bf16.msra.mxu0 0
        %3532 = vmatprep.subr.bf16.mxu0 0
        %3533 = vmatpush2.bf16.msra.mxu0 0
        %3534 = vmatprep.subr.bf16.mxu0 0
        %3535 = vmatpush2.bf16.msra.mxu0 0
        %3536 = vmatprep.mubr.bf16.mxu0 0
        %3537 = vmatmul.mubr.bf16.gmra.mxu0 %v2994
        %v3538 = vpop.f32.mrf.mxu0
        %v3539 = vadd.f32 %v3499, %v3538
        %v3540 = vpop.f32.mrf.mxu0
        %v3541 = vpop.f32.mrf.mxu0
        %v3542 = vpop.f32.mrf.mxu0
        %3543 = vdwg.mxu0
        %3544 = vst [vmem:[%s282] sm:$0xff] %v3458
        %3545 = vst [vmem:[%s282 + $0x8] sm:$0xff] %v3460
        %3546 = vst [vmem:[%s282 + $0x10] sm:$0xff] %v3539
        %s3547 = sand.u32 %s142, 1
        %s3548 = scalar_lea.sflag [#allocation6], %s3547
        %s3549 = sand.u32 %s142, 1
        %s3550 = smul.addr %s3549, 24
        %s3551 = scalar_lea.vmem [#allocation12], %s3550
        // Predicated region
        $region57: #{tpu_custom_call.1} parent=39 // pred_check
          %p3552 = pneg %p152
        $region58: #{tpu_custom_call.1} parent=39 // pred_check_branch
          %3554 = sbr.rel (%p3552) target = $region60
        $region59: #{tpu_custom_call.1} parent=39 // pred_region
          %s3556 = ssub.s32 384, 384
          %3557 = vsyncadd %s3548, %s3556
          %s3558 = smul.addr %s24, 3
          %s3559 = smul.addr %s3558, 128
          %s3560 = scalar_lea.hbm %s5, %s3559
          %s3562 = sshll.u32 %s3551, 4
          %s3563 = int_to_ptr.vmem [resolvable:$true] %s3562
          %3565 = dma.vmem_to_hbm [thread:$0]  %s3563, 384, %s3560, %s3548
        $region60: #{tpu_custom_call.1} parent=39 // pred_fallthru
          _
      $region40: #{tpu_custom_call.1} parent=5 // pred_fallthru
        _
      %p3566 = scmp.le.s32.totalorder 2, %s19
      // Predicated region
      $region61: #{tpu_custom_call.1} parent=5 // pred_check
        %p3567 = pneg %p3566
      $region62: #{tpu_custom_call.1} parent=5 // pred_check_branch
        %3569 = sbr.rel (%p3567) target = $region64
      $region63: #{tpu_custom_call.1} parent=5 // pred_region
        %s3570 = ssub.s32 %s19, 2
        // Predicated region
        $region65: #{tpu_custom_call.1} parent=63 // pred_check
          %p3571 = pneg %p158
        $region66: #{tpu_custom_call.1} parent=63 // pred_check_branch
          %3573 = sbr.rel (%p3571) target = $region68
        $region67: #{tpu_custom_call.1} parent=63 // pred_region
          %s3574 = sand.u32 %s143, 1
          %s3575 = scalar_lea.sflag [#allocation6], %s3574
          %s3576 = sand.u32 %s143, 1
          %s3577 = smul.addr %s3576, 24
          %s3578 = scalar_lea.vmem [#allocation12], %s3577
          %3579 = dma.done %s3575, 384
        $region68: #{tpu_custom_call.1} parent=63 // pred_fallthru
          _
      $region64: #{tpu_custom_call.1} parent=5 // pred_fallthru
        _
    $region6: #{tpu_custom_call.1} parent=1 // loop_footer
      %s23 = sadd.s32 1, %s19
    $region7: #{tpu_custom_call.1} parent=1 // loop_footer_branch
      %18 = sbr.rel target = $region3
    $region8: #{tpu_custom_call.1} parent=1 // loop_exit
      _
    %3580 = vsyncpa [#allocation5], 1
    %s3581 = scalar_lea.sflag [#allocation5], 1
    %3582 = vsyncpa %s3581, 1
    %3583 = vsyncpa [#allocation8], 1
    %3584 = vsyncpa [#allocation11], 1
    %3585 = vsyncpa [#allocation6], 1
    %s3586 = scalar_lea.sflag [#allocation6], 1
    %3587 = vsyncpa %s3586, 1

</llo_original>
